<compile_context>
chip_gen: v7x
topology: tpu7x:2x2x1
jax: 0.10.0
libtpu: 0.0.40
codegen_flags: <defaults>
</compile_context>

<pallas_src>
import functools
import math

import jax
import jax.numpy as jnp
from jax.experimental import pallas as pl
from jax.experimental.pallas import tpu as pltpu


# ----------------------------- small math helpers ---------------------------

def _sigmoid(x):
    return 1.0 / (1.0 + jnp.exp(-x))


def _silu(x):
    return x * _sigmoid(x)


def _softplus(x):
    # numerically-stable softplus (PyTorch threshold=20 semantics)
    xs = jnp.minimum(x, 20.0)
    return jnp.where(x > 20.0, x, jnp.log(1.0 + jnp.exp(xs)))


_RMS_EPS = 1e-5   # RMSNorm eps of the reference module; the literal +1e-6 of
                  # MambaIT.forward is applied separately, matching the spec.


# --------------------------------- the kernel -------------------------------

def _make_kernel(*, fold, Bt, Lc):
    """Builds the fused Mamba-stack kernel for one (batch block, layer) step."""

    def kernel(*refs):
        if fold:
            (x_ref, wx_ref, wz_ref, conv_w_ref, wdelta_ref, wbc_ref,
             a_ref, vec_ref, wout_ref, norm_ref, o_ref, act_s) = refs
            wxr_ref = dtw_ref = None
        else:
            (x_ref, wx_ref, wz_ref, conv_w_ref, wxr_ref, dtw_ref, wbc_ref,
             a_ref, vec_ref, wout_ref, norm_ref, o_ref, act_s) = refs
            wdelta_ref = None

        _, L, Dm = x_ref.shape
        Din = wx_ref.shape[2]
        K = conv_w_ref.shape[1]
        N = a_ref.shape[1]
        P = K - 1
        NC = L // Lc

        l = pl.program_id(1)
        n_layers = pl.num_programs(1)

        # layer 0: bring this batch block's activation into resident VMEM
        @pl.when(l == 0)
        def _():
            act_s[...] = x_ref[...].reshape(Bt * L, Dm).astype(jnp.float32)

        # per-layer weights (loaded once per grid step)
        wx = wx_ref[0]            # (Dm, Din)  bf16
        wz = wz_ref[0]            # (Dm, Din)  bf16
        conv_w = conv_w_ref[0]    # (K, Din)   f32
        wbc = wbc_ref[0]          # (Din, 2N)  bf16
        a_nt = a_ref[0]           # (N, Din)   f32   (= -exp(A_log)^T)
        vecs = vec_ref[0]         # (3, Din)   f32   (conv_b, dt_b, D packed)
        wout = wout_ref[0]        # (Din, Dm)  bf16
        norm_w = norm_ref[...]    # (1, Dm)    f32
        conv_b = vecs[0:1, :]
        dt_b = vecs[1:2, :]
        d_skip = vecs[2:3, :]
        if fold:
            wdelta = wdelta_ref[0]            # (Din, Din) bf16
        else:
            wxr = wxr_ref[0]                  # (Din, R)   bf16
            dtw = dtw_ref[0]                  # (R, Din)   bf16

        # state carried across sequence chunks, per batch element
        h_state = [jnp.zeros((N, Din), jnp.float32) for _ in range(Bt)]
        tail = [jnp.zeros((P, Din), jnp.float32) for _ in range(Bt)]

        for c in range(NC):
            # ---- gather this chunk's rows for all Bt elements: (Bt*Lc, Dm) ----
            xa = jnp.concatenate(
                [act_s[bt * L + c * Lc: bt * L + (c + 1) * Lc, :]
                 for bt in range(Bt)], axis=0)
            xab = xa.astype(jnp.bfloat16)

            # ---- in_proj (x path) -------------------------------------------
            xc_all = jnp.dot(xab, wx, preferred_element_type=jnp.float32)

            # ---- causal depthwise conv1d (tail carried across chunks) --------
            xconv_parts = []
            for bt in range(Bt):
                xc = xc_all[bt * Lc:(bt + 1) * Lc, :]
                xfull = jnp.concatenate([tail[bt], xc], axis=0)   # (P+Lc, Din)
                acc = xc * conv_w[K - 1:K, :]
                for j in range(1, K):                              # K tiny, static
                    acc = acc + (xfull[P - j:P - j + Lc, :]
                                 * conv_w[K - 1 - j:K - j, :])
                xconv_parts.append(_silu(acc + conv_b))
                tail[bt] = xfull[Lc:Lc + P, :]
            xconv = jnp.concatenate(xconv_parts, axis=0)           # (Bt*Lc, Din)
            xcb = xconv.astype(jnp.bfloat16)

            # ---- dt / B / C projections --------------------------------------
            if fold:
                dlin = jnp.dot(xcb, wdelta, preferred_element_type=jnp.float32)
            else:
                low = jnp.dot(xcb, wxr, preferred_element_type=jnp.float32)
                dlin = jnp.dot(low.astype(jnp.bfloat16), dtw,
                               preferred_element_type=jnp.float32)
            delta = _softplus(dlin + dt_b)                         # (Bt*Lc, Din)
            du = delta * xconv
            bc = jnp.dot(xcb, wbc, preferred_element_type=jnp.float32)  # (., 2N)

            # ---- selective scan: h carried as (N, Din), Din on the lanes -----
            y_parts = []
            for bt in range(Bt):
                r = bt * Lc
                # B/C columns for every step of the chunk, hoisted OFF the
                # recurrence chain (they do not depend on h).
                b_cols = [jnp.reshape(bc[r + i:r + i + 1, 0:N], (N, 1))
                          for i in range(Lc)]
                c_cols = [jnp.reshape(bc[r + i:r + i + 1, N:2 * N], (N, 1))
                          for i in range(Lc)]
                h = h_state[bt]
                rows = []
                for i in range(Lc):                                # static unroll
                    dA = jnp.exp(delta[r + i:r + i + 1, :] * a_nt)  # (N, Din)
                    h = dA * h + b_cols[i] * du[r + i:r + i + 1, :]
                    # VPU multiply + sublane (XLU) reduce instead of a tiny MXU dot
                    rows.append(jnp.sum(c_cols[i] * h, axis=0, keepdims=True))
                h_state[bt] = h
                y_parts.append(jnp.concatenate(rows, axis=0))       # (Lc, Din)
            y = jnp.concatenate(y_parts, axis=0)                    # (Bt*Lc, Din)

            # ---- gate (z matmul issued after the scan so it can overlap it) --
            z = jnp.dot(xab, wz, preferred_element_type=jnp.float32)
            y = (y + xconv * d_skip) * _silu(z)

            # ---- out_proj + residual + RMSNorm(+1e-6), post-norm per the spec -
            out = jnp.dot(y.astype(jnp.bfloat16), wout,
                          preferred_element_type=jnp.float32)       # (Bt*Lc, Dm)
            xr = xa + out
            ms = jnp.mean(xr * xr, axis=-1, keepdims=True)
            xn = xr * jax.lax.rsqrt(ms + _RMS_EPS) * norm_w + 1e-6
            for bt in range(Bt):
                act_s[bt * L + c * Lc: bt * L + (c + 1) * Lc, :] = (
                    xn[bt * Lc:(bt + 1) * Lc, :])

        @pl.when(l == n_layers - 1)
        def _():
            o_ref[...] = act_s[...].reshape(Bt, L, Dm).astype(o_ref.dtype)

    return kernel


# ------------------------------ host-side helpers ---------------------------

def _stack_params(params, fold_threshold=8):
    """Stack per-layer params on a leading depth axis; split in_proj into
    W_x / W_z, pre-exp A, pack per-channel vectors, and fold dt_proj only when
    dt_rank is tiny (toy shapes)."""
    layers = params["layers"]
    R = layers[0]["dt_w"].shape[0]
    d_inner = layers[0]["in_w"].shape[1] // 2
    fold = R < fold_threshold

    def stk(fn, dtype=None):
        a = jnp.stack([fn(lp) for lp in layers], axis=0)
        return a.astype(dtype) if dtype is not None else a

    stacked = {
        "wx": stk(lambda lp: lp["in_w"][:, :d_inner], jnp.bfloat16),
        "wz": stk(lambda lp: lp["in_w"][:, d_inner:], jnp.bfloat16),
        "conv_w": stk(lambda lp: lp["conv_w"]),                       # (K, Din)
        "w_bc": stk(lambda lp: lp["x_proj_w"][:, R:], jnp.bfloat16),  # (Din, 2N)
        "a_nt": stk(lambda lp: -jnp.exp(lp["A_log"]).T),              # (N, Din)
        "vecs": stk(lambda lp: jnp.concatenate(
            [lp["conv_b"], lp["dt_b"], lp["D"]], axis=0)),            # (3, Din)
        "out_w": stk(lambda lp: lp["out_w"], jnp.bfloat16),
    }
    if fold:
        stacked["w_delta"] = stk(
            lambda lp: lp["x_proj_w"][:, :R] @ lp["dt_w"], jnp.bfloat16)
    else:
        stacked["w_xr"] = stk(lambda lp: lp["x_proj_w"][:, :R], jnp.bfloat16)
        stacked["dt_w"] = stk(lambda lp: lp["dt_w"], jnp.bfloat16)
    return stacked


def mamba_stack_pallas(h, stacked, norm_w, *, seq_chunk=None, batch_block=None):
    B, L, Dm = h.shape
    depth, _, Din = stacked["wx"].shape
    N = stacked["a_nt"].shape[1]
    K = stacked["conv_w"].shape[1]
    fold = "w_delta" in stacked

    # batch blocking: amortize weight DMA, fill the MXU rows
    if batch_block is None:
        batch_block = max(1, min(B, 256 // max(L, 1)))
    Bt = max(1, min(B, batch_block))
    while B % Bt:
        Bt -= 1

    # sequence chunk: bounds (rows, Din) intermediates (mandatory at big L / v7x)
    if seq_chunk is None:
        seq_chunk = 256
    Lc = max(1, min(L, seq_chunk))
    while L % Lc:
        Lc -= 1

    # explicit scoped-VMEM limit: double-buffered layer weights + IO + scratch
    w_bytes = sum((v.size // depth) * v.dtype.itemsize for v in stacked.values())
    io_bytes = 2 * Bt * L * Dm * 4
    scratch_bytes = Bt * L * Dm * 4
    work_bytes = 8 * Bt * Lc * Din * 4
    vmem_limit = int(min(112 * 2**20,
                         max(32 * 2**20,
                             2 * (w_bytes + io_bytes) + scratch_bytes
                             + work_bytes + (4 << 20))))

    def wspec(shape):
        return pl.BlockSpec((1,) + shape, lambda b, l: (l, 0, 0))

    in_specs = [pl.BlockSpec((Bt, L, Dm), lambda b, l: (b, 0, 0)),
                wspec((Dm, Din)), wspec((Dm, Din)), wspec((K, Din))]
    args = [h, stacked["wx"], stacked["wz"], stacked["conv_w"]]
    if fold:
        in_specs.append(wspec((Din, Din)))
        args.append(stacked["w_delta"])
    else:
        R = stacked["w_xr"].shape[2]
        in_specs += [wspec((Din, R)), wspec((R, Din))]
        args += [stacked["w_xr"], stacked["dt_w"]]
    in_specs += [wspec((Din, 2 * N)), wspec((N, Din)), wspec((3, Din)),
                 wspec((Din, Dm)),
                 pl.BlockSpec((1, Dm), lambda b, l: (0, 0))]
    args += [stacked["w_bc"], stacked["a_nt"], stacked["vecs"],
             stacked["out_w"], norm_w]

    kernel = _make_kernel(fold=fold, Bt=Bt, Lc=Lc)

    # NOTE: the depth axis MUST stay trailing and "arbitrary" — act_s carries
    # state across layers.  The batch axis is safe to run "parallel" (v7x 2 TC).
    return pl.pallas_call(
        kernel,
        out_shape=jax.ShapeDtypeStruct((B, L, Dm), h.dtype),
        grid=(B // Bt, depth),
        in_specs=in_specs,
        out_specs=pl.BlockSpec((Bt, L, Dm), lambda b, l: (b, 0, 0)),
        scratch_shapes=[pltpu.VMEM((Bt * L, Dm), jnp.float32)],
        compiler_params=pltpu.CompilerParams(
            dimension_semantics=("parallel", "arbitrary"),
            vmem_limit_bytes=vmem_limit),
    )(*args)


def mamba_it_forward(x, context, context_mask, params, *,
                     seq_chunk=None, batch_block=None):
    """Equivalent of MambaIT.forward(x, context, context_mask)."""
    context_len = context.shape[1]
    context = jnp.where(context_mask[:, :, None], context,
                        jnp.zeros_like(context))
    h = jnp.concatenate([context, x], axis=1)          # cat along seq dim (-2)
    stacked = _stack_params(params)
    out = mamba_stack_pallas(h, stacked, params["norm_w"],
                             seq_chunk=seq_chunk, batch_block=batch_block)
    return out[:, context_len:, :]


# --------------------------- pure-JAX reference -----------------------------

def _mamba_stack_ref(h, stacked, norm_w):
    depth, _, Din = stacked["wx"].shape
    N = stacked["a_nt"].shape[1]
    K = stacked["conv_w"].shape[1]
    fold = "w_delta" in stacked
    x = h.astype(jnp.float32)
    B, L, Dm = x.shape
    for l in range(depth):
        xb = x.astype(jnp.bfloat16)
        xc = jnp.dot(xb, stacked["wx"][l], preferred_element_type=jnp.float32)
        z = jnp.dot(xb, stacked["wz"][l], preferred_element_type=jnp.float32)
        conv_w = stacked["conv_w"][l]
        conv_b, dt_b, d_skip = (stacked["vecs"][l][0], stacked["vecs"][l][1],
                                stacked["vecs"][l][2])
        xpad = jnp.pad(xc, ((0, 0), (K - 1, 0), (0, 0)))
        conv = sum(conv_w[k][None, None, :] * xpad[:, k:k + L, :]
                   for k in range(K))
        xconv = _silu(conv + conv_b[None, None, :])
        xcb = xconv.astype(jnp.bfloat16)
        if fold:
            dlin = jnp.dot(xcb, stacked["w_delta"][l],
                           preferred_element_type=jnp.float32)
        else:
            low = jnp.dot(xcb, stacked["w_xr"][l],
                          preferred_element_type=jnp.float32)
            dlin = jnp.dot(low.astype(jnp.bfloat16), stacked["dt_w"][l],
                           preferred_element_type=jnp.float32)
        delta = _softplus(dlin + dt_b[None, None, :])
        du = delta * xconv
        bc = jnp.dot(xcb, stacked["w_bc"][l], preferred_element_type=jnp.float32)
        Bm, Cm = bc[..., :N], bc[..., N:]
        a_nt = stacked["a_nt"][l]

        def step(hc, inp):
            d_t, du_t, b_t, c_t = inp
            dA = jnp.exp(d_t[:, None, :] * a_nt[None, :, :])
            hc = dA * hc + b_t[:, :, None] * du_t[:, None, :]
            return hc, jnp.sum(c_t[:, :, None] * hc, axis=1)

        _, ys = jax.lax.scan(step, jnp.zeros((B, N, Din), jnp.float32),
                             (jnp.swapaxes(delta, 0, 1), jnp.swapaxes(du, 0, 1),
                              jnp.swapaxes(Bm, 0, 1), jnp.swapaxes(Cm, 0, 1)))
        y = jnp.swapaxes(ys, 0, 1)
        y = (y + xconv * d_skip[None, None, :]) * _silu(z)
        out = jnp.dot(y.astype(jnp.bfloat16), stacked["out_w"][l],
                      preferred_element_type=jnp.float32)
        x = x + out
        ms = jnp.mean(x * x, axis=-1, keepdims=True)
        x = x * jax.lax.rsqrt(ms + _RMS_EPS) * norm_w + 1e-6
    return x


def mamba_it_reference(x, context, context_mask, params):
    context_len = context.shape[1]
    context = jnp.where(context_mask[:, :, None], context,
                        jnp.zeros_like(context))
    h = jnp.concatenate([context, x], axis=1)
    out = _mamba_stack_ref(h, _stack_params(params), params["norm_w"])
    return out[:, context_len:, :]


# -------------------------------- init + demo -------------------------------

def init_params(key, token_size, depth, d_state=16, d_conv=4, expand=2):
    d_inner = expand * token_size
    dt_rank = math.ceil(token_size / 16)
    layers = []
    for _ in range(depth):
        key, k_in, k_conv, k_xp, k_dt, k_out = jax.random.split(key, 6)
        lp = {
            "in_w": jax.random.normal(k_in, (token_size, 2 * d_inner),
                                      jnp.float32) / math.sqrt(token_size),
            "conv_w": jax.random.normal(k_conv, (d_conv, d_inner),
                                        jnp.float32) / math.sqrt(d_conv),
            "conv_b": jnp.zeros((1, d_inner), jnp.float32),
            "x_proj_w": jax.random.normal(k_xp, (d_inner, dt_rank + 2 * d_state),
                                          jnp.float32) / math.sqrt(d_inner),
            "dt_w": jax.random.normal(k_dt, (dt_rank, d_inner),
                                      jnp.float32) / math.sqrt(dt_rank),
            "dt_b": jnp.full((1, d_inner), math.log(math.expm1(0.01)),
                             jnp.float32),
            "A_log": jnp.log(jnp.tile(jnp.arange(1, d_state + 1,
                                                 dtype=jnp.float32)[None, :],
                                      (d_inner, 1))),
            "D": jnp.ones((1, d_inner), jnp.float32),
            "out_w": jax.random.normal(k_out, (d_inner, token_size),
                                       jnp.float32) / math.sqrt(d_inner),
        }
        layers.append(lp)
    return {"layers": layers, "norm_w": jnp.ones((1, token_size), jnp.float32)}


if __name__ == "__main__":
    token_size, depth = 32, 2          # d_model=32, 2 Mamba layers
    d_state, d_conv, expand = 16, 4, 2
    B, Lx, Lctx = 2, 8, 8              # batch, target seq, context seq

    key = jax.random.PRNGKey(0)
    k_x, k_c, k_m, k_p = jax.random.split(key, 4)
    x = jax.random.normal(k_x, (B, Lx, token_size), jnp.float32)
    context = jax.random.normal(k_c, (B, Lctx, token_size), jnp.float32)
    context_mask = jax.random.bernoulli(k_m, 0.7, (B, Lctx))
    params = init_params(k_p, token_size, depth, d_state, d_conv, expand)

    # seq_chunk=8 so the chunk-carry (h state + conv tail) path is exercised
    fwd = jax.jit(functools.partial(mamba_it_forward, seq_chunk=8))
    out = jax.block_until_ready(fwd(x, context, context_mask, params))
    assert out.shape == (B, Lx, token_size), out.shape
    assert bool(jnp.all(jnp.isfinite(out)))

    ref = mamba_it_reference(x, context, context_mask, params)
    err = float(jnp.max(jnp.abs(out - ref)))
    assert err < 2e-2, f"max |pallas - ref| = {err}"
    print("KERNEL_OK")
</pallas_src>

<mosaic_0001>
module attributes {stable_mosaic.version = 11 : i64} {
  func.func @kernel(%arg0: i32, %arg1: i32, %arg2: memref<2x16x32xf32, #tpu.memory_space<vmem>>, %arg3: memref<1x32x64xbf16, #tpu.memory_space<vmem>>, %arg4: memref<1x32x64xbf16, #tpu.memory_space<vmem>>, %arg5: memref<1x4x64xf32, #tpu.memory_space<vmem>>, %arg6: memref<1x64x64xbf16, #tpu.memory_space<vmem>>, %arg7: memref<1x64x32xbf16, #tpu.memory_space<vmem>>, %arg8: memref<1x16x64xf32, #tpu.memory_space<vmem>>, %arg9: memref<1x3x64xf32, #tpu.memory_space<vmem>>, %arg10: memref<1x64x32xbf16, #tpu.memory_space<vmem>>, %arg11: memref<1x32xf32, #tpu.memory_space<vmem>>, %arg12: memref<2x16x32xf32, #tpu.memory_space<vmem>>, %arg13: memref<32x32xf32, #tpu.memory_space<vmem>>) attributes {dimension_semantics = [#tpu.dimension_semantics<parallel>, #tpu.dimension_semantics<arbitrary>], iteration_bounds = array<i64: 1, 2>, scalar_prefetch = 0 : i64, scratch_operands = 1 : i64, tpu.core_type = #tpu.core_type<tc>, window_params = [{transform_indices = @transform_0, window_bounds = array<i64: 2, 16, 32>}, {transform_indices = @transform_1, window_bounds = array<i64: 1, 32, 64>}, {transform_indices = @transform_2, window_bounds = array<i64: 1, 32, 64>}, {transform_indices = @transform_3, window_bounds = array<i64: 1, 4, 64>}, {transform_indices = @transform_4, window_bounds = array<i64: 1, 64, 64>}, {transform_indices = @transform_5, window_bounds = array<i64: 1, 64, 32>}, {transform_indices = @transform_6, window_bounds = array<i64: 1, 16, 64>}, {transform_indices = @transform_7, window_bounds = array<i64: 1, 3, 64>}, {transform_indices = @transform_8, window_bounds = array<i64: 1, 64, 32>}, {pipeline_mode = #tpu.pipeline_mode<synchronous>, transform_indices = @transform_9, window_bounds = array<i64: 1, 32>}, {transform_indices = @transform_10, window_bounds = array<i64: 2, 16, 32>}]} {
    %c0_i32 = arith.constant 0 : i32
    %0 = arith.cmpi eq, %arg1, %c0_i32 : i32
    %1 = arith.extui %0 : i1 to i32
    %c0_i32_0 = arith.constant 0 : i32
    %2 = arith.cmpi ne, %1, %c0_i32_0 : i32
    scf.if %2 {
      %c0_117 = arith.constant 0 : index
      %c0_118 = arith.constant 0 : index
      %c0_119 = arith.constant 0 : index
      %844 = vector.load %arg2[%c0_117, %c0_118, %c0_119] : memref<2x16x32xf32, #tpu.memory_space<vmem>>, vector<2x16x32xf32>
      %845 = vector.shape_cast %844 : vector<2x16x32xf32> to vector<32x32xf32>
      %c0_120 = arith.constant 0 : index
      %c0_121 = arith.constant 0 : index
      %846 = vector.load %arg13[%c0_120, %c0_121] : memref<32x32xf32, #tpu.memory_space<vmem>>, vector<32x32xf32>
      tpu.vector_store %arg13[%c0_120, %c0_121], %845 {strides = array<i32>} : memref<32x32xf32, #tpu.memory_space<vmem>>, vector<32x32xf32>,
    } else {
    }
    %c0 = arith.constant 0 : index
    %c0_1 = arith.constant 0 : index
    %c0_2 = arith.constant 0 : index
    %3 = vector.load %arg3[%c0, %c0_1, %c0_2] : memref<1x32x64xbf16, #tpu.memory_space<vmem>>, vector<1x32x64xbf16>
    %4 = vector.shape_cast %3 : vector<1x32x64xbf16> to vector<32x64xbf16>
    %c0_3 = arith.constant 0 : index
    %c0_4 = arith.constant 0 : index
    %c0_5 = arith.constant 0 : index
    %5 = vector.load %arg4[%c0_3, %c0_4, %c0_5] : memref<1x32x64xbf16, #tpu.memory_space<vmem>>, vector<1x32x64xbf16>
    %6 = vector.shape_cast %5 : vector<1x32x64xbf16> to vector<32x64xbf16>
    %c0_6 = arith.constant 0 : index
    %c0_7 = arith.constant 0 : index
    %c0_8 = arith.constant 0 : index
    %7 = vector.load %arg5[%c0_6, %c0_7, %c0_8] : memref<1x4x64xf32, #tpu.memory_space<vmem>>, vector<1x4x64xf32>
    %8 = vector.shape_cast %7 : vector<1x4x64xf32> to vector<4x64xf32>
    %c0_9 = arith.constant 0 : index
    %c0_10 = arith.constant 0 : index
    %c0_11 = arith.constant 0 : index
    %9 = vector.load %arg7[%c0_9, %c0_10, %c0_11] : memref<1x64x32xbf16, #tpu.memory_space<vmem>>, vector<1x64x32xbf16>
    %10 = vector.shape_cast %9 : vector<1x64x32xbf16> to vector<64x32xbf16>
    %c0_12 = arith.constant 0 : index
    %c0_13 = arith.constant 0 : index
    %c0_14 = arith.constant 0 : index
    %11 = vector.load %arg8[%c0_12, %c0_13, %c0_14] : memref<1x16x64xf32, #tpu.memory_space<vmem>>, vector<1x16x64xf32>
    %12 = vector.shape_cast %11 : vector<1x16x64xf32> to vector<16x64xf32>
    %c0_15 = arith.constant 0 : index
    %c0_16 = arith.constant 0 : index
    %c0_17 = arith.constant 0 : index
    %13 = vector.load %arg9[%c0_15, %c0_16, %c0_17] : memref<1x3x64xf32, #tpu.memory_space<vmem>>, vector<1x3x64xf32>
    %14 = vector.shape_cast %13 : vector<1x3x64xf32> to vector<3x64xf32>
    %c0_18 = arith.constant 0 : index
    %c0_19 = arith.constant 0 : index
    %c0_20 = arith.constant 0 : index
    %15 = vector.load %arg10[%c0_18, %c0_19, %c0_20] : memref<1x64x32xbf16, #tpu.memory_space<vmem>>, vector<1x64x32xbf16>
    %16 = vector.shape_cast %15 : vector<1x64x32xbf16> to vector<64x32xbf16>
    %c0_21 = arith.constant 0 : index
    %c0_22 = arith.constant 0 : index
    %17 = vector.load %arg11[%c0_21, %c0_22] : memref<1x32xf32, #tpu.memory_space<vmem>>, vector<1x32xf32>
    %18 = vector.extract_strided_slice %14 {offsets = [0, 0], sizes = [1, 64], strides = [1, 1]} : vector<3x64xf32> to vector<1x64xf32>
    %19 = vector.extract_strided_slice %14 {offsets = [1, 0], sizes = [1, 64], strides = [1, 1]} : vector<3x64xf32> to vector<1x64xf32>
    %20 = vector.extract_strided_slice %14 {offsets = [2, 0], sizes = [1, 64], strides = [1, 1]} : vector<3x64xf32> to vector<1x64xf32>
    %c0_23 = arith.constant 0 : index
    %c0_24 = arith.constant 0 : index
    %c0_25 = arith.constant 0 : index
    %21 = vector.load %arg6[%c0_23, %c0_24, %c0_25] : memref<1x64x64xbf16, #tpu.memory_space<vmem>>, vector<1x64x64xbf16>
    %22 = vector.shape_cast %21 : vector<1x64x64xbf16> to vector<64x64xbf16>
    %cst = arith.constant 0.000000e+00 : f32
    %23 = vector.broadcast %cst : f32 to vector<16x64xf32>
    %cst_26 = arith.constant 0.000000e+00 : f32
    %24 = vector.broadcast %cst_26 : f32 to vector<16x64xf32>
    %cst_27 = arith.constant 0.000000e+00 : f32
    %25 = vector.broadcast %cst_27 : f32 to vector<3x64xf32>
    %cst_28 = arith.constant 0.000000e+00 : f32
    %26 = vector.broadcast %cst_28 : f32 to vector<3x64xf32>
    %c0_29 = arith.constant 0 : index
    %c0_30 = arith.constant 0 : index
    %27 = vector.load %arg13[%c0_29, %c0_30] : memref<32x32xf32, #tpu.memory_space<vmem>>, vector<8x32xf32>
    %c16 = arith.constant 16 : index
    %c0_31 = arith.constant 0 : index
    %28 = vector.load %arg13[%c16, %c0_31] : memref<32x32xf32, #tpu.memory_space<vmem>>, vector<8x32xf32>
    %29 = tpu.concatenate %27, %28 in 0 : vector<8x32xf32>, vector<8x32xf32> -> vector<16x32xf32>
    %30 = arith.truncf %29 : vector<16x32xf32> to vector<16x32xbf16>
    %cst_32 = arith.constant dense<0.000000e+00> : vector<16x64xf32>
    %31 = tpu.matmul %30, %4, %cst_32 {dimension_numbers = #tpu.dot_dimension_numbers<[1], [0], [0], [1], [0, 0, 1, 1], [], []>} : vector<16x32xbf16>, vector<32x64xbf16>, vector<16x64xf32> -> vector<16x64xf32>
    %32 = vector.extract_strided_slice %31 {offsets = [0, 0], sizes = [8, 64], strides = [1, 1]} : vector<16x64xf32> to vector<8x64xf32>
    %33 = tpu.concatenate %25, %32 in 0 : vector<3x64xf32>, vector<8x64xf32> -> vector<11x64xf32>
    %34 = vector.extract_strided_slice %8 {offsets = [3, 0], sizes = [1, 64], strides = [1, 1]} : vector<4x64xf32> to vector<1x64xf32>
    %35 = vector.broadcast %34 : vector<1x64xf32> to vector<8x64xf32>
    %36 = arith.mulf %32, %35 : vector<8x64xf32>
    %37 = vector.extract_strided_slice %33 {offsets = [2, 0], sizes = [8, 64], strides = [1, 1]} : vector<11x64xf32> to vector<8x64xf32>
    %38 = vector.extract_strided_slice %8 {offsets = [2, 0], sizes = [1, 64], strides = [1, 1]} : vector<4x64xf32> to vector<1x64xf32>
    %39 = vector.broadcast %38 : vector<1x64xf32> to vector<8x64xf32>
    %40 = arith.mulf %37, %39 : vector<8x64xf32>
    %41 = arith.addf %36, %40 : vector<8x64xf32>
    %42 = vector.extract_strided_slice %33 {offsets = [1, 0], sizes = [8, 64], strides = [1, 1]} : vector<11x64xf32> to vector<8x64xf32>
    %43 = vector.extract_strided_slice %8 {offsets = [1, 0], sizes = [1, 64], strides = [1, 1]} : vector<4x64xf32> to vector<1x64xf32>
    %44 = vector.broadcast %43 : vector<1x64xf32> to vector<8x64xf32>
    %45 = arith.mulf %42, %44 : vector<8x64xf32>
    %46 = arith.addf %41, %45 : vector<8x64xf32>
    %47 = vector.extract_strided_slice %33 {offsets = [0, 0], sizes = [8, 64], strides = [1, 1]} : vector<11x64xf32> to vector<8x64xf32>
    %48 = vector.extract_strided_slice %8 {offsets = [0, 0], sizes = [1, 64], strides = [1, 1]} : vector<4x64xf32> to vector<1x64xf32>
    %49 = vector.broadcast %48 : vector<1x64xf32> to vector<8x64xf32>
    %50 = arith.mulf %47, %49 : vector<8x64xf32>
    %51 = arith.addf %46, %50 : vector<8x64xf32>
    %52 = vector.broadcast %18 : vector<1x64xf32> to vector<8x64xf32>
    %53 = arith.addf %51, %52 : vector<8x64xf32>
    %cst_33 = arith.constant 0.000000e+00 : f32
    %54 = vector.broadcast %cst_33 : f32 to vector<8x64xf32>
    %55 = arith.subf %54, %53 : vector<8x64xf32>
    %56 = math.exp %55 : vector<8x64xf32>
    %cst_34 = arith.constant 1.000000e+00 : f32
    %57 = vector.broadcast %cst_34 : f32 to vector<8x64xf32>
    %58 = arith.addf %57, %56 : vector<8x64xf32>
    %cst_35 = arith.constant 1.000000e+00 : f32
    %59 = vector.broadcast %cst_35 : f32 to vector<8x64xf32>
    %60 = arith.divf %59, %58 : vector<8x64xf32>
    %61 = arith.mulf %53, %60 : vector<8x64xf32>
    %62 = vector.extract_strided_slice %33 {offsets = [8, 0], sizes = [3, 64], strides = [1, 1]} : vector<11x64xf32> to vector<3x64xf32>
    %63 = vector.extract_strided_slice %31 {offsets = [8, 0], sizes = [8, 64], strides = [1, 1]} : vector<16x64xf32> to vector<8x64xf32>
    %64 = tpu.concatenate %26, %63 in 0 : vector<3x64xf32>, vector<8x64xf32> -> vector<11x64xf32>
    %65 = vector.extract_strided_slice %8 {offsets = [3, 0], sizes = [1, 64], strides = [1, 1]} : vector<4x64xf32> to vector<1x64xf32>
    %66 = vector.broadcast %65 : vector<1x64xf32> to vector<8x64xf32>
    %67 = arith.mulf %63, %66 : vector<8x64xf32>
    %68 = vector.extract_strided_slice %64 {offsets = [2, 0], sizes = [8, 64], strides = [1, 1]} : vector<11x64xf32> to vector<8x64xf32>
    %69 = vector.extract_strided_slice %8 {offsets = [2, 0], sizes = [1, 64], strides = [1, 1]} : vector<4x64xf32> to vector<1x64xf32>
    %70 = vector.broadcast %69 : vector<1x64xf32> to vector<8x64xf32>
    %71 = arith.mulf %68, %70 : vector<8x64xf32>
    %72 = arith.addf %67, %71 : vector<8x64xf32>
    %73 = vector.extract_strided_slice %64 {offsets = [1, 0], sizes = [8, 64], strides = [1, 1]} : vector<11x64xf32> to vector<8x64xf32>
    %74 = vector.extract_strided_slice %8 {offsets = [1, 0], sizes = [1, 64], strides = [1, 1]} : vector<4x64xf32> to vector<1x64xf32>
    %75 = vector.broadcast %74 : vector<1x64xf32> to vector<8x64xf32>
    %76 = arith.mulf %73, %75 : vector<8x64xf32>
    %77 = arith.addf %72, %76 : vector<8x64xf32>
    %78 = vector.extract_strided_slice %64 {offsets = [0, 0], sizes = [8, 64], strides = [1, 1]} : vector<11x64xf32> to vector<8x64xf32>
    %79 = vector.extract_strided_slice %8 {offsets = [0, 0], sizes = [1, 64], strides = [1, 1]} : vector<4x64xf32> to vector<1x64xf32>
    %80 = vector.broadcast %79 : vector<1x64xf32> to vector<8x64xf32>
    %81 = arith.mulf %78, %80 : vector<8x64xf32>
    %82 = arith.addf %77, %81 : vector<8x64xf32>
    %83 = vector.broadcast %18 : vector<1x64xf32> to vector<8x64xf32>
    %84 = arith.addf %82, %83 : vector<8x64xf32>
    %cst_36 = arith.constant 0.000000e+00 : f32
    %85 = vector.broadcast %cst_36 : f32 to vector<8x64xf32>
    %86 = arith.subf %85, %84 : vector<8x64xf32>
    %87 = math.exp %86 : vector<8x64xf32>
    %cst_37 = arith.constant 1.000000e+00 : f32
    %88 = vector.broadcast %cst_37 : f32 to vector<8x64xf32>
    %89 = arith.addf %88, %87 : vector<8x64xf32>
    %cst_38 = arith.constant 1.000000e+00 : f32
    %90 = vector.broadcast %cst_38 : f32 to vector<8x64xf32>
    %91 = arith.divf %90, %89 : vector<8x64xf32>
    %92 = arith.mulf %84, %91 : vector<8x64xf32>
    %93 = vector.extract_strided_slice %64 {offsets = [8, 0], sizes = [3, 64], strides = [1, 1]} : vector<11x64xf32> to vector<3x64xf32>
    %94 = tpu.concatenate %61, %92 in 0 : vector<8x64xf32>, vector<8x64xf32> -> vector<16x64xf32>
    %95 = arith.truncf %94 : vector<16x64xf32> to vector<16x64xbf16>
    %cst_39 = arith.constant dense<0.000000e+00> : vector<16x64xf32>
    %96 = tpu.matmul %95, %22, %cst_39 {dimension_numbers = #tpu.dot_dimension_numbers<[1], [0], [0], [1], [0, 0, 1, 1], [], []>} : vector<16x64xbf16>, vector<64x64xbf16>, vector<16x64xf32> -> vector<16x64xf32>
    %97 = vector.broadcast %19 : vector<1x64xf32> to vector<16x64xf32>
    %98 = arith.addf %96, %97 : vector<16x64xf32>
    %cst_40 = arith.constant 2.000000e+01 : f32
    %99 = vector.broadcast %cst_40 : f32 to vector<16x64xf32>
    %100 = arith.minimumf %98, %99 : vector<16x64xf32>
    %cst_41 = arith.constant 2.000000e+01 : f32
    %101 = vector.broadcast %cst_41 : f32 to vector<16x64xf32>
    %102 = arith.cmpf ogt, %98, %101 : vector<16x64xf32>
    %103 = math.exp %100 : vector<16x64xf32>
    %cst_42 = arith.constant 1.000000e+00 : f32
    %104 = vector.broadcast %cst_42 : f32 to vector<16x64xf32>
    %105 = arith.addf %104, %103 : vector<16x64xf32>
    %106 = math.log %105 : vector<16x64xf32>
    %107 = arith.select %102, %98, %106 : vector<16x64xi1>, vector<16x64xf32>
    %108 = arith.mulf %107, %94 : vector<16x64xf32>
    %cst_43 = arith.constant dense<0.000000e+00> : vector<16x32xf32>
    %109 = tpu.matmul %95, %10, %cst_43 {dimension_numbers = #tpu.dot_dimension_numbers<[1], [0], [0], [1], [0, 0, 1, 1], [], []>} : vector<16x64xbf16>, vector<64x32xbf16>, vector<16x32xf32> -> vector<16x32xf32>
    %110 = vector.extract_strided_slice %109 {offsets = [0, 0], sizes = [1, 16], strides = [1, 1]} : vector<16x32xf32> to vector<1x16xf32>
    %111 = vector.shape_cast %110 : vector<1x16xf32> to vector<16x1xf32>
    %112 = vector.extract_strided_slice %109 {offsets = [1, 0], sizes = [1, 16], strides = [1, 1]} : vector<16x32xf32> to vector<1x16xf32>
    %113 = vector.shape_cast %112 : vector<1x16xf32> to vector<16x1xf32>
    %114 = vector.extract_strided_slice %109 {offsets = [2, 0], sizes = [1, 16], strides = [1, 1]} : vector<16x32xf32> to vector<1x16xf32>
    %115 = vector.shape_cast %114 : vector<1x16xf32> to vector<16x1xf32>
    %116 = vector.extract_strided_slice %109 {offsets = [3, 0], sizes = [1, 16], strides = [1, 1]} : vector<16x32xf32> to vector<1x16xf32>
    %117 = vector.shape_cast %116 : vector<1x16xf32> to vector<16x1xf32>
    %118 = vector.extract_strided_slice %109 {offsets = [4, 0], sizes = [1, 16], strides = [1, 1]} : vector<16x32xf32> to vector<1x16xf32>
    %119 = vector.shape_cast %118 : vector<1x16xf32> to vector<16x1xf32>
    %120 = vector.extract_strided_slice %109 {offsets = [5, 0], sizes = [1, 16], strides = [1, 1]} : vector<16x32xf32> to vector<1x16xf32>
    %121 = vector.shape_cast %120 : vector<1x16xf32> to vector<16x1xf32>
    %122 = vector.extract_strided_slice %109 {offsets = [6, 0], sizes = [1, 16], strides = [1, 1]} : vector<16x32xf32> to vector<1x16xf32>
    %123 = vector.shape_cast %122 : vector<1x16xf32> to vector<16x1xf32>
    %124 = vector.extract_strided_slice %109 {offsets = [7, 0], sizes = [1, 16], strides = [1, 1]} : vector<16x32xf32> to vector<1x16xf32>
    %125 = vector.shape_cast %124 : vector<1x16xf32> to vector<16x1xf32>
    %126 = vector.extract_strided_slice %109 {offsets = [0, 16], sizes = [1, 16], strides = [1, 1]} : vector<16x32xf32> to vector<1x16xf32>
    %127 = vector.shape_cast %126 : vector<1x16xf32> to vector<16x1xf32>
    %128 = vector.extract_strided_slice %109 {offsets = [1, 16], sizes = [1, 16], strides = [1, 1]} : vector<16x32xf32> to vector<1x16xf32>
    %129 = vector.shape_cast %128 : vector<1x16xf32> to vector<16x1xf32>
    %130 = vector.extract_strided_slice %109 {offsets = [2, 16], sizes = [1, 16], strides = [1, 1]} : vector<16x32xf32> to vector<1x16xf32>
    %131 = vector.shape_cast %130 : vector<1x16xf32> to vector<16x1xf32>
    %132 = vector.extract_strided_slice %109 {offsets = [3, 16], sizes = [1, 16], strides = [1, 1]} : vector<16x32xf32> to vector<1x16xf32>
    %133 = vector.shape_cast %132 : vector<1x16xf32> to vector<16x1xf32>
    %134 = vector.extract_strided_slice %109 {offsets = [4, 16], sizes = [1, 16], strides = [1, 1]} : vector<16x32xf32> to vector<1x16xf32>
    %135 = vector.shape_cast %134 : vector<1x16xf32> to vector<16x1xf32>
    %136 = vector.extract_strided_slice %109 {offsets = [5, 16], sizes = [1, 16], strides = [1, 1]} : vector<16x32xf32> to vector<1x16xf32>
    %137 = vector.shape_cast %136 : vector<1x16xf32> to vector<16x1xf32>
    %138 = vector.extract_strided_slice %109 {offsets = [6, 16], sizes = [1, 16], strides = [1, 1]} : vector<16x32xf32> to vector<1x16xf32>
    %139 = vector.shape_cast %138 : vector<1x16xf32> to vector<16x1xf32>
    %140 = vector.extract_strided_slice %109 {offsets = [7, 16], sizes = [1, 16], strides = [1, 1]} : vector<16x32xf32> to vector<1x16xf32>
    %141 = vector.shape_cast %140 : vector<1x16xf32> to vector<16x1xf32>
    %142 = vector.extract_strided_slice %107 {offsets = [0, 0], sizes = [1, 64], strides = [1, 1]} : vector<16x64xf32> to vector<1x64xf32>
    %143 = vector.broadcast %142 : vector<1x64xf32> to vector<16x64xf32>
    %144 = arith.mulf %143, %12 : vector<16x64xf32>
    %145 = math.exp %144 : vector<16x64xf32>
    %146 = arith.mulf %145, %23 : vector<16x64xf32>
    %147 = vector.extract_strided_slice %108 {offsets = [0, 0], sizes = [1, 64], strides = [1, 1]} : vector<16x64xf32> to vector<1x64xf32>
    %148 = vector.broadcast %111 : vector<16x1xf32> to vector<16x64xf32>
    %149 = vector.broadcast %147 : vector<1x64xf32> to vector<16x64xf32>
    %150 = arith.mulf %148, %149 : vector<16x64xf32>
    %151 = arith.addf %146, %150 : vector<16x64xf32>
    %152 = vector.broadcast %127 : vector<16x1xf32> to vector<16x64xf32>
    %153 = arith.mulf %152, %151 : vector<16x64xf32>
    %cst_44 = arith.constant dense<0.000000e+00> : vector<64xf32>
    %154 = vector.multi_reduction <add>, %153, %cst_44 [0] : vector<16x64xf32> to vector<64xf32>
    %155 = vector.shape_cast %154 : vector<64xf32> to vector<1x64xf32>
    %156 = vector.extract_strided_slice %107 {offsets = [1, 0], sizes = [1, 64], strides = [1, 1]} : vector<16x64xf32> to vector<1x64xf32>
    %157 = vector.broadcast %156 : vector<1x64xf32> to vector<16x64xf32>
    %158 = arith.mulf %157, %12 : vector<16x64xf32>
    %159 = math.exp %158 : vector<16x64xf32>
    %160 = arith.mulf %159, %151 : vector<16x64xf32>
    %161 = vector.extract_strided_slice %108 {offsets = [1, 0], sizes = [1, 64], strides = [1, 1]} : vector<16x64xf32> to vector<1x64xf32>
    %162 = vector.broadcast %113 : vector<16x1xf32> to vector<16x64xf32>
    %163 = vector.broadcast %161 : vector<1x64xf32> to vector<16x64xf32>
    %164 = arith.mulf %162, %163 : vector<16x64xf32>
    %165 = arith.addf %160, %164 : vector<16x64xf32>
    %166 = vector.broadcast %129 : vector<16x1xf32> to vector<16x64xf32>
    %167 = arith.mulf %166, %165 : vector<16x64xf32>
    %cst_45 = arith.constant dense<0.000000e+00> : vector<64xf32>
    %168 = vector.multi_reduction <add>, %167, %cst_45 [0] : vector<16x64xf32> to vector<64xf32>
    %169 = vector.shape_cast %168 : vector<64xf32> to vector<1x64xf32>
    %170 = vector.extract_strided_slice %107 {offsets = [2, 0], sizes = [1, 64], strides = [1, 1]} : vector<16x64xf32> to vector<1x64xf32>
    %171 = vector.broadcast %170 : vector<1x64xf32> to vector<16x64xf32>
    %172 = arith.mulf %171, %12 : vector<16x64xf32>
    %173 = math.exp %172 : vector<16x64xf32>
    %174 = arith.mulf %173, %165 : vector<16x64xf32>
    %175 = vector.extract_strided_slice %108 {offsets = [2, 0], sizes = [1, 64], strides = [1, 1]} : vector<16x64xf32> to vector<1x64xf32>
    %176 = vector.broadcast %115 : vector<16x1xf32> to vector<16x64xf32>
    %177 = vector.broadcast %175 : vector<1x64xf32> to vector<16x64xf32>
    %178 = arith.mulf %176, %177 : vector<16x64xf32>
    %179 = arith.addf %174, %178 : vector<16x64xf32>
    %180 = vector.broadcast %131 : vector<16x1xf32> to vector<16x64xf32>
    %181 = arith.mulf %180, %179 : vector<16x64xf32>
    %cst_46 = arith.constant dense<0.000000e+00> : vector<64xf32>
    %182 = vector.multi_reduction <add>, %181, %cst_46 [0] : vector<16x64xf32> to vector<64xf32>
    %183 = vector.shape_cast %182 : vector<64xf32> to vector<1x64xf32>
    %184 = vector.extract_strided_slice %107 {offsets = [3, 0], sizes = [1, 64], strides = [1, 1]} : vector<16x64xf32> to vector<1x64xf32>
    %185 = vector.broadcast %184 : vector<1x64xf32> to vector<16x64xf32>
    %186 = arith.mulf %185, %12 : vector<16x64xf32>
    %187 = math.exp %186 : vector<16x64xf32>
    %188 = arith.mulf %187, %179 : vector<16x64xf32>
    %189 = vector.extract_strided_slice %108 {offsets = [3, 0], sizes = [1, 64], strides = [1, 1]} : vector<16x64xf32> to vector<1x64xf32>
    %190 = vector.broadcast %117 : vector<16x1xf32> to vector<16x64xf32>
    %191 = vector.broadcast %189 : vector<1x64xf32> to vector<16x64xf32>
    %192 = arith.mulf %190, %191 : vector<16x64xf32>
    %193 = arith.addf %188, %192 : vector<16x64xf32>
    %194 = vector.broadcast %133 : vector<16x1xf32> to vector<16x64xf32>
    %195 = arith.mulf %194, %193 : vector<16x64xf32>
    %cst_47 = arith.constant dense<0.000000e+00> : vector<64xf32>
    %196 = vector.multi_reduction <add>, %195, %cst_47 [0] : vector<16x64xf32> to vector<64xf32>
    %197 = vector.shape_cast %196 : vector<64xf32> to vector<1x64xf32>
    %198 = vector.extract_strided_slice %107 {offsets = [4, 0], sizes = [1, 64], strides = [1, 1]} : vector<16x64xf32> to vector<1x64xf32>
    %199 = vector.broadcast %198 : vector<1x64xf32> to vector<16x64xf32>
    %200 = arith.mulf %199, %12 : vector<16x64xf32>
    %201 = math.exp %200 : vector<16x64xf32>
    %202 = arith.mulf %201, %193 : vector<16x64xf32>
    %203 = vector.extract_strided_slice %108 {offsets = [4, 0], sizes = [1, 64], strides = [1, 1]} : vector<16x64xf32> to vector<1x64xf32>
    %204 = vector.broadcast %119 : vector<16x1xf32> to vector<16x64xf32>
    %205 = vector.broadcast %203 : vector<1x64xf32> to vector<16x64xf32>
    %206 = arith.mulf %204, %205 : vector<16x64xf32>
    %207 = arith.addf %202, %206 : vector<16x64xf32>
    %208 = vector.broadcast %135 : vector<16x1xf32> to vector<16x64xf32>
    %209 = arith.mulf %208, %207 : vector<16x64xf32>
    %cst_48 = arith.constant dense<0.000000e+00> : vector<64xf32>
    %210 = vector.multi_reduction <add>, %209, %cst_48 [0] : vector<16x64xf32> to vector<64xf32>
    %211 = vector.shape_cast %210 : vector<64xf32> to vector<1x64xf32>
    %212 = vector.extract_strided_slice %107 {offsets = [5, 0], sizes = [1, 64], strides = [1, 1]} : vector<16x64xf32> to vector<1x64xf32>
    %213 = vector.broadcast %212 : vector<1x64xf32> to vector<16x64xf32>
    %214 = arith.mulf %213, %12 : vector<16x64xf32>
    %215 = math.exp %214 : vector<16x64xf32>
    %216 = arith.mulf %215, %207 : vector<16x64xf32>
    %217 = vector.extract_strided_slice %108 {offsets = [5, 0], sizes = [1, 64], strides = [1, 1]} : vector<16x64xf32> to vector<1x64xf32>
    %218 = vector.broadcast %121 : vector<16x1xf32> to vector<16x64xf32>
    %219 = vector.broadcast %217 : vector<1x64xf32> to vector<16x64xf32>
    %220 = arith.mulf %218, %219 : vector<16x64xf32>
    %221 = arith.addf %216, %220 : vector<16x64xf32>
    %222 = vector.broadcast %137 : vector<16x1xf32> to vector<16x64xf32>
    %223 = arith.mulf %222, %221 : vector<16x64xf32>
    %cst_49 = arith.constant dense<0.000000e+00> : vector<64xf32>
    %224 = vector.multi_reduction <add>, %223, %cst_49 [0] : vector<16x64xf32> to vector<64xf32>
    %225 = vector.shape_cast %224 : vector<64xf32> to vector<1x64xf32>
    %226 = vector.extract_strided_slice %107 {offsets = [6, 0], sizes = [1, 64], strides = [1, 1]} : vector<16x64xf32> to vector<1x64xf32>
    %227 = vector.broadcast %226 : vector<1x64xf32> to vector<16x64xf32>
    %228 = arith.mulf %227, %12 : vector<16x64xf32>
    %229 = math.exp %228 : vector<16x64xf32>
    %230 = arith.mulf %229, %221 : vector<16x64xf32>
    %231 = vector.extract_strided_slice %108 {offsets = [6, 0], sizes = [1, 64], strides = [1, 1]} : vector<16x64xf32> to vector<1x64xf32>
    %232 = vector.broadcast %123 : vector<16x1xf32> to vector<16x64xf32>
    %233 = vector.broadcast %231 : vector<1x64xf32> to vector<16x64xf32>
    %234 = arith.mulf %232, %233 : vector<16x64xf32>
    %235 = arith.addf %230, %234 : vector<16x64xf32>
    %236 = vector.broadcast %139 : vector<16x1xf32> to vector<16x64xf32>
    %237 = arith.mulf %236, %235 : vector<16x64xf32>
    %cst_50 = arith.constant dense<0.000000e+00> : vector<64xf32>
    %238 = vector.multi_reduction <add>, %237, %cst_50 [0] : vector<16x64xf32> to vector<64xf32>
    %239 = vector.shape_cast %238 : vector<64xf32> to vector<1x64xf32>
    %240 = vector.extract_strided_slice %107 {offsets = [7, 0], sizes = [1, 64], strides = [1, 1]} : vector<16x64xf32> to vector<1x64xf32>
    %241 = vector.broadcast %240 : vector<1x64xf32> to vector<16x64xf32>
    %242 = arith.mulf %241, %12 : vector<16x64xf32>
    %243 = math.exp %242 : vector<16x64xf32>
    %244 = arith.mulf %243, %235 : vector<16x64xf32>
    %245 = vector.extract_strided_slice %108 {offsets = [7, 0], sizes = [1, 64], strides = [1, 1]} : vector<16x64xf32> to vector<1x64xf32>
    %246 = vector.broadcast %125 : vector<16x1xf32> to vector<16x64xf32>
    %247 = vector.broadcast %245 : vector<1x64xf32> to vector<16x64xf32>
    %248 = arith.mulf %246, %247 : vector<16x64xf32>
    %249 = arith.addf %244, %248 : vector<16x64xf32>
    %250 = vector.broadcast %141 : vector<16x1xf32> to vector<16x64xf32>
    %251 = arith.mulf %250, %249 : vector<16x64xf32>
    %cst_51 = arith.constant dense<0.000000e+00> : vector<64xf32>
    %252 = vector.multi_reduction <add>, %251, %cst_51 [0] : vector<16x64xf32> to vector<64xf32>
    %253 = vector.shape_cast %252 : vector<64xf32> to vector<1x64xf32>
    %254 = tpu.concatenate %155, %169, %183, %197, %211, %225, %239, %253 in 0 : vector<1x64xf32>, vector<1x64xf32>, vector<1x64xf32>, vector<1x64xf32>, vector<1x64xf32>, vector<1x64xf32>, vector<1x64xf32>, vector<1x64xf32> -> vector<8x64xf32>
    %255 = vector.extract_strided_slice %109 {offsets = [8, 0], sizes = [1, 16], strides = [1, 1]} : vector<16x32xf32> to vector<1x16xf32>
    %256 = vector.shape_cast %255 : vector<1x16xf32> to vector<16x1xf32>
    %257 = vector.extract_strided_slice %109 {offsets = [9, 0], sizes = [1, 16], strides = [1, 1]} : vector<16x32xf32> to vector<1x16xf32>
    %258 = vector.shape_cast %257 : vector<1x16xf32> to vector<16x1xf32>
    %259 = vector.extract_strided_slice %109 {offsets = [10, 0], sizes = [1, 16], strides = [1, 1]} : vector<16x32xf32> to vector<1x16xf32>
    %260 = vector.shape_cast %259 : vector<1x16xf32> to vector<16x1xf32>
    %261 = vector.extract_strided_slice %109 {offsets = [11, 0], sizes = [1, 16], strides = [1, 1]} : vector<16x32xf32> to vector<1x16xf32>
    %262 = vector.shape_cast %261 : vector<1x16xf32> to vector<16x1xf32>
    %263 = vector.extract_strided_slice %109 {offsets = [12, 0], sizes = [1, 16], strides = [1, 1]} : vector<16x32xf32> to vector<1x16xf32>
    %264 = vector.shape_cast %263 : vector<1x16xf32> to vector<16x1xf32>
    %265 = vector.extract_strided_slice %109 {offsets = [13, 0], sizes = [1, 16], strides = [1, 1]} : vector<16x32xf32> to vector<1x16xf32>
    %266 = vector.shape_cast %265 : vector<1x16xf32> to vector<16x1xf32>
    %267 = vector.extract_strided_slice %109 {offsets = [14, 0], sizes = [1, 16], strides = [1, 1]} : vector<16x32xf32> to vector<1x16xf32>
    %268 = vector.shape_cast %267 : vector<1x16xf32> to vector<16x1xf32>
    %269 = vector.extract_strided_slice %109 {offsets = [15, 0], sizes = [1, 16], strides = [1, 1]} : vector<16x32xf32> to vector<1x16xf32>
    %270 = vector.shape_cast %269 : vector<1x16xf32> to vector<16x1xf32>
    %271 = vector.extract_strided_slice %109 {offsets = [8, 16], sizes = [1, 16], strides = [1, 1]} : vector<16x32xf32> to vector<1x16xf32>
    %272 = vector.shape_cast %271 : vector<1x16xf32> to vector<16x1xf32>
    %273 = vector.extract_strided_slice %109 {offsets = [9, 16], sizes = [1, 16], strides = [1, 1]} : vector<16x32xf32> to vector<1x16xf32>
    %274 = vector.shape_cast %273 : vector<1x16xf32> to vector<16x1xf32>
    %275 = vector.extract_strided_slice %109 {offsets = [10, 16], sizes = [1, 16], strides = [1, 1]} : vector<16x32xf32> to vector<1x16xf32>
    %276 = vector.shape_cast %275 : vector<1x16xf32> to vector<16x1xf32>
    %277 = vector.extract_strided_slice %109 {offsets = [11, 16], sizes = [1, 16], strides = [1, 1]} : vector<16x32xf32> to vector<1x16xf32>
    %278 = vector.shape_cast %277 : vector<1x16xf32> to vector<16x1xf32>
    %279 = vector.extract_strided_slice %109 {offsets = [12, 16], sizes = [1, 16], strides = [1, 1]} : vector<16x32xf32> to vector<1x16xf32>
    %280 = vector.shape_cast %279 : vector<1x16xf32> to vector<16x1xf32>
    %281 = vector.extract_strided_slice %109 {offsets = [13, 16], sizes = [1, 16], strides = [1, 1]} : vector<16x32xf32> to vector<1x16xf32>
    %282 = vector.shape_cast %281 : vector<1x16xf32> to vector<16x1xf32>
    %283 = vector.extract_strided_slice %109 {offsets = [14, 16], sizes = [1, 16], strides = [1, 1]} : vector<16x32xf32> to vector<1x16xf32>
    %284 = vector.shape_cast %283 : vector<1x16xf32> to vector<16x1xf32>
    %285 = vector.extract_strided_slice %109 {offsets = [15, 16], sizes = [1, 16], strides = [1, 1]} : vector<16x32xf32> to vector<1x16xf32>
    %286 = vector.shape_cast %285 : vector<1x16xf32> to vector<16x1xf32>
    %287 = vector.extract_strided_slice %107 {offsets = [8, 0], sizes = [1, 64], strides = [1, 1]} : vector<16x64xf32> to vector<1x64xf32>
    %288 = vector.broadcast %287 : vector<1x64xf32> to vector<16x64xf32>
    %289 = arith.mulf %288, %12 : vector<16x64xf32>
    %290 = math.exp %289 : vector<16x64xf32>
    %291 = arith.mulf %290, %24 : vector<16x64xf32>
    %292 = vector.extract_strided_slice %108 {offsets = [8, 0], sizes = [1, 64], strides = [1, 1]} : vector<16x64xf32> to vector<1x64xf32>
    %293 = vector.broadcast %256 : vector<16x1xf32> to vector<16x64xf32>
    %294 = vector.broadcast %292 : vector<1x64xf32> to vector<16x64xf32>
    %295 = arith.mulf %293, %294 : vector<16x64xf32>
    %296 = arith.addf %291, %295 : vector<16x64xf32>
    %297 = vector.broadcast %272 : vector<16x1xf32> to vector<16x64xf32>
    %298 = arith.mulf %297, %296 : vector<16x64xf32>
    %cst_52 = arith.constant dense<0.000000e+00> : vector<64xf32>
    %299 = vector.multi_reduction <add>, %298, %cst_52 [0] : vector<16x64xf32> to vector<64xf32>
    %300 = vector.shape_cast %299 : vector<64xf32> to vector<1x64xf32>
    %301 = vector.extract_strided_slice %107 {offsets = [9, 0], sizes = [1, 64], strides = [1, 1]} : vector<16x64xf32> to vector<1x64xf32>
    %302 = vector.broadcast %301 : vector<1x64xf32> to vector<16x64xf32>
    %303 = arith.mulf %302, %12 : vector<16x64xf32>
    %304 = math.exp %303 : vector<16x64xf32>
    %305 = arith.mulf %304, %296 : vector<16x64xf32>
    %306 = vector.extract_strided_slice %108 {offsets = [9, 0], sizes = [1, 64], strides = [1, 1]} : vector<16x64xf32> to vector<1x64xf32>
    %307 = vector.broadcast %258 : vector<16x1xf32> to vector<16x64xf32>
    %308 = vector.broadcast %306 : vector<1x64xf32> to vector<16x64xf32>
    %309 = arith.mulf %307, %308 : vector<16x64xf32>
    %310 = arith.addf %305, %309 : vector<16x64xf32>
    %311 = vector.broadcast %274 : vector<16x1xf32> to vector<16x64xf32>
    %312 = arith.mulf %311, %310 : vector<16x64xf32>
    %cst_53 = arith.constant dense<0.000000e+00> : vector<64xf32>
    %313 = vector.multi_reduction <add>, %312, %cst_53 [0] : vector<16x64xf32> to vector<64xf32>
    %314 = vector.shape_cast %313 : vector<64xf32> to vector<1x64xf32>
    %315 = vector.extract_strided_slice %107 {offsets = [10, 0], sizes = [1, 64], strides = [1, 1]} : vector<16x64xf32> to vector<1x64xf32>
    %316 = vector.broadcast %315 : vector<1x64xf32> to vector<16x64xf32>
    %317 = arith.mulf %316, %12 : vector<16x64xf32>
    %318 = math.exp %317 : vector<16x64xf32>
    %319 = arith.mulf %318, %310 : vector<16x64xf32>
    %320 = vector.extract_strided_slice %108 {offsets = [10, 0], sizes = [1, 64], strides = [1, 1]} : vector<16x64xf32> to vector<1x64xf32>
    %321 = vector.broadcast %260 : vector<16x1xf32> to vector<16x64xf32>
    %322 = vector.broadcast %320 : vector<1x64xf32> to vector<16x64xf32>
    %323 = arith.mulf %321, %322 : vector<16x64xf32>
    %324 = arith.addf %319, %323 : vector<16x64xf32>
    %325 = vector.broadcast %276 : vector<16x1xf32> to vector<16x64xf32>
    %326 = arith.mulf %325, %324 : vector<16x64xf32>
    %cst_54 = arith.constant dense<0.000000e+00> : vector<64xf32>
    %327 = vector.multi_reduction <add>, %326, %cst_54 [0] : vector<16x64xf32> to vector<64xf32>
    %328 = vector.shape_cast %327 : vector<64xf32> to vector<1x64xf32>
    %329 = vector.extract_strided_slice %107 {offsets = [11, 0], sizes = [1, 64], strides = [1, 1]} : vector<16x64xf32> to vector<1x64xf32>
    %330 = vector.broadcast %329 : vector<1x64xf32> to vector<16x64xf32>
    %331 = arith.mulf %330, %12 : vector<16x64xf32>
    %332 = math.exp %331 : vector<16x64xf32>
    %333 = arith.mulf %332, %324 : vector<16x64xf32>
    %334 = vector.extract_strided_slice %108 {offsets = [11, 0], sizes = [1, 64], strides = [1, 1]} : vector<16x64xf32> to vector<1x64xf32>
    %335 = vector.broadcast %262 : vector<16x1xf32> to vector<16x64xf32>
    %336 = vector.broadcast %334 : vector<1x64xf32> to vector<16x64xf32>
    %337 = arith.mulf %335, %336 : vector<16x64xf32>
    %338 = arith.addf %333, %337 : vector<16x64xf32>
    %339 = vector.broadcast %278 : vector<16x1xf32> to vector<16x64xf32>
    %340 = arith.mulf %339, %338 : vector<16x64xf32>
    %cst_55 = arith.constant dense<0.000000e+00> : vector<64xf32>
    %341 = vector.multi_reduction <add>, %340, %cst_55 [0] : vector<16x64xf32> to vector<64xf32>
    %342 = vector.shape_cast %341 : vector<64xf32> to vector<1x64xf32>
    %343 = vector.extract_strided_slice %107 {offsets = [12, 0], sizes = [1, 64], strides = [1, 1]} : vector<16x64xf32> to vector<1x64xf32>
    %344 = vector.broadcast %343 : vector<1x64xf32> to vector<16x64xf32>
    %345 = arith.mulf %344, %12 : vector<16x64xf32>
    %346 = math.exp %345 : vector<16x64xf32>
    %347 = arith.mulf %346, %338 : vector<16x64xf32>
    %348 = vector.extract_strided_slice %108 {offsets = [12, 0], sizes = [1, 64], strides = [1, 1]} : vector<16x64xf32> to vector<1x64xf32>
    %349 = vector.broadcast %264 : vector<16x1xf32> to vector<16x64xf32>
    %350 = vector.broadcast %348 : vector<1x64xf32> to vector<16x64xf32>
    %351 = arith.mulf %349, %350 : vector<16x64xf32>
    %352 = arith.addf %347, %351 : vector<16x64xf32>
    %353 = vector.broadcast %280 : vector<16x1xf32> to vector<16x64xf32>
    %354 = arith.mulf %353, %352 : vector<16x64xf32>
    %cst_56 = arith.constant dense<0.000000e+00> : vector<64xf32>
    %355 = vector.multi_reduction <add>, %354, %cst_56 [0] : vector<16x64xf32> to vector<64xf32>
    %356 = vector.shape_cast %355 : vector<64xf32> to vector<1x64xf32>
    %357 = vector.extract_strided_slice %107 {offsets = [13, 0], sizes = [1, 64], strides = [1, 1]} : vector<16x64xf32> to vector<1x64xf32>
    %358 = vector.broadcast %357 : vector<1x64xf32> to vector<16x64xf32>
    %359 = arith.mulf %358, %12 : vector<16x64xf32>
    %360 = math.exp %359 : vector<16x64xf32>
    %361 = arith.mulf %360, %352 : vector<16x64xf32>
    %362 = vector.extract_strided_slice %108 {offsets = [13, 0], sizes = [1, 64], strides = [1, 1]} : vector<16x64xf32> to vector<1x64xf32>
    %363 = vector.broadcast %266 : vector<16x1xf32> to vector<16x64xf32>
    %364 = vector.broadcast %362 : vector<1x64xf32> to vector<16x64xf32>
    %365 = arith.mulf %363, %364 : vector<16x64xf32>
    %366 = arith.addf %361, %365 : vector<16x64xf32>
    %367 = vector.broadcast %282 : vector<16x1xf32> to vector<16x64xf32>
    %368 = arith.mulf %367, %366 : vector<16x64xf32>
    %cst_57 = arith.constant dense<0.000000e+00> : vector<64xf32>
    %369 = vector.multi_reduction <add>, %368, %cst_57 [0] : vector<16x64xf32> to vector<64xf32>
    %370 = vector.shape_cast %369 : vector<64xf32> to vector<1x64xf32>
    %371 = vector.extract_strided_slice %107 {offsets = [14, 0], sizes = [1, 64], strides = [1, 1]} : vector<16x64xf32> to vector<1x64xf32>
    %372 = vector.broadcast %371 : vector<1x64xf32> to vector<16x64xf32>
    %373 = arith.mulf %372, %12 : vector<16x64xf32>
    %374 = math.exp %373 : vector<16x64xf32>
    %375 = arith.mulf %374, %366 : vector<16x64xf32>
    %376 = vector.extract_strided_slice %108 {offsets = [14, 0], sizes = [1, 64], strides = [1, 1]} : vector<16x64xf32> to vector<1x64xf32>
    %377 = vector.broadcast %268 : vector<16x1xf32> to vector<16x64xf32>
    %378 = vector.broadcast %376 : vector<1x64xf32> to vector<16x64xf32>
    %379 = arith.mulf %377, %378 : vector<16x64xf32>
    %380 = arith.addf %375, %379 : vector<16x64xf32>
    %381 = vector.broadcast %284 : vector<16x1xf32> to vector<16x64xf32>
    %382 = arith.mulf %381, %380 : vector<16x64xf32>
    %cst_58 = arith.constant dense<0.000000e+00> : vector<64xf32>
    %383 = vector.multi_reduction <add>, %382, %cst_58 [0] : vector<16x64xf32> to vector<64xf32>
    %384 = vector.shape_cast %383 : vector<64xf32> to vector<1x64xf32>
    %385 = vector.extract_strided_slice %107 {offsets = [15, 0], sizes = [1, 64], strides = [1, 1]} : vector<16x64xf32> to vector<1x64xf32>
    %386 = vector.broadcast %385 : vector<1x64xf32> to vector<16x64xf32>
    %387 = arith.mulf %386, %12 : vector<16x64xf32>
    %388 = math.exp %387 : vector<16x64xf32>
    %389 = arith.mulf %388, %380 : vector<16x64xf32>
    %390 = vector.extract_strided_slice %108 {offsets = [15, 0], sizes = [1, 64], strides = [1, 1]} : vector<16x64xf32> to vector<1x64xf32>
    %391 = vector.broadcast %270 : vector<16x1xf32> to vector<16x64xf32>
    %392 = vector.broadcast %390 : vector<1x64xf32> to vector<16x64xf32>
    %393 = arith.mulf %391, %392 : vector<16x64xf32>
    %394 = arith.addf %389, %393 : vector<16x64xf32>
    %395 = vector.broadcast %286 : vector<16x1xf32> to vector<16x64xf32>
    %396 = arith.mulf %395, %394 : vector<16x64xf32>
    %cst_59 = arith.constant dense<0.000000e+00> : vector<64xf32>
    %397 = vector.multi_reduction <add>, %396, %cst_59 [0] : vector<16x64xf32> to vector<64xf32>
    %398 = vector.shape_cast %397 : vector<64xf32> to vector<1x64xf32>
    %399 = tpu.concatenate %300, %314, %328, %342, %356, %370, %384, %398 in 0 : vector<1x64xf32>, vector<1x64xf32>, vector<1x64xf32>, vector<1x64xf32>, vector<1x64xf32>, vector<1x64xf32>, vector<1x64xf32>, vector<1x64xf32> -> vector<8x64xf32>
    %400 = tpu.concatenate %254, %399 in 0 : vector<8x64xf32>, vector<8x64xf32> -> vector<16x64xf32>
    %cst_60 = arith.constant dense<0.000000e+00> : vector<16x64xf32>
    %401 = tpu.matmul %30, %6, %cst_60 {dimension_numbers = #tpu.dot_dimension_numbers<[1], [0], [0], [1], [0, 0, 1, 1], [], []>} : vector<16x32xbf16>, vector<32x64xbf16>, vector<16x64xf32> -> vector<16x64xf32>
    %402 = vector.broadcast %20 : vector<1x64xf32> to vector<16x64xf32>
    %403 = arith.mulf %94, %402 : vector<16x64xf32>
    %404 = arith.addf %400, %403 : vector<16x64xf32>
    %cst_61 = arith.constant 0.000000e+00 : f32
    %405 = vector.broadcast %cst_61 : f32 to vector<16x64xf32>
    %406 = arith.subf %405, %401 : vector<16x64xf32>
    %407 = math.exp %406 : vector<16x64xf32>
    %cst_62 = arith.constant 1.000000e+00 : f32
    %408 = vector.broadcast %cst_62 : f32 to vector<16x64xf32>
    %409 = arith.addf %408, %407 : vector<16x64xf32>
    %cst_63 = arith.constant 1.000000e+00 : f32
    %410 = vector.broadcast %cst_63 : f32 to vector<16x64xf32>
    %411 = arith.divf %410, %409 : vector<16x64xf32>
    %412 = arith.mulf %401, %411 : vector<16x64xf32>
    %413 = arith.mulf %404, %412 : vector<16x64xf32>
    %414 = arith.truncf %413 : vector<16x64xf32> to vector<16x64xbf16>
    %cst_64 = arith.constant dense<0.000000e+00> : vector<16x32xf32>
    %415 = tpu.matmul %414, %16, %cst_64 {dimension_numbers = #tpu.dot_dimension_numbers<[1], [0], [0], [1], [0, 0, 1, 1], [], []>} : vector<16x64xbf16>, vector<64x32xbf16>, vector<16x32xf32> -> vector<16x32xf32>
    %416 = arith.addf %29, %415 : vector<16x32xf32>
    %417 = arith.mulf %416, %416 : vector<16x32xf32>
    %cst_65 = arith.constant dense<0.000000e+00> : vector<16xf32>
    %418 = vector.multi_reduction <add>, %417, %cst_65 [1] : vector<16x32xf32> to vector<16xf32>
    %419 = vector.shape_cast %418 : vector<16xf32> to vector<16x1xf32>
    %cst_66 = arith.constant 3.200000e+01 : f32
    %420 = vector.broadcast %cst_66 : f32 to vector<16x1xf32>
    %421 = arith.divf %419, %420 : vector<16x1xf32>
    %cst_67 = arith.constant 9.99999974E-6 : f32
    %422 = vector.broadcast %cst_67 : f32 to vector<16x1xf32>
    %423 = arith.addf %421, %422 : vector<16x1xf32>
    %424 = math.rsqrt %423 : vector<16x1xf32>
    %425 = vector.broadcast %424 : vector<16x1xf32> to vector<16x32xf32>
    %426 = arith.mulf %416, %425 : vector<16x32xf32>
    %427 = vector.broadcast %17 : vector<1x32xf32> to vector<16x32xf32>
    %428 = arith.mulf %426, %427 : vector<16x32xf32>
    %cst_68 = arith.constant 9.99999997E-7 : f32
    %429 = vector.broadcast %cst_68 : f32 to vector<16x32xf32>
    %430 = arith.addf %428, %429 : vector<16x32xf32>
    %431 = vector.extract_strided_slice %430 {offsets = [0, 0], sizes = [8, 32], strides = [1, 1]} : vector<16x32xf32> to vector<8x32xf32>
    %c0_69 = arith.constant 0 : index
    %c0_70 = arith.constant 0 : index
    %432 = vector.load %arg13[%c0_69, %c0_70] : memref<32x32xf32, #tpu.memory_space<vmem>>, vector<8x32xf32>
    tpu.vector_store %arg13[%c0_69, %c0_70], %431 {strides = array<i32>} : memref<32x32xf32, #tpu.memory_space<vmem>>, vector<8x32xf32>,
    %433 = vector.extract_strided_slice %430 {offsets = [8, 0], sizes = [8, 32], strides = [1, 1]} : vector<16x32xf32> to vector<8x32xf32>
    %c16_71 = arith.constant 16 : index
    %c0_72 = arith.constant 0 : index
    %434 = vector.load %arg13[%c16_71, %c0_72] : memref<32x32xf32, #tpu.memory_space<vmem>>, vector<8x32xf32>
    tpu.vector_store %arg13[%c16_71, %c0_72], %433 {strides = array<i32>} : memref<32x32xf32, #tpu.memory_space<vmem>>, vector<8x32xf32>,
    %c8 = arith.constant 8 : index
    %c0_73 = arith.constant 0 : index
    %435 = vector.load %arg13[%c8, %c0_73] : memref<32x32xf32, #tpu.memory_space<vmem>>, vector<8x32xf32>
    %c24 = arith.constant 24 : index
    %c0_74 = arith.constant 0 : index
    %436 = vector.load %arg13[%c24, %c0_74] : memref<32x32xf32, #tpu.memory_space<vmem>>, vector<8x32xf32>
    %437 = tpu.concatenate %435, %436 in 0 : vector<8x32xf32>, vector<8x32xf32> -> vector<16x32xf32>
    %438 = arith.truncf %437 : vector<16x32xf32> to vector<16x32xbf16>
    %cst_75 = arith.constant dense<0.000000e+00> : vector<16x64xf32>
    %439 = tpu.matmul %438, %4, %cst_75 {dimension_numbers = #tpu.dot_dimension_numbers<[1], [0], [0], [1], [0, 0, 1, 1], [], []>} : vector<16x32xbf16>, vector<32x64xbf16>, vector<16x64xf32> -> vector<16x64xf32>
    %440 = vector.extract_strided_slice %439 {offsets = [0, 0], sizes = [8, 64], strides = [1, 1]} : vector<16x64xf32> to vector<8x64xf32>
    %441 = tpu.concatenate %62, %440 in 0 : vector<3x64xf32>, vector<8x64xf32> -> vector<11x64xf32>
    %442 = vector.extract_strided_slice %8 {offsets = [3, 0], sizes = [1, 64], strides = [1, 1]} : vector<4x64xf32> to vector<1x64xf32>
    %443 = vector.broadcast %442 : vector<1x64xf32> to vector<8x64xf32>
    %444 = arith.mulf %440, %443 : vector<8x64xf32>
    %445 = vector.extract_strided_slice %441 {offsets = [2, 0], sizes = [8, 64], strides = [1, 1]} : vector<11x64xf32> to vector<8x64xf32>
    %446 = vector.extract_strided_slice %8 {offsets = [2, 0], sizes = [1, 64], strides = [1, 1]} : vector<4x64xf32> to vector<1x64xf32>
    %447 = vector.broadcast %446 : vector<1x64xf32> to vector<8x64xf32>
    %448 = arith.mulf %445, %447 : vector<8x64xf32>
    %449 = arith.addf %444, %448 : vector<8x64xf32>
    %450 = vector.extract_strided_slice %441 {offsets = [1, 0], sizes = [8, 64], strides = [1, 1]} : vector<11x64xf32> to vector<8x64xf32>
    %451 = vector.extract_strided_slice %8 {offsets = [1, 0], sizes = [1, 64], strides = [1, 1]} : vector<4x64xf32> to vector<1x64xf32>
    %452 = vector.broadcast %451 : vector<1x64xf32> to vector<8x64xf32>
    %453 = arith.mulf %450, %452 : vector<8x64xf32>
    %454 = arith.addf %449, %453 : vector<8x64xf32>
    %455 = vector.extract_strided_slice %441 {offsets = [0, 0], sizes = [8, 64], strides = [1, 1]} : vector<11x64xf32> to vector<8x64xf32>
    %456 = vector.extract_strided_slice %8 {offsets = [0, 0], sizes = [1, 64], strides = [1, 1]} : vector<4x64xf32> to vector<1x64xf32>
    %457 = vector.broadcast %456 : vector<1x64xf32> to vector<8x64xf32>
    %458 = arith.mulf %455, %457 : vector<8x64xf32>
    %459 = arith.addf %454, %458 : vector<8x64xf32>
    %460 = vector.broadcast %18 : vector<1x64xf32> to vector<8x64xf32>
    %461 = arith.addf %459, %460 : vector<8x64xf32>
    %cst_76 = arith.constant 0.000000e+00 : f32
    %462 = vector.broadcast %cst_76 : f32 to vector<8x64xf32>
    %463 = arith.subf %462, %461 : vector<8x64xf32>
    %464 = math.exp %463 : vector<8x64xf32>
    %cst_77 = arith.constant 1.000000e+00 : f32
    %465 = vector.broadcast %cst_77 : f32 to vector<8x64xf32>
    %466 = arith.addf %465, %464 : vector<8x64xf32>
    %cst_78 = arith.constant 1.000000e+00 : f32
    %467 = vector.broadcast %cst_78 : f32 to vector<8x64xf32>
    %468 = arith.divf %467, %466 : vector<8x64xf32>
    %469 = arith.mulf %461, %468 : vector<8x64xf32>
    %470 = vector.extract_strided_slice %439 {offsets = [8, 0], sizes = [8, 64], strides = [1, 1]} : vector<16x64xf32> to vector<8x64xf32>
    %471 = tpu.concatenate %93, %470 in 0 : vector<3x64xf32>, vector<8x64xf32> -> vector<11x64xf32>
    %472 = vector.extract_strided_slice %8 {offsets = [3, 0], sizes = [1, 64], strides = [1, 1]} : vector<4x64xf32> to vector<1x64xf32>
    %473 = vector.broadcast %472 : vector<1x64xf32> to vector<8x64xf32>
    %474 = arith.mulf %470, %473 : vector<8x64xf32>
    %475 = vector.extract_strided_slice %471 {offsets = [2, 0], sizes = [8, 64], strides = [1, 1]} : vector<11x64xf32> to vector<8x64xf32>
    %476 = vector.extract_strided_slice %8 {offsets = [2, 0], sizes = [1, 64], strides = [1, 1]} : vector<4x64xf32> to vector<1x64xf32>
    %477 = vector.broadcast %476 : vector<1x64xf32> to vector<8x64xf32>
    %478 = arith.mulf %475, %477 : vector<8x64xf32>
    %479 = arith.addf %474, %478 : vector<8x64xf32>
    %480 = vector.extract_strided_slice %471 {offsets = [1, 0], sizes = [8, 64], strides = [1, 1]} : vector<11x64xf32> to vector<8x64xf32>
    %481 = vector.extract_strided_slice %8 {offsets = [1, 0], sizes = [1, 64], strides = [1, 1]} : vector<4x64xf32> to vector<1x64xf32>
    %482 = vector.broadcast %481 : vector<1x64xf32> to vector<8x64xf32>
    %483 = arith.mulf %480, %482 : vector<8x64xf32>
    %484 = arith.addf %479, %483 : vector<8x64xf32>
    %485 = vector.extract_strided_slice %471 {offsets = [0, 0], sizes = [8, 64], strides = [1, 1]} : vector<11x64xf32> to vector<8x64xf32>
    %486 = vector.extract_strided_slice %8 {offsets = [0, 0], sizes = [1, 64], strides = [1, 1]} : vector<4x64xf32> to vector<1x64xf32>
    %487 = vector.broadcast %486 : vector<1x64xf32> to vector<8x64xf32>
    %488 = arith.mulf %485, %487 : vector<8x64xf32>
    %489 = arith.addf %484, %488 : vector<8x64xf32>
    %490 = vector.broadcast %18 : vector<1x64xf32> to vector<8x64xf32>
    %491 = arith.addf %489, %490 : vector<8x64xf32>
    %cst_79 = arith.constant 0.000000e+00 : f32
    %492 = vector.broadcast %cst_79 : f32 to vector<8x64xf32>
    %493 = arith.subf %492, %491 : vector<8x64xf32>
    %494 = math.exp %493 : vector<8x64xf32>
    %cst_80 = arith.constant 1.000000e+00 : f32
    %495 = vector.broadcast %cst_80 : f32 to vector<8x64xf32>
    %496 = arith.addf %495, %494 : vector<8x64xf32>
    %cst_81 = arith.constant 1.000000e+00 : f32
    %497 = vector.broadcast %cst_81 : f32 to vector<8x64xf32>
    %498 = arith.divf %497, %496 : vector<8x64xf32>
    %499 = arith.mulf %491, %498 : vector<8x64xf32>
    %500 = tpu.concatenate %469, %499 in 0 : vector<8x64xf32>, vector<8x64xf32> -> vector<16x64xf32>
    %501 = arith.truncf %500 : vector<16x64xf32> to vector<16x64xbf16>
    %cst_82 = arith.constant dense<0.000000e+00> : vector<16x64xf32>
    %502 = tpu.matmul %501, %22, %cst_82 {dimension_numbers = #tpu.dot_dimension_numbers<[1], [0], [0], [1], [0, 0, 1, 1], [], []>} : vector<16x64xbf16>, vector<64x64xbf16>, vector<16x64xf32> -> vector<16x64xf32>
    %503 = vector.broadcast %19 : vector<1x64xf32> to vector<16x64xf32>
    %504 = arith.addf %502, %503 : vector<16x64xf32>
    %cst_83 = arith.constant 2.000000e+01 : f32
    %505 = vector.broadcast %cst_83 : f32 to vector<16x64xf32>
    %506 = arith.minimumf %504, %505 : vector<16x64xf32>
    %cst_84 = arith.constant 2.000000e+01 : f32
    %507 = vector.broadcast %cst_84 : f32 to vector<16x64xf32>
    %508 = arith.cmpf ogt, %504, %507 : vector<16x64xf32>
    %509 = math.exp %506 : vector<16x64xf32>
    %cst_85 = arith.constant 1.000000e+00 : f32
    %510 = vector.broadcast %cst_85 : f32 to vector<16x64xf32>
    %511 = arith.addf %510, %509 : vector<16x64xf32>
    %512 = math.log %511 : vector<16x64xf32>
    %513 = arith.select %508, %504, %512 : vector<16x64xi1>, vector<16x64xf32>
    %514 = arith.mulf %513, %500 : vector<16x64xf32>
    %cst_86 = arith.constant dense<0.000000e+00> : vector<16x32xf32>
    %515 = tpu.matmul %501, %10, %cst_86 {dimension_numbers = #tpu.dot_dimension_numbers<[1], [0], [0], [1], [0, 0, 1, 1], [], []>} : vector<16x64xbf16>, vector<64x32xbf16>, vector<16x32xf32> -> vector<16x32xf32>
    %516 = vector.extract_strided_slice %515 {offsets = [0, 0], sizes = [1, 16], strides = [1, 1]} : vector<16x32xf32> to vector<1x16xf32>
    %517 = vector.shape_cast %516 : vector<1x16xf32> to vector<16x1xf32>
    %518 = vector.extract_strided_slice %515 {offsets = [1, 0], sizes = [1, 16], strides = [1, 1]} : vector<16x32xf32> to vector<1x16xf32>
    %519 = vector.shape_cast %518 : vector<1x16xf32> to vector<16x1xf32>
    %520 = vector.extract_strided_slice %515 {offsets = [2, 0], sizes = [1, 16], strides = [1, 1]} : vector<16x32xf32> to vector<1x16xf32>
    %521 = vector.shape_cast %520 : vector<1x16xf32> to vector<16x1xf32>
    %522 = vector.extract_strided_slice %515 {offsets = [3, 0], sizes = [1, 16], strides = [1, 1]} : vector<16x32xf32> to vector<1x16xf32>
    %523 = vector.shape_cast %522 : vector<1x16xf32> to vector<16x1xf32>
    %524 = vector.extract_strided_slice %515 {offsets = [4, 0], sizes = [1, 16], strides = [1, 1]} : vector<16x32xf32> to vector<1x16xf32>
    %525 = vector.shape_cast %524 : vector<1x16xf32> to vector<16x1xf32>
    %526 = vector.extract_strided_slice %515 {offsets = [5, 0], sizes = [1, 16], strides = [1, 1]} : vector<16x32xf32> to vector<1x16xf32>
    %527 = vector.shape_cast %526 : vector<1x16xf32> to vector<16x1xf32>
    %528 = vector.extract_strided_slice %515 {offsets = [6, 0], sizes = [1, 16], strides = [1, 1]} : vector<16x32xf32> to vector<1x16xf32>
    %529 = vector.shape_cast %528 : vector<1x16xf32> to vector<16x1xf32>
    %530 = vector.extract_strided_slice %515 {offsets = [7, 0], sizes = [1, 16], strides = [1, 1]} : vector<16x32xf32> to vector<1x16xf32>
    %531 = vector.shape_cast %530 : vector<1x16xf32> to vector<16x1xf32>
    %532 = vector.extract_strided_slice %515 {offsets = [0, 16], sizes = [1, 16], strides = [1, 1]} : vector<16x32xf32> to vector<1x16xf32>
    %533 = vector.shape_cast %532 : vector<1x16xf32> to vector<16x1xf32>
    %534 = vector.extract_strided_slice %515 {offsets = [1, 16], sizes = [1, 16], strides = [1, 1]} : vector<16x32xf32> to vector<1x16xf32>
    %535 = vector.shape_cast %534 : vector<1x16xf32> to vector<16x1xf32>
    %536 = vector.extract_strided_slice %515 {offsets = [2, 16], sizes = [1, 16], strides = [1, 1]} : vector<16x32xf32> to vector<1x16xf32>
    %537 = vector.shape_cast %536 : vector<1x16xf32> to vector<16x1xf32>
    %538 = vector.extract_strided_slice %515 {offsets = [3, 16], sizes = [1, 16], strides = [1, 1]} : vector<16x32xf32> to vector<1x16xf32>
    %539 = vector.shape_cast %538 : vector<1x16xf32> to vector<16x1xf32>
    %540 = vector.extract_strided_slice %515 {offsets = [4, 16], sizes = [1, 16], strides = [1, 1]} : vector<16x32xf32> to vector<1x16xf32>
    %541 = vector.shape_cast %540 : vector<1x16xf32> to vector<16x1xf32>
    %542 = vector.extract_strided_slice %515 {offsets = [5, 16], sizes = [1, 16], strides = [1, 1]} : vector<16x32xf32> to vector<1x16xf32>
    %543 = vector.shape_cast %542 : vector<1x16xf32> to vector<16x1xf32>
    %544 = vector.extract_strided_slice %515 {offsets = [6, 16], sizes = [1, 16], strides = [1, 1]} : vector<16x32xf32> to vector<1x16xf32>
    %545 = vector.shape_cast %544 : vector<1x16xf32> to vector<16x1xf32>
    %546 = vector.extract_strided_slice %515 {offsets = [7, 16], sizes = [1, 16], strides = [1, 1]} : vector<16x32xf32> to vector<1x16xf32>
    %547 = vector.shape_cast %546 : vector<1x16xf32> to vector<16x1xf32>
    %548 = vector.extract_strided_slice %513 {offsets = [0, 0], sizes = [1, 64], strides = [1, 1]} : vector<16x64xf32> to vector<1x64xf32>
    %549 = vector.broadcast %548 : vector<1x64xf32> to vector<16x64xf32>
    %550 = arith.mulf %549, %12 : vector<16x64xf32>
    %551 = math.exp %550 : vector<16x64xf32>
    %552 = arith.mulf %551, %249 : vector<16x64xf32>
    %553 = vector.extract_strided_slice %514 {offsets = [0, 0], sizes = [1, 64], strides = [1, 1]} : vector<16x64xf32> to vector<1x64xf32>
    %554 = vector.broadcast %517 : vector<16x1xf32> to vector<16x64xf32>
    %555 = vector.broadcast %553 : vector<1x64xf32> to vector<16x64xf32>
    %556 = arith.mulf %554, %555 : vector<16x64xf32>
    %557 = arith.addf %552, %556 : vector<16x64xf32>
    %558 = vector.broadcast %533 : vector<16x1xf32> to vector<16x64xf32>
    %559 = arith.mulf %558, %557 : vector<16x64xf32>
    %cst_87 = arith.constant dense<0.000000e+00> : vector<64xf32>
    %560 = vector.multi_reduction <add>, %559, %cst_87 [0] : vector<16x64xf32> to vector<64xf32>
    %561 = vector.shape_cast %560 : vector<64xf32> to vector<1x64xf32>
    %562 = vector.extract_strided_slice %513 {offsets = [1, 0], sizes = [1, 64], strides = [1, 1]} : vector<16x64xf32> to vector<1x64xf32>
    %563 = vector.broadcast %562 : vector<1x64xf32> to vector<16x64xf32>
    %564 = arith.mulf %563, %12 : vector<16x64xf32>
    %565 = math.exp %564 : vector<16x64xf32>
    %566 = arith.mulf %565, %557 : vector<16x64xf32>
    %567 = vector.extract_strided_slice %514 {offsets = [1, 0], sizes = [1, 64], strides = [1, 1]} : vector<16x64xf32> to vector<1x64xf32>
    %568 = vector.broadcast %519 : vector<16x1xf32> to vector<16x64xf32>
    %569 = vector.broadcast %567 : vector<1x64xf32> to vector<16x64xf32>
    %570 = arith.mulf %568, %569 : vector<16x64xf32>
    %571 = arith.addf %566, %570 : vector<16x64xf32>
    %572 = vector.broadcast %535 : vector<16x1xf32> to vector<16x64xf32>
    %573 = arith.mulf %572, %571 : vector<16x64xf32>
    %cst_88 = arith.constant dense<0.000000e+00> : vector<64xf32>
    %574 = vector.multi_reduction <add>, %573, %cst_88 [0] : vector<16x64xf32> to vector<64xf32>
    %575 = vector.shape_cast %574 : vector<64xf32> to vector<1x64xf32>
    %576 = vector.extract_strided_slice %513 {offsets = [2, 0], sizes = [1, 64], strides = [1, 1]} : vector<16x64xf32> to vector<1x64xf32>
    %577 = vector.broadcast %576 : vector<1x64xf32> to vector<16x64xf32>
    %578 = arith.mulf %577, %12 : vector<16x64xf32>
    %579 = math.exp %578 : vector<16x64xf32>
    %580 = arith.mulf %579, %571 : vector<16x64xf32>
    %581 = vector.extract_strided_slice %514 {offsets = [2, 0], sizes = [1, 64], strides = [1, 1]} : vector<16x64xf32> to vector<1x64xf32>
    %582 = vector.broadcast %521 : vector<16x1xf32> to vector<16x64xf32>
    %583 = vector.broadcast %581 : vector<1x64xf32> to vector<16x64xf32>
    %584 = arith.mulf %582, %583 : vector<16x64xf32>
    %585 = arith.addf %580, %584 : vector<16x64xf32>
    %586 = vector.broadcast %537 : vector<16x1xf32> to vector<16x64xf32>
    %587 = arith.mulf %586, %585 : vector<16x64xf32>
    %cst_89 = arith.constant dense<0.000000e+00> : vector<64xf32>
    %588 = vector.multi_reduction <add>, %587, %cst_89 [0] : vector<16x64xf32> to vector<64xf32>
    %589 = vector.shape_cast %588 : vector<64xf32> to vector<1x64xf32>
    %590 = vector.extract_strided_slice %513 {offsets = [3, 0], sizes = [1, 64], strides = [1, 1]} : vector<16x64xf32> to vector<1x64xf32>
    %591 = vector.broadcast %590 : vector<1x64xf32> to vector<16x64xf32>
    %592 = arith.mulf %591, %12 : vector<16x64xf32>
    %593 = math.exp %592 : vector<16x64xf32>
    %594 = arith.mulf %593, %585 : vector<16x64xf32>
    %595 = vector.extract_strided_slice %514 {offsets = [3, 0], sizes = [1, 64], strides = [1, 1]} : vector<16x64xf32> to vector<1x64xf32>
    %596 = vector.broadcast %523 : vector<16x1xf32> to vector<16x64xf32>
    %597 = vector.broadcast %595 : vector<1x64xf32> to vector<16x64xf32>
    %598 = arith.mulf %596, %597 : vector<16x64xf32>
    %599 = arith.addf %594, %598 : vector<16x64xf32>
    %600 = vector.broadcast %539 : vector<16x1xf32> to vector<16x64xf32>
    %601 = arith.mulf %600, %599 : vector<16x64xf32>
    %cst_90 = arith.constant dense<0.000000e+00> : vector<64xf32>
    %602 = vector.multi_reduction <add>, %601, %cst_90 [0] : vector<16x64xf32> to vector<64xf32>
    %603 = vector.shape_cast %602 : vector<64xf32> to vector<1x64xf32>
    %604 = vector.extract_strided_slice %513 {offsets = [4, 0], sizes = [1, 64], strides = [1, 1]} : vector<16x64xf32> to vector<1x64xf32>
    %605 = vector.broadcast %604 : vector<1x64xf32> to vector<16x64xf32>
    %606 = arith.mulf %605, %12 : vector<16x64xf32>
    %607 = math.exp %606 : vector<16x64xf32>
    %608 = arith.mulf %607, %599 : vector<16x64xf32>
    %609 = vector.extract_strided_slice %514 {offsets = [4, 0], sizes = [1, 64], strides = [1, 1]} : vector<16x64xf32> to vector<1x64xf32>
    %610 = vector.broadcast %525 : vector<16x1xf32> to vector<16x64xf32>
    %611 = vector.broadcast %609 : vector<1x64xf32> to vector<16x64xf32>
    %612 = arith.mulf %610, %611 : vector<16x64xf32>
    %613 = arith.addf %608, %612 : vector<16x64xf32>
    %614 = vector.broadcast %541 : vector<16x1xf32> to vector<16x64xf32>
    %615 = arith.mulf %614, %613 : vector<16x64xf32>
    %cst_91 = arith.constant dense<0.000000e+00> : vector<64xf32>
    %616 = vector.multi_reduction <add>, %615, %cst_91 [0] : vector<16x64xf32> to vector<64xf32>
    %617 = vector.shape_cast %616 : vector<64xf32> to vector<1x64xf32>
    %618 = vector.extract_strided_slice %513 {offsets = [5, 0], sizes = [1, 64], strides = [1, 1]} : vector<16x64xf32> to vector<1x64xf32>
    %619 = vector.broadcast %618 : vector<1x64xf32> to vector<16x64xf32>
    %620 = arith.mulf %619, %12 : vector<16x64xf32>
    %621 = math.exp %620 : vector<16x64xf32>
    %622 = arith.mulf %621, %613 : vector<16x64xf32>
    %623 = vector.extract_strided_slice %514 {offsets = [5, 0], sizes = [1, 64], strides = [1, 1]} : vector<16x64xf32> to vector<1x64xf32>
    %624 = vector.broadcast %527 : vector<16x1xf32> to vector<16x64xf32>
    %625 = vector.broadcast %623 : vector<1x64xf32> to vector<16x64xf32>
    %626 = arith.mulf %624, %625 : vector<16x64xf32>
    %627 = arith.addf %622, %626 : vector<16x64xf32>
    %628 = vector.broadcast %543 : vector<16x1xf32> to vector<16x64xf32>
    %629 = arith.mulf %628, %627 : vector<16x64xf32>
    %cst_92 = arith.constant dense<0.000000e+00> : vector<64xf32>
    %630 = vector.multi_reduction <add>, %629, %cst_92 [0] : vector<16x64xf32> to vector<64xf32>
    %631 = vector.shape_cast %630 : vector<64xf32> to vector<1x64xf32>
    %632 = vector.extract_strided_slice %513 {offsets = [6, 0], sizes = [1, 64], strides = [1, 1]} : vector<16x64xf32> to vector<1x64xf32>
    %633 = vector.broadcast %632 : vector<1x64xf32> to vector<16x64xf32>
    %634 = arith.mulf %633, %12 : vector<16x64xf32>
    %635 = math.exp %634 : vector<16x64xf32>
    %636 = arith.mulf %635, %627 : vector<16x64xf32>
    %637 = vector.extract_strided_slice %514 {offsets = [6, 0], sizes = [1, 64], strides = [1, 1]} : vector<16x64xf32> to vector<1x64xf32>
    %638 = vector.broadcast %529 : vector<16x1xf32> to vector<16x64xf32>
    %639 = vector.broadcast %637 : vector<1x64xf32> to vector<16x64xf32>
    %640 = arith.mulf %638, %639 : vector<16x64xf32>
    %641 = arith.addf %636, %640 : vector<16x64xf32>
    %642 = vector.broadcast %545 : vector<16x1xf32> to vector<16x64xf32>
    %643 = arith.mulf %642, %641 : vector<16x64xf32>
    %cst_93 = arith.constant dense<0.000000e+00> : vector<64xf32>
    %644 = vector.multi_reduction <add>, %643, %cst_93 [0] : vector<16x64xf32> to vector<64xf32>
    %645 = vector.shape_cast %644 : vector<64xf32> to vector<1x64xf32>
    %646 = vector.extract_strided_slice %513 {offsets = [7, 0], sizes = [1, 64], strides = [1, 1]} : vector<16x64xf32> to vector<1x64xf32>
    %647 = vector.broadcast %646 : vector<1x64xf32> to vector<16x64xf32>
    %648 = arith.mulf %647, %12 : vector<16x64xf32>
    %649 = math.exp %648 : vector<16x64xf32>
    %650 = arith.mulf %649, %641 : vector<16x64xf32>
    %651 = vector.extract_strided_slice %514 {offsets = [7, 0], sizes = [1, 64], strides = [1, 1]} : vector<16x64xf32> to vector<1x64xf32>
    %652 = vector.broadcast %531 : vector<16x1xf32> to vector<16x64xf32>
    %653 = vector.broadcast %651 : vector<1x64xf32> to vector<16x64xf32>
    %654 = arith.mulf %652, %653 : vector<16x64xf32>
    %655 = arith.addf %650, %654 : vector<16x64xf32>
    %656 = vector.broadcast %547 : vector<16x1xf32> to vector<16x64xf32>
    %657 = arith.mulf %656, %655 : vector<16x64xf32>
    %cst_94 = arith.constant dense<0.000000e+00> : vector<64xf32>
    %658 = vector.multi_reduction <add>, %657, %cst_94 [0] : vector<16x64xf32> to vector<64xf32>
    %659 = vector.shape_cast %658 : vector<64xf32> to vector<1x64xf32>
    %660 = tpu.concatenate %561, %575, %589, %603, %617, %631, %645, %659 in 0 : vector<1x64xf32>, vector<1x64xf32>, vector<1x64xf32>, vector<1x64xf32>, vector<1x64xf32>, vector<1x64xf32>, vector<1x64xf32>, vector<1x64xf32> -> vector<8x64xf32>
    %661 = vector.extract_strided_slice %515 {offsets = [8, 0], sizes = [1, 16], strides = [1, 1]} : vector<16x32xf32> to vector<1x16xf32>
    %662 = vector.shape_cast %661 : vector<1x16xf32> to vector<16x1xf32>
    %663 = vector.extract_strided_slice %515 {offsets = [9, 0], sizes = [1, 16], strides = [1, 1]} : vector<16x32xf32> to vector<1x16xf32>
    %664 = vector.shape_cast %663 : vector<1x16xf32> to vector<16x1xf32>
    %665 = vector.extract_strided_slice %515 {offsets = [10, 0], sizes = [1, 16], strides = [1, 1]} : vector<16x32xf32> to vector<1x16xf32>
    %666 = vector.shape_cast %665 : vector<1x16xf32> to vector<16x1xf32>
    %667 = vector.extract_strided_slice %515 {offsets = [11, 0], sizes = [1, 16], strides = [1, 1]} : vector<16x32xf32> to vector<1x16xf32>
    %668 = vector.shape_cast %667 : vector<1x16xf32> to vector<16x1xf32>
    %669 = vector.extract_strided_slice %515 {offsets = [12, 0], sizes = [1, 16], strides = [1, 1]} : vector<16x32xf32> to vector<1x16xf32>
    %670 = vector.shape_cast %669 : vector<1x16xf32> to vector<16x1xf32>
    %671 = vector.extract_strided_slice %515 {offsets = [13, 0], sizes = [1, 16], strides = [1, 1]} : vector<16x32xf32> to vector<1x16xf32>
    %672 = vector.shape_cast %671 : vector<1x16xf32> to vector<16x1xf32>
    %673 = vector.extract_strided_slice %515 {offsets = [14, 0], sizes = [1, 16], strides = [1, 1]} : vector<16x32xf32> to vector<1x16xf32>
    %674 = vector.shape_cast %673 : vector<1x16xf32> to vector<16x1xf32>
    %675 = vector.extract_strided_slice %515 {offsets = [15, 0], sizes = [1, 16], strides = [1, 1]} : vector<16x32xf32> to vector<1x16xf32>
    %676 = vector.shape_cast %675 : vector<1x16xf32> to vector<16x1xf32>
    %677 = vector.extract_strided_slice %515 {offsets = [8, 16], sizes = [1, 16], strides = [1, 1]} : vector<16x32xf32> to vector<1x16xf32>
    %678 = vector.shape_cast %677 : vector<1x16xf32> to vector<16x1xf32>
    %679 = vector.extract_strided_slice %515 {offsets = [9, 16], sizes = [1, 16], strides = [1, 1]} : vector<16x32xf32> to vector<1x16xf32>
    %680 = vector.shape_cast %679 : vector<1x16xf32> to vector<16x1xf32>
    %681 = vector.extract_strided_slice %515 {offsets = [10, 16], sizes = [1, 16], strides = [1, 1]} : vector<16x32xf32> to vector<1x16xf32>
    %682 = vector.shape_cast %681 : vector<1x16xf32> to vector<16x1xf32>
    %683 = vector.extract_strided_slice %515 {offsets = [11, 16], sizes = [1, 16], strides = [1, 1]} : vector<16x32xf32> to vector<1x16xf32>
    %684 = vector.shape_cast %683 : vector<1x16xf32> to vector<16x1xf32>
    %685 = vector.extract_strided_slice %515 {offsets = [12, 16], sizes = [1, 16], strides = [1, 1]} : vector<16x32xf32> to vector<1x16xf32>
    %686 = vector.shape_cast %685 : vector<1x16xf32> to vector<16x1xf32>
    %687 = vector.extract_strided_slice %515 {offsets = [13, 16], sizes = [1, 16], strides = [1, 1]} : vector<16x32xf32> to vector<1x16xf32>
    %688 = vector.shape_cast %687 : vector<1x16xf32> to vector<16x1xf32>
    %689 = vector.extract_strided_slice %515 {offsets = [14, 16], sizes = [1, 16], strides = [1, 1]} : vector<16x32xf32> to vector<1x16xf32>
    %690 = vector.shape_cast %689 : vector<1x16xf32> to vector<16x1xf32>
    %691 = vector.extract_strided_slice %515 {offsets = [15, 16], sizes = [1, 16], strides = [1, 1]} : vector<16x32xf32> to vector<1x16xf32>
    %692 = vector.shape_cast %691 : vector<1x16xf32> to vector<16x1xf32>
    %693 = vector.extract_strided_slice %513 {offsets = [8, 0], sizes = [1, 64], strides = [1, 1]} : vector<16x64xf32> to vector<1x64xf32>
    %694 = vector.broadcast %693 : vector<1x64xf32> to vector<16x64xf32>
    %695 = arith.mulf %694, %12 : vector<16x64xf32>
    %696 = math.exp %695 : vector<16x64xf32>
    %697 = arith.mulf %696, %394 : vector<16x64xf32>
    %698 = vector.extract_strided_slice %514 {offsets = [8, 0], sizes = [1, 64], strides = [1, 1]} : vector<16x64xf32> to vector<1x64xf32>
    %699 = vector.broadcast %662 : vector<16x1xf32> to vector<16x64xf32>
    %700 = vector.broadcast %698 : vector<1x64xf32> to vector<16x64xf32>
    %701 = arith.mulf %699, %700 : vector<16x64xf32>
    %702 = arith.addf %697, %701 : vector<16x64xf32>
    %703 = vector.broadcast %678 : vector<16x1xf32> to vector<16x64xf32>
    %704 = arith.mulf %703, %702 : vector<16x64xf32>
    %cst_95 = arith.constant dense<0.000000e+00> : vector<64xf32>
    %705 = vector.multi_reduction <add>, %704, %cst_95 [0] : vector<16x64xf32> to vector<64xf32>
    %706 = vector.shape_cast %705 : vector<64xf32> to vector<1x64xf32>
    %707 = vector.extract_strided_slice %513 {offsets = [9, 0], sizes = [1, 64], strides = [1, 1]} : vector<16x64xf32> to vector<1x64xf32>
    %708 = vector.broadcast %707 : vector<1x64xf32> to vector<16x64xf32>
    %709 = arith.mulf %708, %12 : vector<16x64xf32>
    %710 = math.exp %709 : vector<16x64xf32>
    %711 = arith.mulf %710, %702 : vector<16x64xf32>
    %712 = vector.extract_strided_slice %514 {offsets = [9, 0], sizes = [1, 64], strides = [1, 1]} : vector<16x64xf32> to vector<1x64xf32>
    %713 = vector.broadcast %664 : vector<16x1xf32> to vector<16x64xf32>
    %714 = vector.broadcast %712 : vector<1x64xf32> to vector<16x64xf32>
    %715 = arith.mulf %713, %714 : vector<16x64xf32>
    %716 = arith.addf %711, %715 : vector<16x64xf32>
    %717 = vector.broadcast %680 : vector<16x1xf32> to vector<16x64xf32>
    %718 = arith.mulf %717, %716 : vector<16x64xf32>
    %cst_96 = arith.constant dense<0.000000e+00> : vector<64xf32>
    %719 = vector.multi_reduction <add>, %718, %cst_96 [0] : vector<16x64xf32> to vector<64xf32>
    %720 = vector.shape_cast %719 : vector<64xf32> to vector<1x64xf32>
    %721 = vector.extract_strided_slice %513 {offsets = [10, 0], sizes = [1, 64], strides = [1, 1]} : vector<16x64xf32> to vector<1x64xf32>
    %722 = vector.broadcast %721 : vector<1x64xf32> to vector<16x64xf32>
    %723 = arith.mulf %722, %12 : vector<16x64xf32>
    %724 = math.exp %723 : vector<16x64xf32>
    %725 = arith.mulf %724, %716 : vector<16x64xf32>
    %726 = vector.extract_strided_slice %514 {offsets = [10, 0], sizes = [1, 64], strides = [1, 1]} : vector<16x64xf32> to vector<1x64xf32>
    %727 = vector.broadcast %666 : vector<16x1xf32> to vector<16x64xf32>
    %728 = vector.broadcast %726 : vector<1x64xf32> to vector<16x64xf32>
    %729 = arith.mulf %727, %728 : vector<16x64xf32>
    %730 = arith.addf %725, %729 : vector<16x64xf32>
    %731 = vector.broadcast %682 : vector<16x1xf32> to vector<16x64xf32>
    %732 = arith.mulf %731, %730 : vector<16x64xf32>
    %cst_97 = arith.constant dense<0.000000e+00> : vector<64xf32>
    %733 = vector.multi_reduction <add>, %732, %cst_97 [0] : vector<16x64xf32> to vector<64xf32>
    %734 = vector.shape_cast %733 : vector<64xf32> to vector<1x64xf32>
    %735 = vector.extract_strided_slice %513 {offsets = [11, 0], sizes = [1, 64], strides = [1, 1]} : vector<16x64xf32> to vector<1x64xf32>
    %736 = vector.broadcast %735 : vector<1x64xf32> to vector<16x64xf32>
    %737 = arith.mulf %736, %12 : vector<16x64xf32>
    %738 = math.exp %737 : vector<16x64xf32>
    %739 = arith.mulf %738, %730 : vector<16x64xf32>
    %740 = vector.extract_strided_slice %514 {offsets = [11, 0], sizes = [1, 64], strides = [1, 1]} : vector<16x64xf32> to vector<1x64xf32>
    %741 = vector.broadcast %668 : vector<16x1xf32> to vector<16x64xf32>
    %742 = vector.broadcast %740 : vector<1x64xf32> to vector<16x64xf32>
    %743 = arith.mulf %741, %742 : vector<16x64xf32>
    %744 = arith.addf %739, %743 : vector<16x64xf32>
    %745 = vector.broadcast %684 : vector<16x1xf32> to vector<16x64xf32>
    %746 = arith.mulf %745, %744 : vector<16x64xf32>
    %cst_98 = arith.constant dense<0.000000e+00> : vector<64xf32>
    %747 = vector.multi_reduction <add>, %746, %cst_98 [0] : vector<16x64xf32> to vector<64xf32>
    %748 = vector.shape_cast %747 : vector<64xf32> to vector<1x64xf32>
    %749 = vector.extract_strided_slice %513 {offsets = [12, 0], sizes = [1, 64], strides = [1, 1]} : vector<16x64xf32> to vector<1x64xf32>
    %750 = vector.broadcast %749 : vector<1x64xf32> to vector<16x64xf32>
    %751 = arith.mulf %750, %12 : vector<16x64xf32>
    %752 = math.exp %751 : vector<16x64xf32>
    %753 = arith.mulf %752, %744 : vector<16x64xf32>
    %754 = vector.extract_strided_slice %514 {offsets = [12, 0], sizes = [1, 64], strides = [1, 1]} : vector<16x64xf32> to vector<1x64xf32>
    %755 = vector.broadcast %670 : vector<16x1xf32> to vector<16x64xf32>
    %756 = vector.broadcast %754 : vector<1x64xf32> to vector<16x64xf32>
    %757 = arith.mulf %755, %756 : vector<16x64xf32>
    %758 = arith.addf %753, %757 : vector<16x64xf32>
    %759 = vector.broadcast %686 : vector<16x1xf32> to vector<16x64xf32>
    %760 = arith.mulf %759, %758 : vector<16x64xf32>
    %cst_99 = arith.constant dense<0.000000e+00> : vector<64xf32>
    %761 = vector.multi_reduction <add>, %760, %cst_99 [0] : vector<16x64xf32> to vector<64xf32>
    %762 = vector.shape_cast %761 : vector<64xf32> to vector<1x64xf32>
    %763 = vector.extract_strided_slice %513 {offsets = [13, 0], sizes = [1, 64], strides = [1, 1]} : vector<16x64xf32> to vector<1x64xf32>
    %764 = vector.broadcast %763 : vector<1x64xf32> to vector<16x64xf32>
    %765 = arith.mulf %764, %12 : vector<16x64xf32>
    %766 = math.exp %765 : vector<16x64xf32>
    %767 = arith.mulf %766, %758 : vector<16x64xf32>
    %768 = vector.extract_strided_slice %514 {offsets = [13, 0], sizes = [1, 64], strides = [1, 1]} : vector<16x64xf32> to vector<1x64xf32>
    %769 = vector.broadcast %672 : vector<16x1xf32> to vector<16x64xf32>
    %770 = vector.broadcast %768 : vector<1x64xf32> to vector<16x64xf32>
    %771 = arith.mulf %769, %770 : vector<16x64xf32>
    %772 = arith.addf %767, %771 : vector<16x64xf32>
    %773 = vector.broadcast %688 : vector<16x1xf32> to vector<16x64xf32>
    %774 = arith.mulf %773, %772 : vector<16x64xf32>
    %cst_100 = arith.constant dense<0.000000e+00> : vector<64xf32>
    %775 = vector.multi_reduction <add>, %774, %cst_100 [0] : vector<16x64xf32> to vector<64xf32>
    %776 = vector.shape_cast %775 : vector<64xf32> to vector<1x64xf32>
    %777 = vector.extract_strided_slice %513 {offsets = [14, 0], sizes = [1, 64], strides = [1, 1]} : vector<16x64xf32> to vector<1x64xf32>
    %778 = vector.broadcast %777 : vector<1x64xf32> to vector<16x64xf32>
    %779 = arith.mulf %778, %12 : vector<16x64xf32>
    %780 = math.exp %779 : vector<16x64xf32>
    %781 = arith.mulf %780, %772 : vector<16x64xf32>
    %782 = vector.extract_strided_slice %514 {offsets = [14, 0], sizes = [1, 64], strides = [1, 1]} : vector<16x64xf32> to vector<1x64xf32>
    %783 = vector.broadcast %674 : vector<16x1xf32> to vector<16x64xf32>
    %784 = vector.broadcast %782 : vector<1x64xf32> to vector<16x64xf32>
    %785 = arith.mulf %783, %784 : vector<16x64xf32>
    %786 = arith.addf %781, %785 : vector<16x64xf32>
    %787 = vector.broadcast %690 : vector<16x1xf32> to vector<16x64xf32>
    %788 = arith.mulf %787, %786 : vector<16x64xf32>
    %cst_101 = arith.constant dense<0.000000e+00> : vector<64xf32>
    %789 = vector.multi_reduction <add>, %788, %cst_101 [0] : vector<16x64xf32> to vector<64xf32>
    %790 = vector.shape_cast %789 : vector<64xf32> to vector<1x64xf32>
    %791 = vector.extract_strided_slice %513 {offsets = [15, 0], sizes = [1, 64], strides = [1, 1]} : vector<16x64xf32> to vector<1x64xf32>
    %792 = vector.broadcast %791 : vector<1x64xf32> to vector<16x64xf32>
    %793 = arith.mulf %792, %12 : vector<16x64xf32>
    %794 = math.exp %793 : vector<16x64xf32>
    %795 = arith.mulf %794, %786 : vector<16x64xf32>
    %796 = vector.extract_strided_slice %514 {offsets = [15, 0], sizes = [1, 64], strides = [1, 1]} : vector<16x64xf32> to vector<1x64xf32>
    %797 = vector.broadcast %676 : vector<16x1xf32> to vector<16x64xf32>
    %798 = vector.broadcast %796 : vector<1x64xf32> to vector<16x64xf32>
    %799 = arith.mulf %797, %798 : vector<16x64xf32>
    %800 = arith.addf %795, %799 : vector<16x64xf32>
    %801 = vector.broadcast %692 : vector<16x1xf32> to vector<16x64xf32>
    %802 = arith.mulf %801, %800 : vector<16x64xf32>
    %cst_102 = arith.constant dense<0.000000e+00> : vector<64xf32>
    %803 = vector.multi_reduction <add>, %802, %cst_102 [0] : vector<16x64xf32> to vector<64xf32>
    %804 = vector.shape_cast %803 : vector<64xf32> to vector<1x64xf32>
    %805 = tpu.concatenate %706, %720, %734, %748, %762, %776, %790, %804 in 0 : vector<1x64xf32>, vector<1x64xf32>, vector<1x64xf32>, vector<1x64xf32>, vector<1x64xf32>, vector<1x64xf32>, vector<1x64xf32>, vector<1x64xf32> -> vector<8x64xf32>
    %806 = tpu.concatenate %660, %805 in 0 : vector<8x64xf32>, vector<8x64xf32> -> vector<16x64xf32>
    %cst_103 = arith.constant dense<0.000000e+00> : vector<16x64xf32>
    %807 = tpu.matmul %438, %6, %cst_103 {dimension_numbers = #tpu.dot_dimension_numbers<[1], [0], [0], [1], [0, 0, 1, 1], [], []>} : vector<16x32xbf16>, vector<32x64xbf16>, vector<16x64xf32> -> vector<16x64xf32>
    %808 = vector.broadcast %20 : vector<1x64xf32> to vector<16x64xf32>
    %809 = arith.mulf %500, %808 : vector<16x64xf32>
    %810 = arith.addf %806, %809 : vector<16x64xf32>
    %cst_104 = arith.constant 0.000000e+00 : f32
    %811 = vector.broadcast %cst_104 : f32 to vector<16x64xf32>
    %812 = arith.subf %811, %807 : vector<16x64xf32>
    %813 = math.exp %812 : vector<16x64xf32>
    %cst_105 = arith.constant 1.000000e+00 : f32
    %814 = vector.broadcast %cst_105 : f32 to vector<16x64xf32>
    %815 = arith.addf %814, %813 : vector<16x64xf32>
    %cst_106 = arith.constant 1.000000e+00 : f32
    %816 = vector.broadcast %cst_106 : f32 to vector<16x64xf32>
    %817 = arith.divf %816, %815 : vector<16x64xf32>
    %818 = arith.mulf %807, %817 : vector<16x64xf32>
    %819 = arith.mulf %810, %818 : vector<16x64xf32>
    %820 = arith.truncf %819 : vector<16x64xf32> to vector<16x64xbf16>
    %cst_107 = arith.constant dense<0.000000e+00> : vector<16x32xf32>
    %821 = tpu.matmul %820, %16, %cst_107 {dimension_numbers = #tpu.dot_dimension_numbers<[1], [0], [0], [1], [0, 0, 1, 1], [], []>} : vector<16x64xbf16>, vector<64x32xbf16>, vector<16x32xf32> -> vector<16x32xf32>
    %822 = arith.addf %437, %821 : vector<16x32xf32>
    %823 = arith.mulf %822, %822 : vector<16x32xf32>
    %cst_108 = arith.constant dense<0.000000e+00> : vector<16xf32>
    %824 = vector.multi_reduction <add>, %823, %cst_108 [1] : vector<16x32xf32> to vector<16xf32>
    %825 = vector.shape_cast %824 : vector<16xf32> to vector<16x1xf32>
    %cst_109 = arith.constant 3.200000e+01 : f32
    %826 = vector.broadcast %cst_109 : f32 to vector<16x1xf32>
    %827 = arith.divf %825, %826 : vector<16x1xf32>
    %cst_110 = arith.constant 9.99999974E-6 : f32
    %828 = vector.broadcast %cst_110 : f32 to vector<16x1xf32>
    %829 = arith.addf %827, %828 : vector<16x1xf32>
    %830 = math.rsqrt %829 : vector<16x1xf32>
    %831 = vector.broadcast %830 : vector<16x1xf32> to vector<16x32xf32>
    %832 = arith.mulf %822, %831 : vector<16x32xf32>
    %833 = vector.broadcast %17 : vector<1x32xf32> to vector<16x32xf32>
    %834 = arith.mulf %832, %833 : vector<16x32xf32>
    %cst_111 = arith.constant 9.99999997E-7 : f32
    %835 = vector.broadcast %cst_111 : f32 to vector<16x32xf32>
    %836 = arith.addf %834, %835 : vector<16x32xf32>
    %837 = vector.extract_strided_slice %836 {offsets = [0, 0], sizes = [8, 32], strides = [1, 1]} : vector<16x32xf32> to vector<8x32xf32>
    %c8_112 = arith.constant 8 : index
    %c0_113 = arith.constant 0 : index
    %838 = vector.load %arg13[%c8_112, %c0_113] : memref<32x32xf32, #tpu.memory_space<vmem>>, vector<8x32xf32>
    tpu.vector_store %arg13[%c8_112, %c0_113], %837 {strides = array<i32>} : memref<32x32xf32, #tpu.memory_space<vmem>>, vector<8x32xf32>,
    %839 = vector.extract_strided_slice %836 {offsets = [8, 0], sizes = [8, 32], strides = [1, 1]} : vector<16x32xf32> to vector<8x32xf32>
    %c24_114 = arith.constant 24 : index
    %c0_115 = arith.constant 0 : index
    %840 = vector.load %arg13[%c24_114, %c0_115] : memref<32x32xf32, #tpu.memory_space<vmem>>, vector<8x32xf32>
    tpu.vector_store %arg13[%c24_114, %c0_115], %839 {strides = array<i32>} : memref<32x32xf32, #tpu.memory_space<vmem>>, vector<8x32xf32>,
    %c1_i32 = arith.constant 1 : i32
    %841 = arith.cmpi eq, %arg1, %c1_i32 : i32
    %842 = arith.extui %841 : i1 to i32
    %c0_i32_116 = arith.constant 0 : i32
    %843 = arith.cmpi ne, %842, %c0_i32_116 : i32
    scf.if %843 {
      %c0_117 = arith.constant 0 : index
      %c0_118 = arith.constant 0 : index
      %844 = vector.load %arg13[%c0_117, %c0_118] : memref<32x32xf32, #tpu.memory_space<vmem>>, vector<32x32xf32>
      %845 = vector.shape_cast %844 : vector<32x32xf32> to vector<2x16x32xf32>
      %c0_119 = arith.constant 0 : index
      %c0_120 = arith.constant 0 : index
      %c0_121 = arith.constant 0 : index
      %846 = vector.load %arg12[%c0_119, %c0_120, %c0_121] : memref<2x16x32xf32, #tpu.memory_space<vmem>>, vector<2x16x32xf32>
      tpu.vector_store %arg12[%c0_119, %c0_120, %c0_121], %845 {strides = array<i32>} : memref<2x16x32xf32, #tpu.memory_space<vmem>>, vector<2x16x32xf32>,
    } else {
    }
    return
  }
  func.func @transform_0(%arg0: i32, %arg1: i32) -> (i32, i32, i32) {
    %c0_i32 = arith.constant 0 : i32
    %c0_i32_0 = arith.constant 0 : i32
    %c0_i32_1 = arith.constant 0 : i32
    return %arg0, %c0_i32, %c0_i32_0 : i32, i32, i32
  }
  func.func @transform_1(%arg0: i32, %arg1: i32) -> (i32, i32, i32) {
    %c0_i32 = arith.constant 0 : i32
    %c0_i32_0 = arith.constant 0 : i32
    %c0_i32_1 = arith.constant 0 : i32
    return %arg1, %c0_i32, %c0_i32_0 : i32, i32, i32
  }
  func.func @transform_2(%arg0: i32, %arg1: i32) -> (i32, i32, i32) {
    %c0_i32 = arith.constant 0 : i32
    %c0_i32_0 = arith.constant 0 : i32
    %c0_i32_1 = arith.constant 0 : i32
    return %arg1, %c0_i32, %c0_i32_0 : i32, i32, i32
  }
  func.func @transform_3(%arg0: i32, %arg1: i32) -> (i32, i32, i32) {
    %c0_i32 = arith.constant 0 : i32
    %c0_i32_0 = arith.constant 0 : i32
    %c0_i32_1 = arith.constant 0 : i32
    return %arg1, %c0_i32, %c0_i32_0 : i32, i32, i32
  }
  func.func @transform_4(%arg0: i32, %arg1: i32) -> (i32, i32, i32) {
    %c0_i32 = arith.constant 0 : i32
    %c0_i32_0 = arith.constant 0 : i32
    %c0_i32_1 = arith.constant 0 : i32
    return %arg1, %c0_i32, %c0_i32_0 : i32, i32, i32
  }
  func.func @transform_5(%arg0: i32, %arg1: i32) -> (i32, i32, i32) {
    %c0_i32 = arith.constant 0 : i32
    %c0_i32_0 = arith.constant 0 : i32
    %c0_i32_1 = arith.constant 0 : i32
    return %arg1, %c0_i32, %c0_i32_0 : i32, i32, i32
  }
  func.func @transform_6(%arg0: i32, %arg1: i32) -> (i32, i32, i32) {
    %c0_i32 = arith.constant 0 : i32
    %c0_i32_0 = arith.constant 0 : i32
    %c0_i32_1 = arith.constant 0 : i32
    return %arg1, %c0_i32, %c0_i32_0 : i32, i32, i32
  }
  func.func @transform_7(%arg0: i32, %arg1: i32) -> (i32, i32, i32) {
    %c0_i32 = arith.constant 0 : i32
    %c0_i32_0 = arith.constant 0 : i32
    %c0_i32_1 = arith.constant 0 : i32
    return %arg1, %c0_i32, %c0_i32_0 : i32, i32, i32
  }
  func.func @transform_8(%arg0: i32, %arg1: i32) -> (i32, i32, i32) {
    %c0_i32 = arith.constant 0 : i32
    %c0_i32_0 = arith.constant 0 : i32
    %c0_i32_1 = arith.constant 0 : i32
    return %arg1, %c0_i32, %c0_i32_0 : i32, i32, i32
  }
  func.func @transform_9(%arg0: i32, %arg1: i32) -> (i32, i32) {
    %c0_i32 = arith.constant 0 : i32
    %c0_i32_0 = arith.constant 0 : i32
    %c0_i32_1 = arith.constant 0 : i32
    return %c0_i32, %c0_i32_0 : i32, i32
  }
  func.func @transform_10(%arg0: i32, %arg1: i32) -> (i32, i32, i32) {
    %c0_i32 = arith.constant 0 : i32
    %c0_i32_0 = arith.constant 0 : i32
    %c0_i32_1 = arith.constant 0 : i32
    return %arg0, %c0_i32, %c0_i32_0 : i32, i32, i32
  }
}

</mosaic_0001>

<llo_original>
// kernel: mamba_it_forward.1
$region0: #{mamba_it_forward.1}
  #allocation0 [shape = 'u32[]', space=smem, size = 0x4, offset = 0x4, fixed_abs, tag = 'smem constant byte address 0x4 - core index']
  #allocation1 [shape = 'u32[144,128]{1,0:T(1,128)}', space=vmem, size = 0x12000, scoped, tag = 'internal scratch']
  #allocation2 [shape = 'f32[32,32]{1,0:T(8,128)}', space=vmem, size = 0x4000, scoped, tag = 'scratch operand']
  %s0 = inlined_call_operand.vmem [shape: f32[2,16,32], index: 0, kind: input, shape index: {}]
  %s1 = inlined_call_operand.vmem [shape: bf16[2,32,64], index: 1, kind: input, shape index: {}]
  %s2 = inlined_call_operand.vmem [shape: bf16[2,32,64], index: 2, kind: input, shape index: {}]
  %s3 = inlined_call_operand.vmem [shape: f32[2,4,64], index: 3, kind: input, shape index: {}]
  %s4 = inlined_call_operand.vmem [shape: bf16[2,64,64], index: 4, kind: input, shape index: {}]
  %s5 = inlined_call_operand.vmem [shape: bf16[2,64,32], index: 5, kind: input, shape index: {}]
  %s6 = inlined_call_operand.vmem [shape: f32[2,16,64], index: 6, kind: input, shape index: {}]
  %s7 = inlined_call_operand.vmem [shape: f32[2,3,64], index: 7, kind: input, shape index: {}]
  %s8 = inlined_call_operand.vmem [shape: bf16[2,64,32], index: 8, kind: input, shape index: {}]
  %s9 = inlined_call_operand.vmem [shape: f32[1,32], index: 9, kind: input, shape index: {}]
  %s10 = inlined_call_operand.vmem [shape: f32[2,16,32], index: 10, kind: output, shape index: {}]
  %s11 = sld [smem:[#allocation0]]
  $region81: #{mamba_it_forward.1} parent=0
    _
  %s13 = ssub.s32 1, %s11
  %s14 = scalar_select 0, %s13, %s11
  loop: start=0, step=1, limit=4
  $region2: #{mamba_it_forward.1} parent=0 // loop_pre_header
    _
  $region3: #{mamba_it_forward.1} parent=0 // loop_header
    %s16 = sphi 0, %s20
    %p17 = scmp.ge.s32.totalorder %s16, 4
    %s23 = sphi 0, %s35
    %s24 = sphi 0, %s31
    %s25 = sphi 0, %s23
    %s26 = sphi 0, %s24
    %s27 = sphi 0, %s25
    %s28 = sphi 0, %s26
    %s38 = sphi 0, %s40
    %s41 = sphi 0, %s38
    %s42 = sphi 0, %s41
    %s58 = sphi 0, %s42
    %s64 = sphi 0, %s66
    %s67 = sphi 0, %s64
    %s68 = sphi 0, %s67
    %s84 = sphi 0, %s68
    %s90 = sphi 0, %s92
    %s93 = sphi 0, %s90
    %s94 = sphi 0, %s93
    %s110 = sphi 0, %s94
    %s116 = sphi 0, %s118
    %s119 = sphi 0, %s116
    %s120 = sphi 0, %s119
    %s136 = sphi 0, %s120
    %s142 = sphi 0, %s144
    %s145 = sphi 0, %s142
    %s146 = sphi 0, %s145
    %s162 = sphi 0, %s146
    %s168 = sphi 0, %s170
    %s171 = sphi 0, %s168
    %s172 = sphi 0, %s171
    %s188 = sphi 0, %s172
    %s194 = sphi 0, %s196
    %s197 = sphi 0, %s194
    %s198 = sphi 0, %s197
    %s214 = sphi 0, %s198
    %s220 = sphi 0, %s222
    %s223 = sphi 0, %s220
    %s224 = sphi 0, %s223
    %s240 = sphi 0, %s224
    %s246 = sphi 0, %s248
    %s249 = sphi 0, %s246
    %s250 = sphi 0, %s249
    %s266 = sphi 0, %s250
    %s270 = sphi 0, %s270
    %s272 = sphi 0, %s270
    %s273 = sphi 0, %s272
    %s287 = sphi 0, %s273
    %s293 = sphi 0, %s295
    %s296 = sphi 0, %s293
    %s297 = sphi 0, %s296
    %s313 = sphi 0, %s297
  $region4: #{mamba_it_forward.1} parent=0 // loop_header_branch
    %19 = sbr.rel (%p17) target = $region8
  $region5: #{mamba_it_forward.1} parent=0 // loop_body
    %s21 = ssub.s32 %s16, 1
    %s22 = ssub.s32 %s16, 2
    %s29 = sadd.s32 1, %s24
    %p30 = scmp.ge.s32.totalorder %s29, 2
    %s31 = scalar_select %p30, 0, %s29
    %s32 = sadd.s32 1, %s23
    %s33 = scalar_select %p30, %s32, %s23
    %p34 = scmp.ge.s32.totalorder %s33, 1
    %s35 = scalar_select %p34, 0, %s33
    %s36 = ssub.s32 %s23, %s35
    %p37 = scmp.eq.s32.totalorder %s36, 0
    %s39 = sadd.s32 %s38, 1
    %s40 = scalar_select %p37, %s38, %s39
    %p43 = pneg %p37
    %p44 = scmp.eq.s32.totalorder %s16, 1
    %p45 = por %p43, %p44
    %p46 = scmp.ne.s32.totalorder %s38, %s41
    %p47 = scmp.eq.s32.totalorder %s16, 0
    %p48 = por %p46, %p47
    %p49 = scmp.ne.s32.totalorder %s38, %s41
    %p50 = scmp.eq.s32.totalorder %s21, 1
    %p51 = por %p49, %p50
    %p52 = scmp.ne.s32.totalorder %s41, %s42
    %p53 = scmp.eq.s32.totalorder %s21, 0
    %p54 = por %p52, %p53
    %p55 = scmp.ne.s32.totalorder %s41, %s42
    %p56 = scmp.eq.s32.totalorder %s22, 1
    %p57 = por %p55, %p56
    %p59 = scmp.ne.s32.totalorder %s42, %s58
    %p60 = scmp.eq.s32.totalorder %s22, 0
    %p61 = por %p59, %p60
    %s62 = ssub.s32 %s24, %s31
    %p63 = scmp.eq.s32.totalorder %s62, 0
    %s65 = sadd.s32 %s64, 1
    %s66 = scalar_select %p63, %s64, %s65
    %p69 = pneg %p63
    %p70 = scmp.eq.s32.totalorder %s16, 1
    %p71 = por %p69, %p70
    %p72 = scmp.ne.s32.totalorder %s64, %s67
    %p73 = scmp.eq.s32.totalorder %s16, 0
    %p74 = por %p72, %p73
    %p75 = scmp.ne.s32.totalorder %s64, %s67
    %p76 = scmp.eq.s32.totalorder %s21, 1
    %p77 = por %p75, %p76
    %p78 = scmp.ne.s32.totalorder %s67, %s68
    %p79 = scmp.eq.s32.totalorder %s21, 0
    %p80 = por %p78, %p79
    %p81 = scmp.ne.s32.totalorder %s67, %s68
    %p82 = scmp.eq.s32.totalorder %s22, 1
    %p83 = por %p81, %p82
    %p85 = scmp.ne.s32.totalorder %s68, %s84
    %p86 = scmp.eq.s32.totalorder %s22, 0
    %p87 = por %p85, %p86
    %s88 = ssub.s32 %s24, %s31
    %p89 = scmp.eq.s32.totalorder %s88, 0
    %s91 = sadd.s32 %s90, 1
    %s92 = scalar_select %p89, %s90, %s91
    %p95 = pneg %p89
    %p96 = scmp.eq.s32.totalorder %s16, 1
    %p97 = por %p95, %p96
    %p98 = scmp.ne.s32.totalorder %s90, %s93
    %p99 = scmp.eq.s32.totalorder %s16, 0
    %p100 = por %p98, %p99
    %p101 = scmp.ne.s32.totalorder %s90, %s93
    %p102 = scmp.eq.s32.totalorder %s21, 1
    %p103 = por %p101, %p102
    %p104 = scmp.ne.s32.totalorder %s93, %s94
    %p105 = scmp.eq.s32.totalorder %s21, 0
    %p106 = por %p104, %p105
    %p107 = scmp.ne.s32.totalorder %s93, %s94
    %p108 = scmp.eq.s32.totalorder %s22, 1
    %p109 = por %p107, %p108
    %p111 = scmp.ne.s32.totalorder %s94, %s110
    %p112 = scmp.eq.s32.totalorder %s22, 0
    %p113 = por %p111, %p112
    %s114 = ssub.s32 %s24, %s31
    %p115 = scmp.eq.s32.totalorder %s114, 0
    %s117 = sadd.s32 %s116, 1
    %s118 = scalar_select %p115, %s116, %s117
    %p121 = pneg %p115
    %p122 = scmp.eq.s32.totalorder %s16, 1
    %p123 = por %p121, %p122
    %p124 = scmp.ne.s32.totalorder %s116, %s119
    %p125 = scmp.eq.s32.totalorder %s16, 0
    %p126 = por %p124, %p125
    %p127 = scmp.ne.s32.totalorder %s116, %s119
    %p128 = scmp.eq.s32.totalorder %s21, 1
    %p129 = por %p127, %p128
    %p130 = scmp.ne.s32.totalorder %s119, %s120
    %p131 = scmp.eq.s32.totalorder %s21, 0
    %p132 = por %p130, %p131
    %p133 = scmp.ne.s32.totalorder %s119, %s120
    %p134 = scmp.eq.s32.totalorder %s22, 1
    %p135 = por %p133, %p134
    %p137 = scmp.ne.s32.totalorder %s120, %s136
    %p138 = scmp.eq.s32.totalorder %s22, 0
    %p139 = por %p137, %p138
    %s140 = ssub.s32 %s24, %s31
    %p141 = scmp.eq.s32.totalorder %s140, 0
    %s143 = sadd.s32 %s142, 1
    %s144 = scalar_select %p141, %s142, %s143
    %p147 = pneg %p141
    %p148 = scmp.eq.s32.totalorder %s16, 1
    %p149 = por %p147, %p148
    %p150 = scmp.ne.s32.totalorder %s142, %s145
    %p151 = scmp.eq.s32.totalorder %s16, 0
    %p152 = por %p150, %p151
    %p153 = scmp.ne.s32.totalorder %s142, %s145
    %p154 = scmp.eq.s32.totalorder %s21, 1
    %p155 = por %p153, %p154
    %p156 = scmp.ne.s32.totalorder %s145, %s146
    %p157 = scmp.eq.s32.totalorder %s21, 0
    %p158 = por %p156, %p157
    %p159 = scmp.ne.s32.totalorder %s145, %s146
    %p160 = scmp.eq.s32.totalorder %s22, 1
    %p161 = por %p159, %p160
    %p163 = scmp.ne.s32.totalorder %s146, %s162
    %p164 = scmp.eq.s32.totalorder %s22, 0
    %p165 = por %p163, %p164
    %s166 = ssub.s32 %s24, %s31
    %p167 = scmp.eq.s32.totalorder %s166, 0
    %s169 = sadd.s32 %s168, 1
    %s170 = scalar_select %p167, %s168, %s169
    %p173 = pneg %p167
    %p174 = scmp.eq.s32.totalorder %s16, 1
    %p175 = por %p173, %p174
    %p176 = scmp.ne.s32.totalorder %s168, %s171
    %p177 = scmp.eq.s32.totalorder %s16, 0
    %p178 = por %p176, %p177
    %p179 = scmp.ne.s32.totalorder %s168, %s171
    %p180 = scmp.eq.s32.totalorder %s21, 1
    %p181 = por %p179, %p180
    %p182 = scmp.ne.s32.totalorder %s171, %s172
    %p183 = scmp.eq.s32.totalorder %s21, 0
    %p184 = por %p182, %p183
    %p185 = scmp.ne.s32.totalorder %s171, %s172
    %p186 = scmp.eq.s32.totalorder %s22, 1
    %p187 = por %p185, %p186
    %p189 = scmp.ne.s32.totalorder %s172, %s188
    %p190 = scmp.eq.s32.totalorder %s22, 0
    %p191 = por %p189, %p190
    %s192 = ssub.s32 %s24, %s31
    %p193 = scmp.eq.s32.totalorder %s192, 0
    %s195 = sadd.s32 %s194, 1
    %s196 = scalar_select %p193, %s194, %s195
    %p199 = pneg %p193
    %p200 = scmp.eq.s32.totalorder %s16, 1
    %p201 = por %p199, %p200
    %p202 = scmp.ne.s32.totalorder %s194, %s197
    %p203 = scmp.eq.s32.totalorder %s16, 0
    %p204 = por %p202, %p203
    %p205 = scmp.ne.s32.totalorder %s194, %s197
    %p206 = scmp.eq.s32.totalorder %s21, 1
    %p207 = por %p205, %p206
    %p208 = scmp.ne.s32.totalorder %s197, %s198
    %p209 = scmp.eq.s32.totalorder %s21, 0
    %p210 = por %p208, %p209
    %p211 = scmp.ne.s32.totalorder %s197, %s198
    %p212 = scmp.eq.s32.totalorder %s22, 1
    %p213 = por %p211, %p212
    %p215 = scmp.ne.s32.totalorder %s198, %s214
    %p216 = scmp.eq.s32.totalorder %s22, 0
    %p217 = por %p215, %p216
    %s218 = ssub.s32 %s24, %s31
    %p219 = scmp.eq.s32.totalorder %s218, 0
    %s221 = sadd.s32 %s220, 1
    %s222 = scalar_select %p219, %s220, %s221
    %p225 = pneg %p219
    %p226 = scmp.eq.s32.totalorder %s16, 1
    %p227 = por %p225, %p226
    %p228 = scmp.ne.s32.totalorder %s220, %s223
    %p229 = scmp.eq.s32.totalorder %s16, 0
    %p230 = por %p228, %p229
    %p231 = scmp.ne.s32.totalorder %s220, %s223
    %p232 = scmp.eq.s32.totalorder %s21, 1
    %p233 = por %p231, %p232
    %p234 = scmp.ne.s32.totalorder %s223, %s224
    %p235 = scmp.eq.s32.totalorder %s21, 0
    %p236 = por %p234, %p235
    %p237 = scmp.ne.s32.totalorder %s223, %s224
    %p238 = scmp.eq.s32.totalorder %s22, 1
    %p239 = por %p237, %p238
    %p241 = scmp.ne.s32.totalorder %s224, %s240
    %p242 = scmp.eq.s32.totalorder %s22, 0
    %p243 = por %p241, %p242
    %s244 = ssub.s32 %s24, %s31
    %p245 = scmp.eq.s32.totalorder %s244, 0
    %s247 = sadd.s32 %s246, 1
    %s248 = scalar_select %p245, %s246, %s247
    %p251 = pneg %p245
    %p252 = scmp.eq.s32.totalorder %s16, 1
    %p253 = por %p251, %p252
    %p254 = scmp.ne.s32.totalorder %s246, %s249
    %p255 = scmp.eq.s32.totalorder %s16, 0
    %p256 = por %p254, %p255
    %p257 = scmp.ne.s32.totalorder %s246, %s249
    %p258 = scmp.eq.s32.totalorder %s21, 1
    %p259 = por %p257, %p258
    %p260 = scmp.ne.s32.totalorder %s249, %s250
    %p261 = scmp.eq.s32.totalorder %s21, 0
    %p262 = por %p260, %p261
    %p263 = scmp.ne.s32.totalorder %s249, %s250
    %p264 = scmp.eq.s32.totalorder %s22, 1
    %p265 = por %p263, %p264
    %p267 = scmp.ne.s32.totalorder %s250, %s266
    %p268 = scmp.eq.s32.totalorder %s22, 0
    %p269 = por %p267, %p268
    %s271 = sadd.s32 %s270, 1
    %p274 = scmp.eq.s32.totalorder %s16, 1
    %p275 = scmp.ne.s32.totalorder %s270, %s272
    %p276 = scmp.eq.s32.totalorder %s16, 0
    %p277 = por %p275, %p276
    %p278 = scmp.ne.s32.totalorder %s270, %s272
    %p279 = scmp.eq.s32.totalorder %s21, 1
    %p280 = por %p278, %p279
    %p281 = scmp.ne.s32.totalorder %s272, %s273
    %p282 = scmp.eq.s32.totalorder %s21, 0
    %p283 = por %p281, %p282
    %p284 = scmp.ne.s32.totalorder %s272, %s273
    %p285 = scmp.eq.s32.totalorder %s22, 1
    %p286 = por %p284, %p285
    %p288 = scmp.ne.s32.totalorder %s273, %s287
    %p289 = scmp.eq.s32.totalorder %s22, 0
    %p290 = por %p288, %p289
    %s291 = ssub.s32 %s23, %s35
    %p292 = scmp.eq.s32.totalorder %s291, 0
    %s294 = sadd.s32 %s293, 1
    %s295 = scalar_select %p292, %s293, %s294
    %p298 = pneg %p292
    %p299 = scmp.eq.s32.totalorder %s16, 1
    %p300 = por %p298, %p299
    %p301 = scmp.ne.s32.totalorder %s293, %s296
    %p302 = scmp.eq.s32.totalorder %s16, 0
    %p303 = por %p301, %p302
    %p304 = scmp.ne.s32.totalorder %s293, %s296
    %p305 = scmp.eq.s32.totalorder %s21, 1
    %p306 = por %p304, %p305
    %p307 = scmp.ne.s32.totalorder %s296, %s297
    %p308 = scmp.eq.s32.totalorder %s21, 0
    %p309 = por %p307, %p308
    %p310 = scmp.ne.s32.totalorder %s296, %s297
    %p311 = scmp.eq.s32.totalorder %s22, 1
    %p312 = por %p310, %p311
    %p314 = scmp.ne.s32.totalorder %s297, %s313
    %p315 = scmp.eq.s32.totalorder %s22, 0
    %p316 = por %p314, %p315
    %p317 = scmp.le.s32.totalorder 1, %s16
    %p318 = scmp.lt.s32.totalorder %s16, 3
    %p319 = pnand %p317, %p318
    %p320 = pneg %p319
    // Predicated region
    $region9: #{mamba_it_forward.1} parent=5 // pred_check
      _
    $region10: #{mamba_it_forward.1} parent=5 // pred_check_branch
      %322 = sbr.rel (%p319) target = $region12
    $region11: #{mamba_it_forward.1} parent=5 // pred_region
      %s323 = ssub.s32 %s16, 1
      // Predicated region
      $region13: #{mamba_it_forward.1} parent=11 // pred_check
        %p324 = pneg %p54
      $region14: #{mamba_it_forward.1} parent=11 // pred_check_branch
        %326 = sbr.rel (%p324) target = $region16
      $region15: #{mamba_it_forward.1} parent=11 // pred_region
        %s327 = smul.u32 2, %s25
        %p328 = scmp.lt.s32.totalorder %s327, 1
        %s329 = scalar_select %p328, %s327, 1
        %s330 = smul.addr %s329, 2
        %s331 = smul.addr %s330, 8
        %s332 = scalar_lea.vmem %s0, %s331
        %s333 = smul.u32 2, %s25
      $region16: #{mamba_it_forward.1} parent=11 // pred_fallthru
        _
      // Predicated region
      $region17: #{mamba_it_forward.1} parent=11 // pred_check
        %p334 = pneg %p283
      $region18: #{mamba_it_forward.1} parent=11 // pred_check_branch
        %336 = sbr.rel (%p334) target = $region20
      $region19: #{mamba_it_forward.1} parent=11 // pred_region
        _
      $region20: #{mamba_it_forward.1} parent=11 // pred_fallthru
        _
    $region12: #{mamba_it_forward.1} parent=5 // pred_fallthru
      _
    %p337 = scmp.lt.s32.totalorder %s16, 2
    // Predicated region
    $region21: #{mamba_it_forward.1} parent=5 // pred_check
      %p338 = pneg %p337
    $region22: #{mamba_it_forward.1} parent=5 // pred_check_branch
      %340 = sbr.rel (%p338) target = $region24
    $region23: #{mamba_it_forward.1} parent=5 // pred_region
      // Predicated region
      $region25: #{mamba_it_forward.1} parent=23 // pred_check
        %p341 = pneg %p74
      $region26: #{mamba_it_forward.1} parent=23 // pred_check_branch
        %343 = sbr.rel (%p341) target = $region28
      $region27: #{mamba_it_forward.1} parent=23 // pred_region
        %p344 = scmp.lt.s32.totalorder %s24, 1
        %s345 = scalar_select %p344, %s24, 1
        %s346 = smul.addr %s345, 4
        %s347 = smul.addr %s346, 4
        %s348 = scalar_lea.vmem %s1, %s347
      $region28: #{mamba_it_forward.1} parent=23 // pred_fallthru
        _
      // Predicated region
      $region29: #{mamba_it_forward.1} parent=23 // pred_check
        %p349 = pneg %p100
      $region30: #{mamba_it_forward.1} parent=23 // pred_check_branch
        %351 = sbr.rel (%p349) target = $region32
      $region31: #{mamba_it_forward.1} parent=23 // pred_region
        %p352 = scmp.lt.s32.totalorder %s24, 1
        %s353 = scalar_select %p352, %s24, 1
        %s354 = smul.addr %s353, 4
        %s355 = smul.addr %s354, 4
        %s356 = scalar_lea.vmem %s2, %s355
      $region32: #{mamba_it_forward.1} parent=23 // pred_fallthru
        _
      // Predicated region
      $region33: #{mamba_it_forward.1} parent=23 // pred_check
        %p357 = pneg %p126
      $region34: #{mamba_it_forward.1} parent=23 // pred_check_branch
        %359 = sbr.rel (%p357) target = $region36
      $region35: #{mamba_it_forward.1} parent=23 // pred_region
        %p360 = scmp.lt.s32.totalorder %s24, 1
        %s361 = scalar_select %p360, %s24, 1
        %s362 = smul.addr %s361, 4
        %s363 = scalar_lea.vmem %s3, %s362
      $region36: #{mamba_it_forward.1} parent=23 // pred_fallthru
        _
      // Predicated region
      $region37: #{mamba_it_forward.1} parent=23 // pred_check
        %p364 = pneg %p152
      $region38: #{mamba_it_forward.1} parent=23 // pred_check_branch
        %366 = sbr.rel (%p364) target = $region40
      $region39: #{mamba_it_forward.1} parent=23 // pred_region
        %p367 = scmp.lt.s32.totalorder %s24, 1
        %s368 = scalar_select %p367, %s24, 1
        %s369 = smul.addr %s368, 8
        %s370 = smul.addr %s369, 4
        %s371 = scalar_lea.vmem %s4, %s370
      $region40: #{mamba_it_forward.1} parent=23 // pred_fallthru
        _
      // Predicated region
      $region41: #{mamba_it_forward.1} parent=23 // pred_check
        %p372 = pneg %p178
      $region42: #{mamba_it_forward.1} parent=23 // pred_check_branch
        %374 = sbr.rel (%p372) target = $region44
      $region43: #{mamba_it_forward.1} parent=23 // pred_region
        %p375 = scmp.lt.s32.totalorder %s24, 1
        %s376 = scalar_select %p375, %s24, 1
        %s377 = smul.addr %s376, 8
        %s378 = smul.addr %s377, 4
        %s379 = scalar_lea.vmem %s5, %s378
      $region44: #{mamba_it_forward.1} parent=23 // pred_fallthru
        _
      // Predicated region
      $region45: #{mamba_it_forward.1} parent=23 // pred_check
        %p380 = pneg %p204
      $region46: #{mamba_it_forward.1} parent=23 // pred_check_branch
        %382 = sbr.rel (%p380) target = $region48
      $region47: #{mamba_it_forward.1} parent=23 // pred_region
        %p383 = scmp.lt.s32.totalorder %s24, 1
        %s384 = scalar_select %p383, %s24, 1
        %s385 = smul.addr %s384, 2
        %s386 = smul.addr %s385, 8
        %s387 = scalar_lea.vmem %s6, %s386
      $region48: #{mamba_it_forward.1} parent=23 // pred_fallthru
        _
      // Predicated region
      $region49: #{mamba_it_forward.1} parent=23 // pred_check
        %p388 = pneg %p230
      $region50: #{mamba_it_forward.1} parent=23 // pred_check_branch
        %390 = sbr.rel (%p388) target = $region52
      $region51: #{mamba_it_forward.1} parent=23 // pred_region
        %p391 = scmp.lt.s32.totalorder %s24, 1
        %s392 = scalar_select %p391, %s24, 1
        %s393 = smul.addr %s392, 4
        %s394 = scalar_lea.vmem %s7, %s393
      $region52: #{mamba_it_forward.1} parent=23 // pred_fallthru
        _
      // Predicated region
      $region53: #{mamba_it_forward.1} parent=23 // pred_check
        %p395 = pneg %p256
      $region54: #{mamba_it_forward.1} parent=23 // pred_check_branch
        %397 = sbr.rel (%p395) target = $region56
      $region55: #{mamba_it_forward.1} parent=23 // pred_region
        %p398 = scmp.lt.s32.totalorder %s24, 1
        %s399 = scalar_select %p398, %s24, 1
        %s400 = smul.addr %s399, 8
        %s401 = smul.addr %s400, 4
        %s402 = scalar_lea.vmem %s8, %s401
      $region56: #{mamba_it_forward.1} parent=23 // pred_fallthru
        _
    $region24: #{mamba_it_forward.1} parent=5 // pred_fallthru
      _
    %p403 = scmp.le.s32.totalorder 1, %s16
    %p404 = scmp.lt.s32.totalorder %s16, 3
    %p405 = pnand %p403, %p404
    %p406 = pneg %p405
    // Predicated region
    $region57: #{mamba_it_forward.1} parent=5 // pred_check
      _
    $region58: #{mamba_it_forward.1} parent=5 // pred_check_branch
      %408 = sbr.rel (%p405) target = $region60
    $region59: #{mamba_it_forward.1} parent=5 // pred_region
      %s409 = ssub.s32 %s16, 1
      %s410 = smul.u32 2, %s25
      %p411 = scmp.lt.s32.totalorder %s410, 1
      %s412 = scalar_select %p411, %s410, 1
      %s413 = smul.addr %s412, 2
      %s414 = smul.addr %s413, 8
      %s415 = scalar_lea.vmem %s0, %s414
      %p416 = pneg %p54
      %p417 = pneg %p51
      %p418 = scmp.lt.s32.totalorder %s26, 1
      %s419 = scalar_select %p418, %s26, 1
      %s420 = smul.addr %s419, 4
      %s421 = smul.addr %s420, 4
      %s422 = scalar_lea.vmem %s1, %s421
      %p423 = pneg %p80
      %p424 = pneg %p77
      %p425 = scmp.lt.s32.totalorder %s26, 1
      %s426 = scalar_select %p425, %s26, 1
      %s427 = smul.addr %s426, 4
      %s428 = smul.addr %s427, 4
      %s429 = scalar_lea.vmem %s2, %s428
      %p430 = pneg %p106
      %p431 = pneg %p103
      %p432 = scmp.lt.s32.totalorder %s26, 1
      %s433 = scalar_select %p432, %s26, 1
      %s434 = smul.addr %s433, 4
      %s435 = scalar_lea.vmem %s3, %s434
      %p436 = pneg %p132
      %p437 = pneg %p129
      %p438 = scmp.lt.s32.totalorder %s26, 1
      %s439 = scalar_select %p438, %s26, 1
      %s440 = smul.addr %s439, 8
      %s441 = smul.addr %s440, 4
      %s442 = scalar_lea.vmem %s4, %s441
      %p443 = pneg %p158
      %p444 = pneg %p155
      %p445 = scmp.lt.s32.totalorder %s26, 1
      %s446 = scalar_select %p445, %s26, 1
      %s447 = smul.addr %s446, 8
      %s448 = smul.addr %s447, 4
      %s449 = scalar_lea.vmem %s5, %s448
      %p450 = pneg %p184
      %p451 = pneg %p181
      %p452 = scmp.lt.s32.totalorder %s26, 1
      %s453 = scalar_select %p452, %s26, 1
      %s454 = smul.addr %s453, 2
      %s455 = smul.addr %s454, 8
      %s456 = scalar_lea.vmem %s6, %s455
      %p457 = pneg %p210
      %p458 = pneg %p207
      %p459 = scmp.lt.s32.totalorder %s26, 1
      %s460 = scalar_select %p459, %s26, 1
      %s461 = smul.addr %s460, 4
      %s462 = scalar_lea.vmem %s7, %s461
      %p463 = pneg %p236
      %p464 = pneg %p233
      %p465 = scmp.lt.s32.totalorder %s26, 1
      %s466 = scalar_select %p465, %s26, 1
      %s467 = smul.addr %s466, 8
      %s468 = smul.addr %s467, 4
      %s469 = scalar_lea.vmem %s8, %s468
      %p470 = pneg %p262
      %p471 = pneg %p259
      %p472 = pneg %p283
      %p473 = pneg %p280
      %p474 = pneg %p309
      %p475 = pneg %p306
      %s476 = smul.u32 2, %s25
      %p477 = scmp.lt.s32.totalorder %s476, 1
      %s478 = scalar_select %p477, %s476, 1
      %s479 = smul.addr %s478, 2
      %s480 = smul.addr %s479, 8
      %s481 = scalar_lea.vmem %s10, %s480
      %s482 = smul.u32 2, %s25
      %p483 = scmp.lt.s32.totalorder %s482, 1
      %s484 = scalar_select %p483, %s482, 1
      %s485 = smul.addr %s484, 2
      %s486 = smul.addr %s485, 8
      %s487 = scalar_lea.vmem %s0, %s486
      %s488 = smul.u32 2, %s25
      %p489 = scmp.lt.s32.totalorder %s26, 1
      %s490 = scalar_select %p489, %s26, 1
      %s491 = smul.addr %s490, 4
      %s492 = smul.addr %s491, 4
      %s493 = scalar_lea.vmem %s1, %s492
      %p494 = scmp.lt.s32.totalorder %s26, 1
      %s495 = scalar_select %p494, %s26, 1
      %s496 = smul.addr %s495, 4
      %s497 = smul.addr %s496, 4
      %s498 = scalar_lea.vmem %s2, %s497
      %p499 = scmp.lt.s32.totalorder %s26, 1
      %s500 = scalar_select %p499, %s26, 1
      %s501 = smul.addr %s500, 4
      %s502 = scalar_lea.vmem %s3, %s501
      %p503 = scmp.lt.s32.totalorder %s26, 1
      %s504 = scalar_select %p503, %s26, 1
      %s505 = smul.addr %s504, 8
      %s506 = smul.addr %s505, 4
      %s507 = scalar_lea.vmem %s4, %s506
      %p508 = scmp.lt.s32.totalorder %s26, 1
      %s509 = scalar_select %p508, %s26, 1
      %s510 = smul.addr %s509, 8
      %s511 = smul.addr %s510, 4
      %s512 = scalar_lea.vmem %s5, %s511
      %p513 = scmp.lt.s32.totalorder %s26, 1
      %s514 = scalar_select %p513, %s26, 1
      %s515 = smul.addr %s514, 2
      %s516 = smul.addr %s515, 8
      %s517 = scalar_lea.vmem %s6, %s516
      %p518 = scmp.lt.s32.totalorder %s26, 1
      %s519 = scalar_select %p518, %s26, 1
      %s520 = smul.addr %s519, 4
      %s521 = scalar_lea.vmem %s7, %s520
      %p522 = scmp.lt.s32.totalorder %s26, 1
      %s523 = scalar_select %p522, %s26, 1
      %s524 = smul.addr %s523, 8
      %s525 = smul.addr %s524, 4
      %s526 = scalar_lea.vmem %s8, %s525
      %s527 = smul.u32 2, %s25
      %p528 = scmp.lt.s32.totalorder %s527, 1
      %s529 = scalar_select %p528, %s527, 1
      %s530 = smul.addr %s529, 2
      %s531 = smul.addr %s530, 8
      %s532 = scalar_lea.vmem %s10, %s531
      %s533 = smul.u32 2, %s25
      %p535 = scmp.eq.s32.totalorder %s26, 0
      // Predicated region
      $region61: #{mamba_it_forward.1} parent=59 // pred_check
        %p536 = pneg %p535
      $region62: #{mamba_it_forward.1} parent=59 // pred_check_branch
        %538 = sbr.rel (%p536) target = $region64
      $region63: #{mamba_it_forward.1} parent=59 // pred_region
        %v539 = vld [vmem:[%s487] sm:$0xff]
        %v540 = vld [vmem:[%s487 + $0x8] sm:$0xff]
        %v541 = vld [vmem:[%s487 + $0x10] sm:$0xff]
        %v542 = vld [vmem:[%s487 + $0x18] sm:$0xff]
        %vm543 = vcmask 261120
        %544 = vst.msk [vmem:[#allocation2] sm:$0xff] %vm543, %v539
        %545 = vst.msk [vmem:[#allocation2 + $0x8] sm:$0xff] %vm543, %v540
        %546 = vst.msk [vmem:[#allocation2 + $0x10] sm:$0xff] %vm543, %v541
        %547 = vst.msk [vmem:[#allocation2 + $0x18] sm:$0xff] %vm543, %v542
      $region64: #{mamba_it_forward.1} parent=59 // pred_fallthru
        _
      %v548 = vld [vmem:[%s493] sm:$0xf]
      %v549 = vld [vmem:[%s493 + $0x4] sm:$0xf]
      %v550 = vld [vmem:[%s493 + $0x8] sm:$0xf]
      %v551 = vld [vmem:[%s493 + $0xc] sm:$0xf]
      %v552 = vld [vmem:[%s498] sm:$0xf]
      %v553 = vld [vmem:[%s498 + $0x4] sm:$0xf]
      %v554 = vld [vmem:[%s498 + $0x8] sm:$0xf]
      %v555 = vld [vmem:[%s498 + $0xc] sm:$0xf]
      %v556 = vld [vmem:[%s502] sm:$0xf]
      %v557 = vld [vmem:[%s512] sm:$0xf]
      %v558 = vld [vmem:[%s512 + $0x4] sm:$0xf]
      %v559 = vld [vmem:[%s512 + $0x8] sm:$0xf]
      %v560 = vld [vmem:[%s512 + $0xc] sm:$0xf]
      %v561 = vld [vmem:[%s512 + $0x10] sm:$0xf]
      %v562 = vld [vmem:[%s512 + $0x14] sm:$0xf]
      %v563 = vld [vmem:[%s512 + $0x18] sm:$0xf]
      %v564 = vld [vmem:[%s512 + $0x1c] sm:$0xf]
      %v565 = vld [vmem:[%s517] sm:$0xff]
      %v566 = vld [vmem:[%s517 + $0x8] sm:$0xff]
      %v567 = vld [vmem:[%s521] sm:$0x7]
      %v568 = vld [vmem:[%s526] sm:$0xf]
      %v569 = vld [vmem:[%s526 + $0x4] sm:$0xf]
      %v570 = vld [vmem:[%s526 + $0x8] sm:$0xf]
      %v571 = vld [vmem:[%s526 + $0xc] sm:$0xf]
      %v572 = vld [vmem:[%s526 + $0x10] sm:$0xf]
      %v573 = vld [vmem:[%s526 + $0x14] sm:$0xf]
      %v574 = vld [vmem:[%s526 + $0x18] sm:$0xf]
      %v575 = vld [vmem:[%s526 + $0x1c] sm:$0xf]
      %v576 = vld [vmem:[%s9] sm:$0x1]
      %v577 = vld [vmem:[%s507] sm:$0xf]
      %v578 = vld [vmem:[%s507 + $0x4] sm:$0xf]
      %v579 = vld [vmem:[%s507 + $0x8] sm:$0xf]
      %v580 = vld [vmem:[%s507 + $0xc] sm:$0xf]
      %v581 = vld [vmem:[%s507 + $0x10] sm:$0xf]
      %v582 = vld [vmem:[%s507 + $0x14] sm:$0xf]
      %v583 = vld [vmem:[%s507 + $0x18] sm:$0xf]
      %v584 = vld [vmem:[%s507 + $0x1c] sm:$0xf]
      %v585 = vld [vmem:[#allocation2] sm:$0xff]
      %v586 = vld [vmem:[#allocation2 + $0x10] sm:$0xff]
      %v587 = vpack.c.bf16 %v586, %v585
      %v592 = vunpack.c.l.b16 %v548
      %v593 = vunpack.c.l.b16 %v549
      %v594 = vunpack.c.l.b16 %v550
      %v595 = vunpack.c.l.b16 %v551
      %v596 = vpack.c.b16 %v593, %v592
      %v597 = vpack.c.b16 %v595, %v594
      %vm600 = vcmask 261120
      %v602 = vsel %vm600, %v587, 0
      %604 = vmatprep.subr.bf16.mxu0 0
      %605 = vmatpush1.bf16.msra.mxu0 %v596
      %606 = vmatprep.subr.bf16.mxu0 0
      %607 = vmatpush1.bf16.msra.mxu0 %v597
      %608 = vmatprep.subr.bf16.mxu0 0
      %609 = vmatpush1.bf16.msra.mxu0 0
      %610 = vmatprep.subr.bf16.mxu0 0
      %611 = vmatpush1.bf16.msra.mxu0 0
      %612 = vmatprep.subr.bf16.mxu0 0
      %613 = vmatpush1.bf16.msra.mxu0 0
      %614 = vmatprep.subr.bf16.mxu0 0
      %615 = vmatpush1.bf16.msra.mxu0 0
      %616 = vmatprep.subr.bf16.mxu0 0
      %617 = vmatpush1.bf16.msra.mxu0 0
      %618 = vmatprep.subr.bf16.mxu0 0
      %619 = vmatpush1.bf16.msra.mxu0 0
      %620 = vmatprep.subr.bf16.mxu0 0
      %621 = vmatpush1.bf16.msra.mxu0 0
      %622 = vmatprep.subr.bf16.mxu0 0
      %623 = vmatpush1.bf16.msra.mxu0 0
      %624 = vmatprep.subr.bf16.mxu0 0
      %625 = vmatpush1.bf16.msra.mxu0 0
      %626 = vmatprep.subr.bf16.mxu0 0
      %627 = vmatpush1.bf16.msra.mxu0 0
      %628 = vmatprep.subr.bf16.mxu0 0
      %629 = vmatpush1.bf16.msra.mxu0 0
      %630 = vmatprep.subr.bf16.mxu0 0
      %631 = vmatpush1.bf16.msra.mxu0 0
      %632 = vmatprep.subr.bf16.mxu0 0
      %633 = vmatpush1.bf16.msra.mxu0 0
      %634 = vmatprep.subr.bf16.mxu0 0
      %635 = vmatpush1.bf16.msra.mxu0 0
      %636 = vmatprep.mubr.bf16.mxu0 0
      %637 = vmatmul.mubr.bf16.gmra.mrb[0].mxu0 %v602
      %v638 = vpop.f32.mrb[0].mxu0
      %v639 = vadd.f32 0.0, %v638
      %v640 = vpop.f32.mrb[0].mxu0
      %v641 = vpop.f32.mrb[0].mxu0
      %v642 = vadd.f32 0.0, %v641
      %v643 = vpop.f32.mrb[0].mxu0
      %644 = vdwg.mxu0
      %v646 = vrot.slane %v639, 5
      %vm648 = vcmask 1042432
      %v649 = vsel %vm648, 0.0, %v646
      %v650 = vlaneseq
      %v651 = vshrl.u32 %v650, 7
      %v652 = vsub.s32 3, %v651
      %v653 = vrot.slane %v556, %v652
      %v654 = vmul.f32 %v639, %v653
      %v655 = vlaneseq
      %v656 = vshrl.u32 %v655, 7
      %v657 = vsub.s32 2, %v656
      %v658 = vrot.slane %v556, %v657
      %v659 = vmul.f32 %v649, %v658
      %v660 = vmul.f32 %v646, %v658
      %vm663 = vcmask 1045504
      %v664 = vrot.slane %v659, 2
      %v665 = vrot.slane %v660, 2
      %v666 = vsel %vm663, %v664, %v665
      %v668 = vadd.f32 %v654, %v666
      %v669 = vlaneseq
      %v670 = vshrl.u32 %v669, 7
      %v671 = vsub.s32 1, %v670
      %v672 = vrot.slane %v556, %v671
      %v673 = vmul.f32 %v649, %v672
      %v674 = vmul.f32 %v646, %v672
      %vm677 = vcmask 1046528
      %v678 = vrot.slane %v673, 1
      %v679 = vrot.slane %v674, 1
      %v680 = vsel %vm677, %v678, %v679
      %v682 = vadd.f32 %v668, %v680
      %v683 = vlaneseq
      %v684 = vshrl.u32 %v683, 7
      %v685 = vsub.s32 0, %v684
      %v686 = vrot.slane %v556, %v685
      %v687 = vmul.f32 %v649, %v686
      %v688 = vadd.f32 %v682, %v687
      %v689 = vlaneseq
      %v690 = vshrl.u32 %v689, 7
      %v691 = vsub.s32 0, %v690
      %v692 = vrot.slane %v567, %v691
      %v693 = vadd.f32 %v688, %v692
      %v694 = vsub.f32 0.0, %v693
      %v695 = vmul.f32 %v694, 1.442695
      %v696 = vpow.pop %v695
      %v697 = vadd.f32 %v696, 1.0
      %v698 = vrcp.pop %v697
      %v699 = vmul.f32 1.0, %v698
      %v700 = vmul.f32 %v693, %v699
      %v702 = vrot.slane %v642, 5
      %v704 = vsel %vm648, 0.0, %v702
      %v705 = vmul.f32 %v642, %v653
      %v706 = vmul.f32 %v704, %v658
      %v707 = vmul.f32 %v702, %v658
      %v710 = vrot.slane %v706, 2
      %v711 = vrot.slane %v707, 2
      %v712 = vsel %vm663, %v710, %v711
      %v714 = vadd.f32 %v705, %v712
      %v715 = vmul.f32 %v704, %v672
      %v716 = vmul.f32 %v702, %v672
      %v719 = vrot.slane %v715, 1
      %v720 = vrot.slane %v716, 1
      %v721 = vsel %vm677, %v719, %v720
      %v723 = vadd.f32 %v714, %v721
      %v724 = vmul.f32 %v704, %v686
      %v725 = vadd.f32 %v723, %v724
      %v726 = vadd.f32 %v725, %v692
      %v727 = vsub.f32 0.0, %v726
      %v728 = vmul.f32 %v727, 1.442695
      %v729 = vpow.pop %v728
      %v730 = vadd.f32 %v729, 1.0
      %v731 = vrcp.pop %v730
      %v732 = vmul.f32 1.0, %v731
      %v733 = vmul.f32 %v726, %v732
      %v734 = vpack.c.bf16 %v733, %v700
      %v735 = vlaneseq
      %v736 = vshrl.u32 %v735, 7
      %v737 = vsub.s32 1, %v736
      %v738 = vrot.slane %v567, %v737
      %v747 = vunpack.c.l.b16 %v577
      %v748 = vunpack.c.l.b16 %v578
      %v749 = vunpack.c.l.b16 %v579
      %v750 = vunpack.c.l.b16 %v580
      %v751 = vunpack.c.l.b16 %v581
      %v752 = vunpack.c.l.b16 %v582
      %v753 = vunpack.c.l.b16 %v583
      %v754 = vunpack.c.l.b16 %v584
      %v755 = vpack.c.b16 %v748, %v747
      %v756 = vpack.c.b16 %v750, %v749
      %v757 = vpack.c.b16 %v752, %v751
      %v758 = vpack.c.b16 %v754, %v753
      %vm763 = vcmask 523264
      %v765 = vsel %vm763, %v734, 0
      %767 = vmatprep.subr.bf16.mxu0 0
      %768 = vmatpush1.bf16.msra.mxu0 %v755
      %769 = vmatprep.subr.bf16.mxu0 0
      %770 = vmatpush1.bf16.msra.mxu0 %v756
      %771 = vmatprep.subr.bf16.mxu0 0
      %772 = vmatpush1.bf16.msra.mxu0 %v757
      %773 = vmatprep.subr.bf16.mxu0 0
      %774 = vmatpush1.bf16.msra.mxu0 %v758
      %775 = vmatprep.subr.bf16.mxu0 0
      %776 = vmatpush1.bf16.msra.mxu0 0
      %777 = vmatprep.subr.bf16.mxu0 0
      %778 = vmatpush1.bf16.msra.mxu0 0
      %779 = vmatprep.subr.bf16.mxu0 0
      %780 = vmatpush1.bf16.msra.mxu0 0
      %781 = vmatprep.subr.bf16.mxu0 0
      %782 = vmatpush1.bf16.msra.mxu0 0
      %783 = vmatprep.subr.bf16.mxu0 0
      %784 = vmatpush1.bf16.msra.mxu0 0
      %785 = vmatprep.subr.bf16.mxu0 0
      %786 = vmatpush1.bf16.msra.mxu0 0
      %787 = vmatprep.subr.bf16.mxu0 0
      %788 = vmatpush1.bf16.msra.mxu0 0
      %789 = vmatprep.subr.bf16.mxu0 0
      %790 = vmatpush1.bf16.msra.mxu0 0
      %791 = vmatprep.subr.bf16.mxu0 0
      %792 = vmatpush1.bf16.msra.mxu0 0
      %793 = vmatprep.subr.bf16.mxu0 0
      %794 = vmatpush1.bf16.msra.mxu0 0
      %795 = vmatprep.subr.bf16.mxu0 0
      %796 = vmatpush1.bf16.msra.mxu0 0
      %797 = vmatprep.subr.bf16.mxu0 0
      %798 = vmatpush1.bf16.msra.mxu0 0
      %799 = vmatprep.mubr.bf16.mxu0 0
      %800 = vmatmul.mubr.bf16.gmra.mrb[0].mxu0 %v765
      %v801 = vpop.f32.mrb[0].mxu0
      %v802 = vadd.f32 %v738, %v801
      %v803 = vpop.f32.mrb[0].mxu0
      %v804 = vpop.f32.mrb[0].mxu0
      %v805 = vadd.f32 %v738, %v804
      %v806 = vpop.f32.mrb[0].mxu0
      %807 = vdwg.mxu0
      %v808 = vmin.f32 %v802, 20.0
      %v809 = vmin.f32 %v805, 20.0
      %vm810 = vcmp.gt.f32.partialorder %v802, 20.0
      %vm811 = vcmp.gt.f32.partialorder %v805, 20.0
      %v812 = vmul.f32 %v808, 1.442695
      %v813 = vpow.pop %v812
      %v814 = vmul.f32 %v809, 1.442695
      %v815 = vpow.pop %v814
      %v816 = vadd.f32 %v813, 1.0
      %v817 = vadd.f32 %v815, 1.0
      %v818 = vlog2.pop %v816
      %v819 = vmul.f32 %v818, 0.6931472
      %v820 = vlog2.pop %v817
      %v821 = vmul.f32 %v820, 0.6931472
      %v822 = vsel %vm810, %v802, %v819
      %v823 = vsel %vm811, %v805, %v821
      %v824 = vmul.f32 %v822, %v700
      %v825 = vmul.f32 %v823, %v733
      %v834 = vunpack.c.l.b16 %v557
      %v835 = vunpack.c.l.b16 %v558
      %v836 = vunpack.c.l.b16 %v559
      %v837 = vunpack.c.l.b16 %v560
      %v838 = vunpack.c.l.b16 %v561
      %v839 = vunpack.c.l.b16 %v562
      %v840 = vunpack.c.l.b16 %v563
      %v841 = vunpack.c.l.b16 %v564
      %v842 = vpack.c.b16 %v835, %v834
      %v843 = vpack.c.b16 %v837, %v836
      %v844 = vpack.c.b16 %v839, %v838
      %v845 = vpack.c.b16 %v841, %v840
      %850 = vmatprep.subr.bf16.mxu0 0
      %851 = vmatpush1.bf16.msra.mxu0 %v842
      %852 = vmatprep.subr.bf16.mxu0 0
      %853 = vmatpush1.bf16.msra.mxu0 %v843
      %854 = vmatprep.subr.bf16.mxu0 0
      %855 = vmatpush1.bf16.msra.mxu0 %v844
      %856 = vmatprep.subr.bf16.mxu0 0
      %857 = vmatpush1.bf16.msra.mxu0 %v845
      %858 = vmatprep.subr.bf16.mxu0 0
      %859 = vmatpush1.bf16.msra.mxu0 0
      %860 = vmatprep.subr.bf16.mxu0 0
      %861 = vmatpush1.bf16.msra.mxu0 0
      %862 = vmatprep.subr.bf16.mxu0 0
      %863 = vmatpush1.bf16.msra.mxu0 0
      %864 = vmatprep.subr.bf16.mxu0 0
      %865 = vmatpush1.bf16.msra.mxu0 0
      %866 = vmatprep.subr.bf16.mxu0 0
      %867 = vmatpush1.bf16.msra.mxu0 0
      %868 = vmatprep.subr.bf16.mxu0 0
      %869 = vmatpush1.bf16.msra.mxu0 0
      %870 = vmatprep.subr.bf16.mxu0 0
      %871 = vmatpush1.bf16.msra.mxu0 0
      %872 = vmatprep.subr.bf16.mxu0 0
      %873 = vmatpush1.bf16.msra.mxu0 0
      %874 = vmatprep.subr.bf16.mxu0 0
      %875 = vmatpush1.bf16.msra.mxu0 0
      %876 = vmatprep.subr.bf16.mxu0 0
      %877 = vmatpush1.bf16.msra.mxu0 0
      %878 = vmatprep.subr.bf16.mxu0 0
      %879 = vmatpush1.bf16.msra.mxu0 0
      %880 = vmatprep.subr.bf16.mxu0 0
      %881 = vmatpush1.bf16.msra.mxu0 0
      %882 = vmatprep.mubr.bf16.mxu0 0
      %883 = vmatmul.mubr.bf16.gmra.mrb[0].mxu0 %v765
      %v884 = vpop.f32.mrb[0].mxu0
      %v885 = vadd.f32 0.0, %v884
      %v886 = vpop.f32.mrb[0].mxu0
      %v887 = vpop.f32.mrb[0].mxu0
      %v888 = vadd.f32 0.0, %v887
      %v889 = vpop.f32.mrb[0].mxu0
      %890 = vdwg.mxu0
      %v891 = vlaneseq
      %v892 = vshrl.u32 %v891, 7
      %v893 = vsub.s32 0, %v892
      %v894 = vrot.slane %v885, %v893
      %896 = vbcast.lane.b32.xlu0 %v894, 256
      %v897 = vpop.permute.xlu0 %896
      %s899 = sor.u32 256, 8
      %900 = vbcast.lane.b32.xlu0 %v894, %s899
      %v901 = vpop.permute.xlu0 %900
      %v902 = vlaneseq
      %v903 = vshrl.u32 %v902, 7
      %v904 = vsub.s32 1, %v903
      %v905 = vrot.slane %v885, %v904
      %907 = vbcast.lane.b32.xlu0 %v905, 256
      %v908 = vpop.permute.xlu0 %907
      %s910 = sor.u32 256, 8
      %911 = vbcast.lane.b32.xlu0 %v905, %s910
      %v912 = vpop.permute.xlu0 %911
      %v913 = vlaneseq
      %v914 = vshrl.u32 %v913, 7
      %v915 = vsub.s32 2, %v914
      %v916 = vrot.slane %v885, %v915
      %918 = vbcast.lane.b32.xlu0 %v916, 256
      %v919 = vpop.permute.xlu0 %918
      %s921 = sor.u32 256, 8
      %922 = vbcast.lane.b32.xlu0 %v916, %s921
      %v923 = vpop.permute.xlu0 %922
      %v924 = vlaneseq
      %v925 = vshrl.u32 %v924, 7
      %v926 = vsub.s32 3, %v925
      %v927 = vrot.slane %v885, %v926
      %929 = vbcast.lane.b32.xlu0 %v927, 256
      %v930 = vpop.permute.xlu0 %929
      %s932 = sor.u32 256, 8
      %933 = vbcast.lane.b32.xlu0 %v927, %s932
      %v934 = vpop.permute.xlu0 %933
      %v935 = vlaneseq
      %v936 = vshrl.u32 %v935, 7
      %v937 = vsub.s32 4, %v936
      %v938 = vrot.slane %v885, %v937
      %940 = vbcast.lane.b32.xlu0 %v938, 256
      %v941 = vpop.permute.xlu0 %940
      %s943 = sor.u32 256, 8
      %944 = vbcast.lane.b32.xlu0 %v938, %s943
      %v945 = vpop.permute.xlu0 %944
      %v946 = vlaneseq
      %v947 = vshrl.u32 %v946, 7
      %v948 = vsub.s32 5, %v947
      %v949 = vrot.slane %v885, %v948
      %951 = vbcast.lane.b32.xlu0 %v949, 256
      %v952 = vpop.permute.xlu0 %951
      %s954 = sor.u32 256, 8
      %955 = vbcast.lane.b32.xlu0 %v949, %s954
      %v956 = vpop.permute.xlu0 %955
      %v957 = vlaneseq
      %v958 = vshrl.u32 %v957, 7
      %v959 = vsub.s32 6, %v958
      %v960 = vrot.slane %v885, %v959
      %962 = vbcast.lane.b32.xlu0 %v960, 256
      %v963 = vpop.permute.xlu0 %962
      %s965 = sor.u32 256, 8
      %966 = vbcast.lane.b32.xlu0 %v960, %s965
      %v967 = vpop.permute.xlu0 %966
      %v968 = vlaneseq
      %v969 = vshrl.u32 %v968, 7
      %v970 = vsub.s32 7, %v969
      %v971 = vrot.slane %v885, %v970
      %973 = vbcast.lane.b32.xlu0 %v971, 256
      %v974 = vpop.permute.xlu0 %973
      %s976 = sor.u32 256, 8
      %977 = vbcast.lane.b32.xlu0 %v971, %s976
      %v978 = vpop.permute.xlu0 %977
      %s980 = sor.u32 256, 16
      %981 = vbcast.lane.b32.xlu0 %v894, %s980
      %v982 = vpop.permute.xlu0 %981
      %s984 = sor.u32 256, 24
      %985 = vbcast.lane.b32.xlu0 %v894, %s984
      %v986 = vpop.permute.xlu0 %985
      %s988 = sor.u32 256, 16
      %989 = vbcast.lane.b32.xlu0 %v905, %s988
      %v990 = vpop.permute.xlu0 %989
      %s992 = sor.u32 256, 24
      %993 = vbcast.lane.b32.xlu0 %v905, %s992
      %v994 = vpop.permute.xlu0 %993
      %s996 = sor.u32 256, 16
      %997 = vbcast.lane.b32.xlu0 %v916, %s996
      %v998 = vpop.permute.xlu0 %997
      %s1000 = sor.u32 256, 24
      %1001 = vbcast.lane.b32.xlu0 %v916, %s1000
      %v1002 = vpop.permute.xlu0 %1001
      %s1004 = sor.u32 256, 16
      %1005 = vbcast.lane.b32.xlu0 %v927, %s1004
      %v1006 = vpop.permute.xlu0 %1005
      %s1008 = sor.u32 256, 24
      %1009 = vbcast.lane.b32.xlu0 %v927, %s1008
      %v1010 = vpop.permute.xlu0 %1009
      %s1012 = sor.u32 256, 16
      %1013 = vbcast.lane.b32.xlu0 %v938, %s1012
      %v1014 = vpop.permute.xlu0 %1013
      %s1016 = sor.u32 256, 24
      %1017 = vbcast.lane.b32.xlu0 %v938, %s1016
      %v1018 = vpop.permute.xlu0 %1017
      %s1020 = sor.u32 256, 16
      %1021 = vbcast.lane.b32.xlu0 %v949, %s1020
      %v1022 = vpop.permute.xlu0 %1021
      %s1024 = sor.u32 256, 24
      %1025 = vbcast.lane.b32.xlu0 %v949, %s1024
      %v1026 = vpop.permute.xlu0 %1025
      %s1028 = sor.u32 256, 16
      %1029 = vbcast.lane.b32.xlu0 %v960, %s1028
      %v1030 = vpop.permute.xlu0 %1029
      %s1032 = sor.u32 256, 24
      %1033 = vbcast.lane.b32.xlu0 %v960, %s1032
      %v1034 = vpop.permute.xlu0 %1033
      %s1036 = sor.u32 256, 16
      %1037 = vbcast.lane.b32.xlu0 %v971, %s1036
      %v1038 = vpop.permute.xlu0 %1037
      %s1040 = sor.u32 256, 24
      %1041 = vbcast.lane.b32.xlu0 %v971, %s1040
      %v1042 = vpop.permute.xlu0 %1041
      %v1043 = vlaneseq
      %v1044 = vshrl.u32 %v1043, 7
      %v1045 = vsub.s32 0, %v1044
      %v1046 = vrot.slane %v822, %v1045
      %v1047 = vmul.f32 %v1046, %v565
      %v1048 = vmul.f32 %v1046, %v566
      %v1049 = vmul.f32 %v1047, 1.442695
      %v1050 = vpow.pop %v1049
      %v1051 = vmul.f32 %v1048, 1.442695
      %v1052 = vpow.pop %v1051
      %v1053 = vmul.f32 %v1050, 0.0
      %v1054 = vmul.f32 %v1052, 0.0
      %v1055 = vlaneseq
      %v1056 = vshrl.u32 %v1055, 7
      %v1057 = vsub.s32 0, %v1056
      %v1058 = vrot.slane %v824, %v1057
      %v1059 = vmul.f32 %v897, %v1058
      %v1060 = vmul.f32 %v901, %v1058
      %v1061 = vadd.f32 %v1053, %v1059
      %v1062 = vadd.f32 %v1054, %v1060
      %v1063 = vmul.f32 %v982, %v1061
      %v1064 = vmul.f32 %v986, %v1062
      %v1065 = vsel %vm763, %v1063, 0.0
      %v1066 = vsel %vm763, %v1064, 0.0
      %v1067 = vadd.f32 %v1065, %v1066
      %v1068 = vrot.slane %v1067, 4
      %v1069 = vadd.f32 %v1067, %v1068
      %v1070 = vrot.slane %v1069, 2
      %v1071 = vadd.f32 %v1069, %v1070
      %v1072 = vrot.slane %v1071, 1
      %v1073 = vadd.f32 %v1071, %v1072
      %v1074 = vlaneseq
      %v1075 = vshrl.u32 %v1074, 7
      %v1076 = vsub.s32 1, %v1075
      %v1077 = vrot.slane %v822, %v1076
      %v1078 = vmul.f32 %v1077, %v565
      %v1079 = vmul.f32 %v1077, %v566
      %v1080 = vmul.f32 %v1078, 1.442695
      %v1081 = vpow.pop %v1080
      %v1082 = vmul.f32 %v1079, 1.442695
      %v1083 = vpow.pop %v1082
      %v1084 = vmul.f32 %v1081, %v1061
      %v1085 = vmul.f32 %v1083, %v1062
      %v1086 = vlaneseq
      %v1087 = vshrl.u32 %v1086, 7
      %v1088 = vsub.s32 1, %v1087
      %v1089 = vrot.slane %v824, %v1088
      %v1090 = vmul.f32 %v908, %v1089
      %v1091 = vmul.f32 %v912, %v1089
      %v1092 = vadd.f32 %v1084, %v1090
      %v1093 = vadd.f32 %v1085, %v1091
      %v1094 = vmul.f32 %v990, %v1092
      %v1095 = vmul.f32 %v994, %v1093
      %v1096 = vsel %vm763, %v1094, 0.0
      %v1097 = vsel %vm763, %v1095, 0.0
      %v1098 = vadd.f32 %v1096, %v1097
      %v1099 = vrot.slane %v1098, 4
      %v1100 = vadd.f32 %v1098, %v1099
      %v1101 = vrot.slane %v1100, 2
      %v1102 = vadd.f32 %v1100, %v1101
      %v1103 = vrot.slane %v1102, 1
      %v1104 = vadd.f32 %v1102, %v1103
      %v1105 = vlaneseq
      %v1106 = vshrl.u32 %v1105, 7
      %v1107 = vsub.s32 2, %v1106
      %v1108 = vrot.slane %v822, %v1107
      %v1109 = vmul.f32 %v1108, %v565
      %v1110 = vmul.f32 %v1108, %v566
      %v1111 = vmul.f32 %v1109, 1.442695
      %v1112 = vpow.pop %v1111
      %v1113 = vmul.f32 %v1110, 1.442695
      %v1114 = vpow.pop %v1113
      %v1115 = vmul.f32 %v1112, %v1092
      %v1116 = vmul.f32 %v1114, %v1093
      %v1117 = vlaneseq
      %v1118 = vshrl.u32 %v1117, 7
      %v1119 = vsub.s32 2, %v1118
      %v1120 = vrot.slane %v824, %v1119
      %v1121 = vmul.f32 %v919, %v1120
      %v1122 = vmul.f32 %v923, %v1120
      %v1123 = vadd.f32 %v1115, %v1121
      %v1124 = vadd.f32 %v1116, %v1122
      %v1125 = vmul.f32 %v998, %v1123
      %v1126 = vmul.f32 %v1002, %v1124
      %v1127 = vsel %vm763, %v1125, 0.0
      %v1128 = vsel %vm763, %v1126, 0.0
      %v1129 = vadd.f32 %v1127, %v1128
      %v1130 = vrot.slane %v1129, 4
      %v1131 = vadd.f32 %v1129, %v1130
      %v1132 = vrot.slane %v1131, 2
      %v1133 = vadd.f32 %v1131, %v1132
      %v1134 = vrot.slane %v1133, 1
      %v1135 = vadd.f32 %v1133, %v1134
      %v1136 = vlaneseq
      %v1137 = vshrl.u32 %v1136, 7
      %v1138 = vsub.s32 3, %v1137
      %v1139 = vrot.slane %v822, %v1138
      %v1140 = vmul.f32 %v1139, %v565
      %v1141 = vmul.f32 %v1139, %v566
      %v1142 = vmul.f32 %v1140, 1.442695
      %v1143 = vpow.pop %v1142
      %v1144 = vmul.f32 %v1141, 1.442695
      %v1145 = vpow.pop %v1144
      %v1146 = vmul.f32 %v1143, %v1123
      %v1147 = vmul.f32 %v1145, %v1124
      %v1148 = vlaneseq
      %v1149 = vshrl.u32 %v1148, 7
      %v1150 = vsub.s32 3, %v1149
      %v1151 = vrot.slane %v824, %v1150
      %v1152 = vmul.f32 %v930, %v1151
      %v1153 = vmul.f32 %v934, %v1151
      %v1154 = vadd.f32 %v1146, %v1152
      %v1155 = vadd.f32 %v1147, %v1153
      %v1156 = vmul.f32 %v1006, %v1154
      %v1157 = vmul.f32 %v1010, %v1155
      %v1158 = vsel %vm763, %v1156, 0.0
      %v1159 = vsel %vm763, %v1157, 0.0
      %v1160 = vadd.f32 %v1158, %v1159
      %v1161 = vrot.slane %v1160, 4
      %v1162 = vadd.f32 %v1160, %v1161
      %v1163 = vrot.slane %v1162, 2
      %v1164 = vadd.f32 %v1162, %v1163
      %v1165 = vrot.slane %v1164, 1
      %v1166 = vadd.f32 %v1164, %v1165
      %v1167 = vlaneseq
      %v1168 = vshrl.u32 %v1167, 7
      %v1169 = vsub.s32 4, %v1168
      %v1170 = vrot.slane %v822, %v1169
      %v1171 = vmul.f32 %v1170, %v565
      %v1172 = vmul.f32 %v1170, %v566
      %v1173 = vmul.f32 %v1171, 1.442695
      %v1174 = vpow.pop %v1173
      %v1175 = vmul.f32 %v1172, 1.442695
      %v1176 = vpow.pop %v1175
      %v1177 = vmul.f32 %v1174, %v1154
      %v1178 = vmul.f32 %v1176, %v1155
      %v1179 = vlaneseq
      %v1180 = vshrl.u32 %v1179, 7
      %v1181 = vsub.s32 4, %v1180
      %v1182 = vrot.slane %v824, %v1181
      %v1183 = vmul.f32 %v941, %v1182
      %v1184 = vmul.f32 %v945, %v1182
      %v1185 = vadd.f32 %v1177, %v1183
      %v1186 = vadd.f32 %v1178, %v1184
      %v1187 = vmul.f32 %v1014, %v1185
      %v1188 = vmul.f32 %v1018, %v1186
      %v1189 = vsel %vm763, %v1187, 0.0
      %v1190 = vsel %vm763, %v1188, 0.0
      %v1191 = vadd.f32 %v1189, %v1190
      %v1192 = vrot.slane %v1191, 4
      %v1193 = vadd.f32 %v1191, %v1192
      %v1194 = vrot.slane %v1193, 2
      %v1195 = vadd.f32 %v1193, %v1194
      %v1196 = vrot.slane %v1195, 1
      %v1197 = vadd.f32 %v1195, %v1196
      %v1198 = vlaneseq
      %v1199 = vshrl.u32 %v1198, 7
      %v1200 = vsub.s32 5, %v1199
      %v1201 = vrot.slane %v822, %v1200
      %v1202 = vmul.f32 %v1201, %v565
      %v1203 = vmul.f32 %v1201, %v566
      %v1204 = vmul.f32 %v1202, 1.442695
      %v1205 = vpow.pop %v1204
      %v1206 = vmul.f32 %v1203, 1.442695
      %v1207 = vpow.pop %v1206
      %v1208 = vmul.f32 %v1205, %v1185
      %v1209 = vmul.f32 %v1207, %v1186
      %v1210 = vlaneseq
      %v1211 = vshrl.u32 %v1210, 7
      %v1212 = vsub.s32 5, %v1211
      %v1213 = vrot.slane %v824, %v1212
      %v1214 = vmul.f32 %v952, %v1213
      %v1215 = vmul.f32 %v956, %v1213
      %v1216 = vadd.f32 %v1208, %v1214
      %v1217 = vadd.f32 %v1209, %v1215
      %v1218 = vmul.f32 %v1022, %v1216
      %v1219 = vmul.f32 %v1026, %v1217
      %v1220 = vsel %vm763, %v1218, 0.0
      %v1221 = vsel %vm763, %v1219, 0.0
      %v1222 = vadd.f32 %v1220, %v1221
      %v1223 = vrot.slane %v1222, 4
      %v1224 = vadd.f32 %v1222, %v1223
      %v1225 = vrot.slane %v1224, 2
      %v1226 = vadd.f32 %v1224, %v1225
      %v1227 = vrot.slane %v1226, 1
      %v1228 = vadd.f32 %v1226, %v1227
      %v1229 = vlaneseq
      %v1230 = vshrl.u32 %v1229, 7
      %v1231 = vsub.s32 6, %v1230
      %v1232 = vrot.slane %v822, %v1231
      %v1233 = vmul.f32 %v1232, %v565
      %v1234 = vmul.f32 %v1232, %v566
      %v1235 = vmul.f32 %v1233, 1.442695
      %v1236 = vpow.pop %v1235
      %v1237 = vmul.f32 %v1234, 1.442695
      %v1238 = vpow.pop %v1237
      %v1239 = vmul.f32 %v1236, %v1216
      %v1240 = vmul.f32 %v1238, %v1217
      %v1241 = vlaneseq
      %v1242 = vshrl.u32 %v1241, 7
      %v1243 = vsub.s32 6, %v1242
      %v1244 = vrot.slane %v824, %v1243
      %v1245 = vmul.f32 %v963, %v1244
      %v1246 = vmul.f32 %v967, %v1244
      %v1247 = vadd.f32 %v1239, %v1245
      %v1248 = vadd.f32 %v1240, %v1246
      %v1249 = vmul.f32 %v1030, %v1247
      %v1250 = vmul.f32 %v1034, %v1248
      %v1251 = vsel %vm763, %v1249, 0.0
      %v1252 = vsel %vm763, %v1250, 0.0
      %v1253 = vadd.f32 %v1251, %v1252
      %v1254 = vrot.slane %v1253, 4
      %v1255 = vadd.f32 %v1253, %v1254
      %v1256 = vrot.slane %v1255, 2
      %v1257 = vadd.f32 %v1255, %v1256
      %v1258 = vrot.slane %v1257, 1
      %v1259 = vadd.f32 %v1257, %v1258
      %v1260 = vlaneseq
      %v1261 = vshrl.u32 %v1260, 7
      %v1262 = vsub.s32 7, %v1261
      %v1263 = vrot.slane %v822, %v1262
      %v1264 = vmul.f32 %v1263, %v565
      %v1265 = vmul.f32 %v1263, %v566
      %v1266 = vmul.f32 %v1264, 1.442695
      %v1267 = vpow.pop %v1266
      %v1268 = vmul.f32 %v1265, 1.442695
      %v1269 = vpow.pop %v1268
      %v1270 = vmul.f32 %v1267, %v1247
      %v1271 = vmul.f32 %v1269, %v1248
      %v1272 = vlaneseq
      %v1273 = vshrl.u32 %v1272, 7
      %v1274 = vsub.s32 7, %v1273
      %v1275 = vrot.slane %v824, %v1274
      %v1276 = vmul.f32 %v974, %v1275
      %v1277 = vmul.f32 %v978, %v1275
      %v1278 = vadd.f32 %v1270, %v1276
      %v1279 = vadd.f32 %v1271, %v1277
      %v1280 = vmul.f32 %v1038, %v1278
      %v1281 = vmul.f32 %v1042, %v1279
      %v1282 = vsel %vm763, %v1280, 0.0
      %v1283 = vsel %vm763, %v1281, 0.0
      %v1284 = vadd.f32 %v1282, %v1283
      %v1285 = vrot.slane %v1284, 4
      %v1286 = vadd.f32 %v1284, %v1285
      %v1287 = vrot.slane %v1286, 2
      %v1288 = vadd.f32 %v1286, %v1287
      %v1289 = vrot.slane %v1288, 1
      %v1290 = vadd.f32 %v1288, %v1289
      %vm1291 = vcmask 1040384
      %v1292 = vsel %vm1291, %v1073, %v1104
      %vm1293 = vcmask 1041408
      %v1294 = vsel %vm1293, %v1292, %v1135
      %v1295 = vsel %vm648, %v1294, %v1166
      %vm1296 = vcmask 1043456
      %v1297 = vsel %vm1296, %v1295, %v1197
      %vm1298 = vcmask 1044480
      %v1299 = vsel %vm1298, %v1297, %v1228
      %v1300 = vsel %vm663, %v1299, %v1259
      %v1301 = vsel %vm677, %v1300, %v1290
      %v1302 = vlaneseq
      %v1303 = vshrl.u32 %v1302, 7
      %v1304 = vsub.s32 0, %v1303
      %v1305 = vrot.slane %v888, %v1304
      %1307 = vbcast.lane.b32.xlu0 %v1305, 256
      %v1308 = vpop.permute.xlu0 %1307
      %s1310 = sor.u32 256, 8
      %1311 = vbcast.lane.b32.xlu0 %v1305, %s1310
      %v1312 = vpop.permute.xlu0 %1311
      %v1313 = vlaneseq
      %v1314 = vshrl.u32 %v1313, 7
      %v1315 = vsub.s32 1, %v1314
      %v1316 = vrot.slane %v888, %v1315
      %1318 = vbcast.lane.b32.xlu0 %v1316, 256
      %v1319 = vpop.permute.xlu0 %1318
      %s1321 = sor.u32 256, 8
      %1322 = vbcast.lane.b32.xlu0 %v1316, %s1321
      %v1323 = vpop.permute.xlu0 %1322
      %v1324 = vlaneseq
      %v1325 = vshrl.u32 %v1324, 7
      %v1326 = vsub.s32 2, %v1325
      %v1327 = vrot.slane %v888, %v1326
      %1329 = vbcast.lane.b32.xlu0 %v1327, 256
      %v1330 = vpop.permute.xlu0 %1329
      %s1332 = sor.u32 256, 8
      %1333 = vbcast.lane.b32.xlu0 %v1327, %s1332
      %v1334 = vpop.permute.xlu0 %1333
      %v1335 = vlaneseq
      %v1336 = vshrl.u32 %v1335, 7
      %v1337 = vsub.s32 3, %v1336
      %v1338 = vrot.slane %v888, %v1337
      %1340 = vbcast.lane.b32.xlu0 %v1338, 256
      %v1341 = vpop.permute.xlu0 %1340
      %s1343 = sor.u32 256, 8
      %1344 = vbcast.lane.b32.xlu0 %v1338, %s1343
      %v1345 = vpop.permute.xlu0 %1344
      %v1346 = vlaneseq
      %v1347 = vshrl.u32 %v1346, 7
      %v1348 = vsub.s32 4, %v1347
      %v1349 = vrot.slane %v888, %v1348
      %1351 = vbcast.lane.b32.xlu0 %v1349, 256
      %v1352 = vpop.permute.xlu0 %1351
      %s1354 = sor.u32 256, 8
      %1355 = vbcast.lane.b32.xlu0 %v1349, %s1354
      %v1356 = vpop.permute.xlu0 %1355
      %v1357 = vlaneseq
      %v1358 = vshrl.u32 %v1357, 7
      %v1359 = vsub.s32 5, %v1358
      %v1360 = vrot.slane %v888, %v1359
      %1362 = vbcast.lane.b32.xlu0 %v1360, 256
      %v1363 = vpop.permute.xlu0 %1362
      %s1365 = sor.u32 256, 8
      %1366 = vbcast.lane.b32.xlu0 %v1360, %s1365
      %v1367 = vpop.permute.xlu0 %1366
      %v1368 = vlaneseq
      %v1369 = vshrl.u32 %v1368, 7
      %v1370 = vsub.s32 6, %v1369
      %v1371 = vrot.slane %v888, %v1370
      %1373 = vbcast.lane.b32.xlu0 %v1371, 256
      %v1374 = vpop.permute.xlu0 %1373
      %s1376 = sor.u32 256, 8
      %1377 = vbcast.lane.b32.xlu0 %v1371, %s1376
      %v1378 = vpop.permute.xlu0 %1377
      %v1379 = vlaneseq
      %v1380 = vshrl.u32 %v1379, 7
      %v1381 = vsub.s32 7, %v1380
      %v1382 = vrot.slane %v888, %v1381
      %1384 = vbcast.lane.b32.xlu0 %v1382, 256
      %v1385 = vpop.permute.xlu0 %1384
      %s1387 = sor.u32 256, 8
      %1388 = vbcast.lane.b32.xlu0 %v1382, %s1387
      %v1389 = vpop.permute.xlu0 %1388
      %s1391 = sor.u32 256, 16
      %1392 = vbcast.lane.b32.xlu0 %v1305, %s1391
      %v1393 = vpop.permute.xlu0 %1392
      %s1395 = sor.u32 256, 24
      %1396 = vbcast.lane.b32.xlu0 %v1305, %s1395
      %v1397 = vpop.permute.xlu0 %1396
      %s1399 = sor.u32 256, 16
      %1400 = vbcast.lane.b32.xlu0 %v1316, %s1399
      %v1401 = vpop.permute.xlu0 %1400
      %s1403 = sor.u32 256, 24
      %1404 = vbcast.lane.b32.xlu0 %v1316, %s1403
      %v1405 = vpop.permute.xlu0 %1404
      %s1407 = sor.u32 256, 16
      %1408 = vbcast.lane.b32.xlu0 %v1327, %s1407
      %v1409 = vpop.permute.xlu0 %1408
      %s1411 = sor.u32 256, 24
      %1412 = vbcast.lane.b32.xlu0 %v1327, %s1411
      %v1413 = vpop.permute.xlu0 %1412
      %s1415 = sor.u32 256, 16
      %1416 = vbcast.lane.b32.xlu0 %v1338, %s1415
      %v1417 = vpop.permute.xlu0 %1416
      %s1419 = sor.u32 256, 24
      %1420 = vbcast.lane.b32.xlu0 %v1338, %s1419
      %v1421 = vpop.permute.xlu0 %1420
      %s1423 = sor.u32 256, 16
      %1424 = vbcast.lane.b32.xlu0 %v1349, %s1423
      %v1425 = vpop.permute.xlu0 %1424
      %s1427 = sor.u32 256, 24
      %1428 = vbcast.lane.b32.xlu0 %v1349, %s1427
      %v1429 = vpop.permute.xlu0 %1428
      %s1431 = sor.u32 256, 16
      %1432 = vbcast.lane.b32.xlu0 %v1360, %s1431
      %v1433 = vpop.permute.xlu0 %1432
      %s1435 = sor.u32 256, 24
      %1436 = vbcast.lane.b32.xlu0 %v1360, %s1435
      %v1437 = vpop.permute.xlu0 %1436
      %s1439 = sor.u32 256, 16
      %1440 = vbcast.lane.b32.xlu0 %v1371, %s1439
      %v1441 = vpop.permute.xlu0 %1440
      %s1443 = sor.u32 256, 24
      %1444 = vbcast.lane.b32.xlu0 %v1371, %s1443
      %v1445 = vpop.permute.xlu0 %1444
      %s1447 = sor.u32 256, 16
      %1448 = vbcast.lane.b32.xlu0 %v1382, %s1447
      %v1449 = vpop.permute.xlu0 %1448
      %s1451 = sor.u32 256, 24
      %1452 = vbcast.lane.b32.xlu0 %v1382, %s1451
      %v1453 = vpop.permute.xlu0 %1452
      %v1454 = vlaneseq
      %v1455 = vshrl.u32 %v1454, 7
      %v1456 = vsub.s32 0, %v1455
      %v1457 = vrot.slane %v823, %v1456
      %v1458 = vmul.f32 %v1457, %v565
      %v1459 = vmul.f32 %v1457, %v566
      %v1460 = vmul.f32 %v1458, 1.442695
      %v1461 = vpow.pop %v1460
      %v1462 = vmul.f32 %v1459, 1.442695
      %v1463 = vpow.pop %v1462
      %v1464 = vmul.f32 %v1461, 0.0
      %v1465 = vmul.f32 %v1463, 0.0
      %v1466 = vlaneseq
      %v1467 = vshrl.u32 %v1466, 7
      %v1468 = vsub.s32 0, %v1467
      %v1469 = vrot.slane %v825, %v1468
      %v1470 = vmul.f32 %v1308, %v1469
      %v1471 = vmul.f32 %v1312, %v1469
      %v1472 = vadd.f32 %v1464, %v1470
      %v1473 = vadd.f32 %v1465, %v1471
      %v1474 = vmul.f32 %v1393, %v1472
      %v1475 = vmul.f32 %v1397, %v1473
      %v1476 = vsel %vm763, %v1474, 0.0
      %v1477 = vsel %vm763, %v1475, 0.0
      %v1478 = vadd.f32 %v1476, %v1477
      %v1479 = vrot.slane %v1478, 4
      %v1480 = vadd.f32 %v1478, %v1479
      %v1481 = vrot.slane %v1480, 2
      %v1482 = vadd.f32 %v1480, %v1481
      %v1483 = vrot.slane %v1482, 1
      %v1484 = vadd.f32 %v1482, %v1483
      %v1485 = vlaneseq
      %v1486 = vshrl.u32 %v1485, 7
      %v1487 = vsub.s32 1, %v1486
      %v1488 = vrot.slane %v823, %v1487
      %v1489 = vmul.f32 %v1488, %v565
      %v1490 = vmul.f32 %v1488, %v566
      %v1491 = vmul.f32 %v1489, 1.442695
      %v1492 = vpow.pop %v1491
      %v1493 = vmul.f32 %v1490, 1.442695
      %v1494 = vpow.pop %v1493
      %v1495 = vmul.f32 %v1492, %v1472
      %v1496 = vmul.f32 %v1494, %v1473
      %v1497 = vlaneseq
      %v1498 = vshrl.u32 %v1497, 7
      %v1499 = vsub.s32 1, %v1498
      %v1500 = vrot.slane %v825, %v1499
      %v1501 = vmul.f32 %v1319, %v1500
      %v1502 = vmul.f32 %v1323, %v1500
      %v1503 = vadd.f32 %v1495, %v1501
      %v1504 = vadd.f32 %v1496, %v1502
      %v1505 = vmul.f32 %v1401, %v1503
      %v1506 = vmul.f32 %v1405, %v1504
      %v1507 = vsel %vm763, %v1505, 0.0
      %v1508 = vsel %vm763, %v1506, 0.0
      %v1509 = vadd.f32 %v1507, %v1508
      %v1510 = vrot.slane %v1509, 4
      %v1511 = vadd.f32 %v1509, %v1510
      %v1512 = vrot.slane %v1511, 2
      %v1513 = vadd.f32 %v1511, %v1512
      %v1514 = vrot.slane %v1513, 1
      %v1515 = vadd.f32 %v1513, %v1514
      %v1516 = vlaneseq
      %v1517 = vshrl.u32 %v1516, 7
      %v1518 = vsub.s32 2, %v1517
      %v1519 = vrot.slane %v823, %v1518
      %v1520 = vmul.f32 %v1519, %v565
      %v1521 = vmul.f32 %v1519, %v566
      %v1522 = vmul.f32 %v1520, 1.442695
      %v1523 = vpow.pop %v1522
      %v1524 = vmul.f32 %v1521, 1.442695
      %v1525 = vpow.pop %v1524
      %v1526 = vmul.f32 %v1523, %v1503
      %v1527 = vmul.f32 %v1525, %v1504
      %v1528 = vlaneseq
      %v1529 = vshrl.u32 %v1528, 7
      %v1530 = vsub.s32 2, %v1529
      %v1531 = vrot.slane %v825, %v1530
      %v1532 = vmul.f32 %v1330, %v1531
      %v1533 = vmul.f32 %v1334, %v1531
      %v1534 = vadd.f32 %v1526, %v1532
      %v1535 = vadd.f32 %v1527, %v1533
      %v1536 = vmul.f32 %v1409, %v1534
      %v1537 = vmul.f32 %v1413, %v1535
      %v1538 = vsel %vm763, %v1536, 0.0
      %v1539 = vsel %vm763, %v1537, 0.0
      %v1540 = vadd.f32 %v1538, %v1539
      %v1541 = vrot.slane %v1540, 4
      %v1542 = vadd.f32 %v1540, %v1541
      %v1543 = vrot.slane %v1542, 2
      %v1544 = vadd.f32 %v1542, %v1543
      %v1545 = vrot.slane %v1544, 1
      %v1546 = vadd.f32 %v1544, %v1545
      %v1547 = vlaneseq
      %v1548 = vshrl.u32 %v1547, 7
      %v1549 = vsub.s32 3, %v1548
      %v1550 = vrot.slane %v823, %v1549
      %v1551 = vmul.f32 %v1550, %v565
      %v1552 = vmul.f32 %v1550, %v566
      %v1553 = vmul.f32 %v1551, 1.442695
      %v1554 = vpow.pop %v1553
      %v1555 = vmul.f32 %v1552, 1.442695
      %v1556 = vpow.pop %v1555
      %v1557 = vmul.f32 %v1554, %v1534
      %v1558 = vmul.f32 %v1556, %v1535
      %v1559 = vlaneseq
      %v1560 = vshrl.u32 %v1559, 7
      %v1561 = vsub.s32 3, %v1560
      %v1562 = vrot.slane %v825, %v1561
      %v1563 = vmul.f32 %v1341, %v1562
      %v1564 = vmul.f32 %v1345, %v1562
      %v1565 = vadd.f32 %v1557, %v1563
      %v1566 = vadd.f32 %v1558, %v1564
      %v1567 = vmul.f32 %v1417, %v1565
      %v1568 = vmul.f32 %v1421, %v1566
      %v1569 = vsel %vm763, %v1567, 0.0
      %v1570 = vsel %vm763, %v1568, 0.0
      %v1571 = vadd.f32 %v1569, %v1570
      %v1572 = vrot.slane %v1571, 4
      %v1573 = vadd.f32 %v1571, %v1572
      %v1574 = vrot.slane %v1573, 2
      %v1575 = vadd.f32 %v1573, %v1574
      %v1576 = vrot.slane %v1575, 1
      %v1577 = vadd.f32 %v1575, %v1576
      %v1578 = vlaneseq
      %v1579 = vshrl.u32 %v1578, 7
      %v1580 = vsub.s32 4, %v1579
      %v1581 = vrot.slane %v823, %v1580
      %v1582 = vmul.f32 %v1581, %v565
      %v1583 = vmul.f32 %v1581, %v566
      %v1584 = vmul.f32 %v1582, 1.442695
      %v1585 = vpow.pop %v1584
      %v1586 = vmul.f32 %v1583, 1.442695
      %v1587 = vpow.pop %v1586
      %v1588 = vmul.f32 %v1585, %v1565
      %v1589 = vmul.f32 %v1587, %v1566
      %v1590 = vlaneseq
      %v1591 = vshrl.u32 %v1590, 7
      %v1592 = vsub.s32 4, %v1591
      %v1593 = vrot.slane %v825, %v1592
      %v1594 = vmul.f32 %v1352, %v1593
      %v1595 = vmul.f32 %v1356, %v1593
      %v1596 = vadd.f32 %v1588, %v1594
      %v1597 = vadd.f32 %v1589, %v1595
      %v1598 = vmul.f32 %v1425, %v1596
      %v1599 = vmul.f32 %v1429, %v1597
      %v1600 = vsel %vm763, %v1598, 0.0
      %v1601 = vsel %vm763, %v1599, 0.0
      %v1602 = vadd.f32 %v1600, %v1601
      %v1603 = vrot.slane %v1602, 4
      %v1604 = vadd.f32 %v1602, %v1603
      %v1605 = vrot.slane %v1604, 2
      %v1606 = vadd.f32 %v1604, %v1605
      %v1607 = vrot.slane %v1606, 1
      %v1608 = vadd.f32 %v1606, %v1607
      %v1609 = vlaneseq
      %v1610 = vshrl.u32 %v1609, 7
      %v1611 = vsub.s32 5, %v1610
      %v1612 = vrot.slane %v823, %v1611
      %v1613 = vmul.f32 %v1612, %v565
      %v1614 = vmul.f32 %v1612, %v566
      %v1615 = vmul.f32 %v1613, 1.442695
      %v1616 = vpow.pop %v1615
      %v1617 = vmul.f32 %v1614, 1.442695
      %v1618 = vpow.pop %v1617
      %v1619 = vmul.f32 %v1616, %v1596
      %v1620 = vmul.f32 %v1618, %v1597
      %v1621 = vlaneseq
      %v1622 = vshrl.u32 %v1621, 7
      %v1623 = vsub.s32 5, %v1622
      %v1624 = vrot.slane %v825, %v1623
      %v1625 = vmul.f32 %v1363, %v1624
      %v1626 = vmul.f32 %v1367, %v1624
      %v1627 = vadd.f32 %v1619, %v1625
      %v1628 = vadd.f32 %v1620, %v1626
      %v1629 = vmul.f32 %v1433, %v1627
      %v1630 = vmul.f32 %v1437, %v1628
      %v1631 = vsel %vm763, %v1629, 0.0
      %v1632 = vsel %vm763, %v1630, 0.0
      %v1633 = vadd.f32 %v1631, %v1632
      %v1634 = vrot.slane %v1633, 4
      %v1635 = vadd.f32 %v1633, %v1634
      %v1636 = vrot.slane %v1635, 2
      %v1637 = vadd.f32 %v1635, %v1636
      %v1638 = vrot.slane %v1637, 1
      %v1639 = vadd.f32 %v1637, %v1638
      %v1640 = vlaneseq
      %v1641 = vshrl.u32 %v1640, 7
      %v1642 = vsub.s32 6, %v1641
      %v1643 = vrot.slane %v823, %v1642
      %v1644 = vmul.f32 %v1643, %v565
      %v1645 = vmul.f32 %v1643, %v566
      %v1646 = vmul.f32 %v1644, 1.442695
      %v1647 = vpow.pop %v1646
      %v1648 = vmul.f32 %v1645, 1.442695
      %v1649 = vpow.pop %v1648
      %v1650 = vmul.f32 %v1647, %v1627
      %v1651 = vmul.f32 %v1649, %v1628
      %v1652 = vlaneseq
      %v1653 = vshrl.u32 %v1652, 7
      %v1654 = vsub.s32 6, %v1653
      %v1655 = vrot.slane %v825, %v1654
      %v1656 = vmul.f32 %v1374, %v1655
      %v1657 = vmul.f32 %v1378, %v1655
      %v1658 = vadd.f32 %v1650, %v1656
      %v1659 = vadd.f32 %v1651, %v1657
      %v1660 = vmul.f32 %v1441, %v1658
      %v1661 = vmul.f32 %v1445, %v1659
      %v1662 = vsel %vm763, %v1660, 0.0
      %v1663 = vsel %vm763, %v1661, 0.0
      %v1664 = vadd.f32 %v1662, %v1663
      %v1665 = vrot.slane %v1664, 4
      %v1666 = vadd.f32 %v1664, %v1665
      %v1667 = vrot.slane %v1666, 2
      %v1668 = vadd.f32 %v1666, %v1667
      %v1669 = vrot.slane %v1668, 1
      %v1670 = vadd.f32 %v1668, %v1669
      %v1671 = vlaneseq
      %v1672 = vshrl.u32 %v1671, 7
      %v1673 = vsub.s32 7, %v1672
      %v1674 = vrot.slane %v823, %v1673
      %v1675 = vmul.f32 %v1674, %v565
      %v1676 = vmul.f32 %v1674, %v566
      %v1677 = vmul.f32 %v1675, 1.442695
      %v1678 = vpow.pop %v1677
      %v1679 = vmul.f32 %v1676, 1.442695
      %v1680 = vpow.pop %v1679
      %v1681 = vmul.f32 %v1678, %v1658
      %v1682 = vmul.f32 %v1680, %v1659
      %v1683 = vlaneseq
      %v1684 = vshrl.u32 %v1683, 7
      %v1685 = vsub.s32 7, %v1684
      %v1686 = vrot.slane %v825, %v1685
      %v1687 = vmul.f32 %v1385, %v1686
      %v1688 = vmul.f32 %v1389, %v1686
      %v1689 = vadd.f32 %v1681, %v1687
      %v1690 = vadd.f32 %v1682, %v1688
      %v1691 = vmul.f32 %v1449, %v1689
      %v1692 = vmul.f32 %v1453, %v1690
      %v1693 = vsel %vm763, %v1691, 0.0
      %v1694 = vsel %vm763, %v1692, 0.0
      %v1695 = vadd.f32 %v1693, %v1694
      %v1696 = vrot.slane %v1695, 4
      %v1697 = vadd.f32 %v1695, %v1696
      %v1698 = vrot.slane %v1697, 2
      %v1699 = vadd.f32 %v1697, %v1698
      %v1700 = vrot.slane %v1699, 1
      %v1701 = vadd.f32 %v1699, %v1700
      %v1702 = vsel %vm1291, %v1484, %v1515
      %v1703 = vsel %vm1293, %v1702, %v1546
      %v1704 = vsel %vm648, %v1703, %v1577
      %v1705 = vsel %vm1296, %v1704, %v1608
      %v1706 = vsel %vm1298, %v1705, %v1639
      %v1707 = vsel %vm663, %v1706, %v1670
      %v1708 = vsel %vm677, %v1707, %v1701
      %v1713 = vunpack.c.l.b16 %v552
      %v1714 = vunpack.c.l.b16 %v553
      %v1715 = vunpack.c.l.b16 %v554
      %v1716 = vunpack.c.l.b16 %v555
      %v1717 = vpack.c.b16 %v1714, %v1713
      %v1718 = vpack.c.b16 %v1716, %v1715
      %1721 = vmatprep.subr.bf16.mxu0 0
      %1722 = vmatpush1.bf16.msra.mxu0 %v1717
      %1723 = vmatprep.subr.bf16.mxu0 0
      %1724 = vmatpush1.bf16.msra.mxu0 %v1718
      %1725 = vmatprep.subr.bf16.mxu0 0
      %1726 = vmatpush1.bf16.msra.mxu0 0
      %1727 = vmatprep.subr.bf16.mxu0 0
      %1728 = vmatpush1.bf16.msra.mxu0 0
      %1729 = vmatprep.subr.bf16.mxu0 0
      %1730 = vmatpush1.bf16.msra.mxu0 0
      %1731 = vmatprep.subr.bf16.mxu0 0
      %1732 = vmatpush1.bf16.msra.mxu0 0
      %1733 = vmatprep.subr.bf16.mxu0 0
      %1734 = vmatpush1.bf16.msra.mxu0 0
      %1735 = vmatprep.subr.bf16.mxu0 0
      %1736 = vmatpush1.bf16.msra.mxu0 0
      %1737 = vmatprep.subr.bf16.mxu0 0
      %1738 = vmatpush1.bf16.msra.mxu0 0
      %1739 = vmatprep.subr.bf16.mxu0 0
      %1740 = vmatpush1.bf16.msra.mxu0 0
      %1741 = vmatprep.subr.bf16.mxu0 0
      %1742 = vmatpush1.bf16.msra.mxu0 0
      %1743 = vmatprep.subr.bf16.mxu0 0
      %1744 = vmatpush1.bf16.msra.mxu0 0
      %1745 = vmatprep.subr.bf16.mxu0 0
      %1746 = vmatpush1.bf16.msra.mxu0 0
      %1747 = vmatprep.subr.bf16.mxu0 0
      %1748 = vmatpush1.bf16.msra.mxu0 0
      %1749 = vmatprep.subr.bf16.mxu0 0
      %1750 = vmatpush1.bf16.msra.mxu0 0
      %1751 = vmatprep.subr.bf16.mxu0 0
      %1752 = vmatpush1.bf16.msra.mxu0 0
      %1753 = vmatprep.mubr.bf16.mxu0 0
      %1754 = vmatmul.mubr.bf16.gmra.mrb[0].mxu0 %v602
      %v1755 = vpop.f32.mrb[0].mxu0
      %v1756 = vadd.f32 0.0, %v1755
      %v1757 = vpop.f32.mrb[0].mxu0
      %v1758 = vpop.f32.mrb[0].mxu0
      %v1759 = vadd.f32 0.0, %v1758
      %v1760 = vpop.f32.mrb[0].mxu0
      %1761 = vdwg.mxu0
      %v1762 = vlaneseq
      %v1763 = vshrl.u32 %v1762, 7
      %v1764 = vsub.s32 2, %v1763
      %v1765 = vrot.slane %v567, %v1764
      %v1766 = vmul.f32 %v700, %v1765
      %v1767 = vmul.f32 %v733, %v1765
      %v1768 = vadd.f32 %v1301, %v1766
      %v1769 = vadd.f32 %v1708, %v1767
      %v1770 = vsub.f32 0.0, %v1756
      %v1771 = vsub.f32 0.0, %v1759
      %v1772 = vmul.f32 %v1770, 1.442695
      %v1773 = vpow.pop %v1772
      %v1774 = vmul.f32 %v1771, 1.442695
      %v1775 = vpow.pop %v1774
      %v1776 = vadd.f32 %v1773, 1.0
      %v1777 = vadd.f32 %v1775, 1.0
      %v1778 = vrcp.pop %v1776
      %v1779 = vmul.f32 1.0, %v1778
      %v1780 = vrcp.pop %v1777
      %v1781 = vmul.f32 1.0, %v1780
      %v1782 = vmul.f32 %v1756, %v1779
      %v1783 = vmul.f32 %v1759, %v1781
      %v1784 = vmul.f32 %v1768, %v1782
      %v1785 = vmul.f32 %v1769, %v1783
      %v1786 = vpack.c.bf16 %v1785, %v1784
      %v1795 = vunpack.c.l.b16 %v568
      %v1796 = vunpack.c.l.b16 %v569
      %v1797 = vunpack.c.l.b16 %v570
      %v1798 = vunpack.c.l.b16 %v571
      %v1799 = vunpack.c.l.b16 %v572
      %v1800 = vunpack.c.l.b16 %v573
      %v1801 = vunpack.c.l.b16 %v574
      %v1802 = vunpack.c.l.b16 %v575
      %v1803 = vpack.c.b16 %v1796, %v1795
      %v1804 = vpack.c.b16 %v1798, %v1797
      %v1805 = vpack.c.b16 %v1800, %v1799
      %v1806 = vpack.c.b16 %v1802, %v1801
      %v1812 = vsel %vm763, %v1786, 0
      %1814 = vmatprep.subr.bf16.mxu0 0
      %1815 = vmatpush1.bf16.msra.mxu0 %v1803
      %1816 = vmatprep.subr.bf16.mxu0 0
      %1817 = vmatpush1.bf16.msra.mxu0 %v1804
      %1818 = vmatprep.subr.bf16.mxu0 0
      %1819 = vmatpush1.bf16.msra.mxu0 %v1805
      %1820 = vmatprep.subr.bf16.mxu0 0
      %1821 = vmatpush1.bf16.msra.mxu0 %v1806
      %1822 = vmatprep.subr.bf16.mxu0 0
      %1823 = vmatpush1.bf16.msra.mxu0 0
      %1824 = vmatprep.subr.bf16.mxu0 0
      %1825 = vmatpush1.bf16.msra.mxu0 0
      %1826 = vmatprep.subr.bf16.mxu0 0
      %1827 = vmatpush1.bf16.msra.mxu0 0
      %1828 = vmatprep.subr.bf16.mxu0 0
      %1829 = vmatpush1.bf16.msra.mxu0 0
      %1830 = vmatprep.subr.bf16.mxu0 0
      %1831 = vmatpush1.bf16.msra.mxu0 0
      %1832 = vmatprep.subr.bf16.mxu0 0
      %1833 = vmatpush1.bf16.msra.mxu0 0
      %1834 = vmatprep.subr.bf16.mxu0 0
      %1835 = vmatpush1.bf16.msra.mxu0 0
      %1836 = vmatprep.subr.bf16.mxu0 0
      %1837 = vmatpush1.bf16.msra.mxu0 0
      %1838 = vmatprep.subr.bf16.mxu0 0
      %1839 = vmatpush1.bf16.msra.mxu0 0
      %1840 = vmatprep.subr.bf16.mxu0 0
      %1841 = vmatpush1.bf16.msra.mxu0 0
      %1842 = vmatprep.subr.bf16.mxu0 0
      %1843 = vmatpush1.bf16.msra.mxu0 0
      %1844 = vmatprep.subr.bf16.mxu0 0
      %1845 = vmatpush1.bf16.msra.mxu0 0
      %1846 = vmatprep.mubr.bf16.mxu0 0
      %1847 = vmatmul.mubr.bf16.gmra.mrb[0].mxu0 %v1812
      %v1848 = vpop.f32.mrb[0].mxu0
      %v1849 = vadd.f32 0.0, %v1848
      %v1850 = vpop.f32.mrb[0].mxu0
      %v1851 = vpop.f32.mrb[0].mxu0
      %v1852 = vadd.f32 0.0, %v1851
      %v1853 = vpop.f32.mrb[0].mxu0
      %1854 = vdwg.mxu0
      %v1855 = vadd.f32 %v585, %v1849
      %v1856 = vadd.f32 %v586, %v1852
      %v1857 = vmul.f32 %v1855, %v1855
      %v1858 = vmul.f32 %v1856, %v1856
      %v1859 = vsel %vm600, %v1857, 0.0
      %1860 = vadd.xlane.f32.xlu0 %v1859
      %v1861 = vpop.xlane.xlu0 %1860
      %v1862 = vsel %vm600, %v1858, 0.0
      %1863 = vadd.xlane.f32.xlu0 %v1862
      %v1864 = vpop.xlane.xlu0 %1863
      %v1865 = vrcp.pop 32.0
      %v1866 = vmul.f32 %v1861, %v1865
      %v1867 = vmul.f32 %v1864, %v1865
      %v1868 = vadd.f32 %v1866, 1e-05
      %v1869 = vadd.f32 %v1867, 1e-05
      %v1870 = vrsqrt.pop %v1868
      %v1871 = vrsqrt.pop %v1869
      %v1872 = vmul.f32 %v1855, %v1870
      %v1873 = vmul.f32 %v1856, %v1871
      %v1875 = vlaneseq
      %v1876 = vshrl.u32 %v1875, 7
      %v1877 = vsub.s32 0, %v1876
      %v1878 = vrot.slane %v576, %v1877
      %v1880 = vmul.f32 %v1872, %v1878
      %v1881 = vmul.f32 %v1873, %v1878
      %v1882 = vadd.f32 %v1880, 1e-06
      %v1883 = vadd.f32 %v1881, 1e-06
      %1884 = vst.msk [vmem:[#allocation2] sm:$0xff] %vm600, %v1882
      %1885 = vst.msk [vmem:[#allocation2 + $0x10] sm:$0xff] %vm600, %v1883
      %v1886 = vld [vmem:[#allocation2 + $0x8] sm:$0xff]
      %v1887 = vld [vmem:[#allocation2 + $0x18] sm:$0xff]
      %v1888 = vpack.c.bf16 %v1887, %v1886
      %v1890 = vsel %vm600, %v1888, 0
      %1892 = vmatprep.subr.bf16.mxu0 0
      %1893 = vmatpush1.bf16.msra.mxu0 %v596
      %1894 = vmatprep.subr.bf16.mxu0 0
      %1895 = vmatpush1.bf16.msra.mxu0 %v597
      %1896 = vmatprep.subr.bf16.mxu0 0
      %1897 = vmatpush1.bf16.msra.mxu0 0
      %1898 = vmatprep.subr.bf16.mxu0 0
      %1899 = vmatpush1.bf16.msra.mxu0 0
      %1900 = vmatprep.subr.bf16.mxu0 0
      %1901 = vmatpush1.bf16.msra.mxu0 0
      %1902 = vmatprep.subr.bf16.mxu0 0
      %1903 = vmatpush1.bf16.msra.mxu0 0
      %1904 = vmatprep.subr.bf16.mxu0 0
      %1905 = vmatpush1.bf16.msra.mxu0 0
      %1906 = vmatprep.subr.bf16.mxu0 0
      %1907 = vmatpush1.bf16.msra.mxu0 0
      %1908 = vmatprep.subr.bf16.mxu0 0
      %1909 = vmatpush1.bf16.msra.mxu0 0
      %1910 = vmatprep.subr.bf16.mxu0 0
      %1911 = vmatpush1.bf16.msra.mxu0 0
      %1912 = vmatprep.subr.bf16.mxu0 0
      %1913 = vmatpush1.bf16.msra.mxu0 0
      %1914 = vmatprep.subr.bf16.mxu0 0
      %1915 = vmatpush1.bf16.msra.mxu0 0
      %1916 = vmatprep.subr.bf16.mxu0 0
      %1917 = vmatpush1.bf16.msra.mxu0 0
      %1918 = vmatprep.subr.bf16.mxu0 0
      %1919 = vmatpush1.bf16.msra.mxu0 0
      %1920 = vmatprep.subr.bf16.mxu0 0
      %1921 = vmatpush1.bf16.msra.mxu0 0
      %1922 = vmatprep.subr.bf16.mxu0 0
      %1923 = vmatpush1.bf16.msra.mxu0 0
      %1924 = vmatprep.mubr.bf16.mxu0 0
      %1925 = vmatmul.mubr.bf16.gmra.mrb[0].mxu0 %v1890
      %v1926 = vpop.f32.mrb[0].mxu0
      %v1927 = vadd.f32 0.0, %v1926
      %v1928 = vpop.f32.mrb[0].mxu0
      %v1929 = vpop.f32.mrb[0].mxu0
      %v1930 = vadd.f32 0.0, %v1929
      %v1931 = vpop.f32.mrb[0].mxu0
      %1932 = vdwg.mxu0
      %v1934 = vrot.slane %v1927, 5
      %v1936 = vsel %vm648, %v646, %v1934
      %v1937 = vmul.f32 %v1927, %v653
      %v1938 = vmul.f32 %v1936, %v658
      %v1939 = vmul.f32 %v1934, %v658
      %v1942 = vrot.slane %v1938, 2
      %v1943 = vrot.slane %v1939, 2
      %v1944 = vsel %vm663, %v1942, %v1943
      %v1946 = vadd.f32 %v1937, %v1944
      %v1947 = vmul.f32 %v1936, %v672
      %v1948 = vmul.f32 %v1934, %v672
      %v1951 = vrot.slane %v1947, 1
      %v1952 = vrot.slane %v1948, 1
      %v1953 = vsel %vm677, %v1951, %v1952
      %v1955 = vadd.f32 %v1946, %v1953
      %v1956 = vmul.f32 %v1936, %v686
      %v1957 = vadd.f32 %v1955, %v1956
      %v1958 = vadd.f32 %v1957, %v692
      %v1959 = vsub.f32 0.0, %v1958
      %v1960 = vmul.f32 %v1959, 1.442695
      %v1961 = vpow.pop %v1960
      %v1962 = vadd.f32 %v1961, 1.0
      %v1963 = vrcp.pop %v1962
      %v1964 = vmul.f32 1.0, %v1963
      %v1965 = vmul.f32 %v1958, %v1964
      %v1967 = vrot.slane %v1930, 5
      %v1969 = vsel %vm648, %v702, %v1967
      %v1970 = vmul.f32 %v1930, %v653
      %v1971 = vmul.f32 %v1969, %v658
      %v1972 = vmul.f32 %v1967, %v658
      %v1975 = vrot.slane %v1971, 2
      %v1976 = vrot.slane %v1972, 2
      %v1977 = vsel %vm663, %v1975, %v1976
      %v1979 = vadd.f32 %v1970, %v1977
      %v1980 = vmul.f32 %v1969, %v672
      %v1981 = vmul.f32 %v1967, %v672
      %v1984 = vrot.slane %v1980, 1
      %v1985 = vrot.slane %v1981, 1
      %v1986 = vsel %vm677, %v1984, %v1985
      %v1988 = vadd.f32 %v1979, %v1986
      %v1989 = vmul.f32 %v1969, %v686
      %v1990 = vadd.f32 %v1988, %v1989
      %v1991 = vadd.f32 %v1990, %v692
      %v1992 = vsub.f32 0.0, %v1991
      %v1993 = vmul.f32 %v1992, 1.442695
      %v1994 = vpow.pop %v1993
      %v1995 = vadd.f32 %v1994, 1.0
      %v1996 = vrcp.pop %v1995
      %v1997 = vmul.f32 1.0, %v1996
      %v1998 = vmul.f32 %v1991, %v1997
      %v1999 = vpack.c.bf16 %v1998, %v1965
      %v2001 = vsel %vm763, %v1999, 0
      %2003 = vmatprep.subr.bf16.mxu0 0
      %2004 = vmatpush1.bf16.msra.mxu0 %v755
      %2005 = vmatprep.subr.bf16.mxu0 0
      %2006 = vmatpush1.bf16.msra.mxu0 %v756
      %2007 = vmatprep.subr.bf16.mxu0 0
      %2008 = vmatpush1.bf16.msra.mxu0 %v757
      %2009 = vmatprep.subr.bf16.mxu0 0
      %2010 = vmatpush1.bf16.msra.mxu0 %v758
      %2011 = vmatprep.subr.bf16.mxu0 0
      %2012 = vmatpush1.bf16.msra.mxu0 0
      %2013 = vmatprep.subr.bf16.mxu0 0
      %2014 = vmatpush1.bf16.msra.mxu0 0
      %2015 = vmatprep.subr.bf16.mxu0 0
      %2016 = vmatpush1.bf16.msra.mxu0 0
      %2017 = vmatprep.subr.bf16.mxu0 0
      %2018 = vmatpush1.bf16.msra.mxu0 0
      %2019 = vmatprep.subr.bf16.mxu0 0
      %2020 = vmatpush1.bf16.msra.mxu0 0
      %2021 = vmatprep.subr.bf16.mxu0 0
      %2022 = vmatpush1.bf16.msra.mxu0 0
      %2023 = vmatprep.subr.bf16.mxu0 0
      %2024 = vmatpush1.bf16.msra.mxu0 0
      %2025 = vmatprep.subr.bf16.mxu0 0
      %2026 = vmatpush1.bf16.msra.mxu0 0
      %2027 = vmatprep.subr.bf16.mxu0 0
      %2028 = vmatpush1.bf16.msra.mxu0 0
      %2029 = vmatprep.subr.bf16.mxu0 0
      %2030 = vmatpush1.bf16.msra.mxu0 0
      %2031 = vmatprep.subr.bf16.mxu0 0
      %2032 = vmatpush1.bf16.msra.mxu0 0
      %2033 = vmatprep.subr.bf16.mxu0 0
      %2034 = vmatpush1.bf16.msra.mxu0 0
      %2035 = vmatprep.mubr.bf16.mxu0 0
      %2036 = vmatmul.mubr.bf16.gmra.mrb[0].mxu0 %v2001
      %v2037 = vpop.f32.mrb[0].mxu0
      %v2038 = vadd.f32 %v738, %v2037
      %v2039 = vpop.f32.mrb[0].mxu0
      %v2040 = vpop.f32.mrb[0].mxu0
      %v2041 = vadd.f32 %v738, %v2040
      %v2042 = vpop.f32.mrb[0].mxu0
      %2043 = vdwg.mxu0
      %v2044 = vmin.f32 %v2038, 20.0
      %v2045 = vmin.f32 %v2041, 20.0
      %vm2046 = vcmp.gt.f32.partialorder %v2038, 20.0
      %vm2047 = vcmp.gt.f32.partialorder %v2041, 20.0
      %v2048 = vmul.f32 %v2044, 1.442695
      %v2049 = vpow.pop %v2048
      %v2050 = vmul.f32 %v2045, 1.442695
      %v2051 = vpow.pop %v2050
      %v2052 = vadd.f32 %v2049, 1.0
      %v2053 = vadd.f32 %v2051, 1.0
      %v2054 = vlog2.pop %v2052
      %v2055 = vmul.f32 %v2054, 0.6931472
      %v2056 = vlog2.pop %v2053
      %v2057 = vmul.f32 %v2056, 0.6931472
      %v2058 = vsel %vm2046, %v2038, %v2055
      %v2059 = vsel %vm2047, %v2041, %v2057
      %v2060 = vmul.f32 %v2058, %v1965
      %v2061 = vmul.f32 %v2059, %v1998
      %2062 = vmatprep.subr.bf16.mxu0 0
      %2063 = vmatpush1.bf16.msra.mxu0 %v842
      %2064 = vmatprep.subr.bf16.mxu0 0
      %2065 = vmatpush1.bf16.msra.mxu0 %v843
      %2066 = vmatprep.subr.bf16.mxu0 0
      %2067 = vmatpush1.bf16.msra.mxu0 %v844
      %2068 = vmatprep.subr.bf16.mxu0 0
      %2069 = vmatpush1.bf16.msra.mxu0 %v845
      %2070 = vmatprep.subr.bf16.mxu0 0
      %2071 = vmatpush1.bf16.msra.mxu0 0
      %2072 = vmatprep.subr.bf16.mxu0 0
      %2073 = vmatpush1.bf16.msra.mxu0 0
      %2074 = vmatprep.subr.bf16.mxu0 0
      %2075 = vmatpush1.bf16.msra.mxu0 0
      %2076 = vmatprep.subr.bf16.mxu0 0
      %2077 = vmatpush1.bf16.msra.mxu0 0
      %2078 = vmatprep.subr.bf16.mxu0 0
      %2079 = vmatpush1.bf16.msra.mxu0 0
      %2080 = vmatprep.subr.bf16.mxu0 0
      %2081 = vmatpush1.bf16.msra.mxu0 0
      %2082 = vmatprep.subr.bf16.mxu0 0
      %2083 = vmatpush1.bf16.msra.mxu0 0
      %2084 = vmatprep.subr.bf16.mxu0 0
      %2085 = vmatpush1.bf16.msra.mxu0 0
      %2086 = vmatprep.subr.bf16.mxu0 0
      %2087 = vmatpush1.bf16.msra.mxu0 0
      %2088 = vmatprep.subr.bf16.mxu0 0
      %2089 = vmatpush1.bf16.msra.mxu0 0
      %2090 = vmatprep.subr.bf16.mxu0 0
      %2091 = vmatpush1.bf16.msra.mxu0 0
      %2092 = vmatprep.subr.bf16.mxu0 0
      %2093 = vmatpush1.bf16.msra.mxu0 0
      %2094 = vmatprep.mubr.bf16.mxu0 0
      %2095 = vmatmul.mubr.bf16.gmra.mrb[0].mxu0 %v2001
      %v2096 = vpop.f32.mrb[0].mxu0
      %v2097 = vadd.f32 0.0, %v2096
      %v2098 = vpop.f32.mrb[0].mxu0
      %v2099 = vpop.f32.mrb[0].mxu0
      %v2100 = vadd.f32 0.0, %v2099
      %v2101 = vpop.f32.mrb[0].mxu0
      %2102 = vdwg.mxu0
      %v2103 = vlaneseq
      %v2104 = vshrl.u32 %v2103, 7
      %v2105 = vsub.s32 0, %v2104
      %v2106 = vrot.slane %v2097, %v2105
      %2108 = vbcast.lane.b32.xlu0 %v2106, 256
      %v2109 = vpop.permute.xlu0 %2108
      %s2111 = sor.u32 256, 8
      %2112 = vbcast.lane.b32.xlu0 %v2106, %s2111
      %v2113 = vpop.permute.xlu0 %2112
      %v2114 = vlaneseq
      %v2115 = vshrl.u32 %v2114, 7
      %v2116 = vsub.s32 1, %v2115
      %v2117 = vrot.slane %v2097, %v2116
      %2119 = vbcast.lane.b32.xlu0 %v2117, 256
      %v2120 = vpop.permute.xlu0 %2119
      %s2122 = sor.u32 256, 8
      %2123 = vbcast.lane.b32.xlu0 %v2117, %s2122
      %v2124 = vpop.permute.xlu0 %2123
      %v2125 = vlaneseq
      %v2126 = vshrl.u32 %v2125, 7
      %v2127 = vsub.s32 2, %v2126
      %v2128 = vrot.slane %v2097, %v2127
      %2130 = vbcast.lane.b32.xlu0 %v2128, 256
      %v2131 = vpop.permute.xlu0 %2130
      %s2133 = sor.u32 256, 8
      %2134 = vbcast.lane.b32.xlu0 %v2128, %s2133
      %v2135 = vpop.permute.xlu0 %2134
      %v2136 = vlaneseq
      %v2137 = vshrl.u32 %v2136, 7
      %v2138 = vsub.s32 3, %v2137
      %v2139 = vrot.slane %v2097, %v2138
      %2141 = vbcast.lane.b32.xlu0 %v2139, 256
      %v2142 = vpop.permute.xlu0 %2141
      %s2144 = sor.u32 256, 8
      %2145 = vbcast.lane.b32.xlu0 %v2139, %s2144
      %v2146 = vpop.permute.xlu0 %2145
      %v2147 = vlaneseq
      %v2148 = vshrl.u32 %v2147, 7
      %v2149 = vsub.s32 4, %v2148
      %v2150 = vrot.slane %v2097, %v2149
      %2152 = vbcast.lane.b32.xlu0 %v2150, 256
      %v2153 = vpop.permute.xlu0 %2152
      %s2155 = sor.u32 256, 8
      %2156 = vbcast.lane.b32.xlu0 %v2150, %s2155
      %v2157 = vpop.permute.xlu0 %2156
      %v2158 = vlaneseq
      %v2159 = vshrl.u32 %v2158, 7
      %v2160 = vsub.s32 5, %v2159
      %v2161 = vrot.slane %v2097, %v2160
      %2163 = vbcast.lane.b32.xlu0 %v2161, 256
      %v2164 = vpop.permute.xlu0 %2163
      %s2166 = sor.u32 256, 8
      %2167 = vbcast.lane.b32.xlu0 %v2161, %s2166
      %v2168 = vpop.permute.xlu0 %2167
      %v2169 = vlaneseq
      %v2170 = vshrl.u32 %v2169, 7
      %v2171 = vsub.s32 6, %v2170
      %v2172 = vrot.slane %v2097, %v2171
      %2174 = vbcast.lane.b32.xlu0 %v2172, 256
      %v2175 = vpop.permute.xlu0 %2174
      %s2177 = sor.u32 256, 8
      %2178 = vbcast.lane.b32.xlu0 %v2172, %s2177
      %v2179 = vpop.permute.xlu0 %2178
      %v2180 = vlaneseq
      %v2181 = vshrl.u32 %v2180, 7
      %v2182 = vsub.s32 7, %v2181
      %v2183 = vrot.slane %v2097, %v2182
      %2185 = vbcast.lane.b32.xlu0 %v2183, 256
      %v2186 = vpop.permute.xlu0 %2185
      %s2188 = sor.u32 256, 8
      %2189 = vbcast.lane.b32.xlu0 %v2183, %s2188
      %v2190 = vpop.permute.xlu0 %2189
      %s2192 = sor.u32 256, 16
      %2193 = vbcast.lane.b32.xlu0 %v2106, %s2192
      %v2194 = vpop.permute.xlu0 %2193
      %s2196 = sor.u32 256, 24
      %2197 = vbcast.lane.b32.xlu0 %v2106, %s2196
      %v2198 = vpop.permute.xlu0 %2197
      %s2200 = sor.u32 256, 16
      %2201 = vbcast.lane.b32.xlu0 %v2117, %s2200
      %v2202 = vpop.permute.xlu0 %2201
      %s2204 = sor.u32 256, 24
      %2205 = vbcast.lane.b32.xlu0 %v2117, %s2204
      %v2206 = vpop.permute.xlu0 %2205
      %s2208 = sor.u32 256, 16
      %2209 = vbcast.lane.b32.xlu0 %v2128, %s2208
      %v2210 = vpop.permute.xlu0 %2209
      %s2212 = sor.u32 256, 24
      %2213 = vbcast.lane.b32.xlu0 %v2128, %s2212
      %v2214 = vpop.permute.xlu0 %2213
      %s2216 = sor.u32 256, 16
      %2217 = vbcast.lane.b32.xlu0 %v2139, %s2216
      %v2218 = vpop.permute.xlu0 %2217
      %s2220 = sor.u32 256, 24
      %2221 = vbcast.lane.b32.xlu0 %v2139, %s2220
      %v2222 = vpop.permute.xlu0 %2221
      %s2224 = sor.u32 256, 16
      %2225 = vbcast.lane.b32.xlu0 %v2150, %s2224
      %v2226 = vpop.permute.xlu0 %2225
      %s2228 = sor.u32 256, 24
      %2229 = vbcast.lane.b32.xlu0 %v2150, %s2228
      %v2230 = vpop.permute.xlu0 %2229
      %s2232 = sor.u32 256, 16
      %2233 = vbcast.lane.b32.xlu0 %v2161, %s2232
      %v2234 = vpop.permute.xlu0 %2233
      %s2236 = sor.u32 256, 24
      %2237 = vbcast.lane.b32.xlu0 %v2161, %s2236
      %v2238 = vpop.permute.xlu0 %2237
      %s2240 = sor.u32 256, 16
      %2241 = vbcast.lane.b32.xlu0 %v2172, %s2240
      %v2242 = vpop.permute.xlu0 %2241
      %s2244 = sor.u32 256, 24
      %2245 = vbcast.lane.b32.xlu0 %v2172, %s2244
      %v2246 = vpop.permute.xlu0 %2245
      %s2248 = sor.u32 256, 16
      %2249 = vbcast.lane.b32.xlu0 %v2183, %s2248
      %v2250 = vpop.permute.xlu0 %2249
      %s2252 = sor.u32 256, 24
      %2253 = vbcast.lane.b32.xlu0 %v2183, %s2252
      %v2254 = vpop.permute.xlu0 %2253
      %v2255 = vlaneseq
      %v2256 = vshrl.u32 %v2255, 7
      %v2257 = vsub.s32 0, %v2256
      %v2258 = vrot.slane %v2058, %v2257
      %v2259 = vmul.f32 %v2258, %v565
      %v2260 = vmul.f32 %v2258, %v566
      %v2261 = vmul.f32 %v2259, 1.442695
      %v2262 = vpow.pop %v2261
      %v2263 = vmul.f32 %v2260, 1.442695
      %v2264 = vpow.pop %v2263
      %v2265 = vmul.f32 %v2262, %v1278
      %v2266 = vmul.f32 %v2264, %v1279
      %v2267 = vlaneseq
      %v2268 = vshrl.u32 %v2267, 7
      %v2269 = vsub.s32 0, %v2268
      %v2270 = vrot.slane %v2060, %v2269
      %v2271 = vmul.f32 %v2109, %v2270
      %v2272 = vmul.f32 %v2113, %v2270
      %v2273 = vadd.f32 %v2265, %v2271
      %v2274 = vadd.f32 %v2266, %v2272
      %v2275 = vmul.f32 %v2194, %v2273
      %v2276 = vmul.f32 %v2198, %v2274
      %v2277 = vsel %vm763, %v2275, 0.0
      %v2278 = vsel %vm763, %v2276, 0.0
      %v2279 = vadd.f32 %v2277, %v2278
      %v2280 = vrot.slane %v2279, 4
      %v2281 = vadd.f32 %v2279, %v2280
      %v2282 = vrot.slane %v2281, 2
      %v2283 = vadd.f32 %v2281, %v2282
      %v2284 = vrot.slane %v2283, 1
      %v2285 = vadd.f32 %v2283, %v2284
      %v2286 = vlaneseq
      %v2287 = vshrl.u32 %v2286, 7
      %v2288 = vsub.s32 1, %v2287
      %v2289 = vrot.slane %v2058, %v2288
      %v2290 = vmul.f32 %v2289, %v565
      %v2291 = vmul.f32 %v2289, %v566
      %v2292 = vmul.f32 %v2290, 1.442695
      %v2293 = vpow.pop %v2292
      %v2294 = vmul.f32 %v2291, 1.442695
      %v2295 = vpow.pop %v2294
      %v2296 = vmul.f32 %v2293, %v2273
      %v2297 = vmul.f32 %v2295, %v2274
      %v2298 = vlaneseq
      %v2299 = vshrl.u32 %v2298, 7
      %v2300 = vsub.s32 1, %v2299
      %v2301 = vrot.slane %v2060, %v2300
      %v2302 = vmul.f32 %v2120, %v2301
      %v2303 = vmul.f32 %v2124, %v2301
      %v2304 = vadd.f32 %v2296, %v2302
      %v2305 = vadd.f32 %v2297, %v2303
      %v2306 = vmul.f32 %v2202, %v2304
      %v2307 = vmul.f32 %v2206, %v2305
      %v2308 = vsel %vm763, %v2306, 0.0
      %v2309 = vsel %vm763, %v2307, 0.0
      %v2310 = vadd.f32 %v2308, %v2309
      %v2311 = vrot.slane %v2310, 4
      %v2312 = vadd.f32 %v2310, %v2311
      %v2313 = vrot.slane %v2312, 2
      %v2314 = vadd.f32 %v2312, %v2313
      %v2315 = vrot.slane %v2314, 1
      %v2316 = vadd.f32 %v2314, %v2315
      %v2317 = vlaneseq
      %v2318 = vshrl.u32 %v2317, 7
      %v2319 = vsub.s32 2, %v2318
      %v2320 = vrot.slane %v2058, %v2319
      %v2321 = vmul.f32 %v2320, %v565
      %v2322 = vmul.f32 %v2320, %v566
      %v2323 = vmul.f32 %v2321, 1.442695
      %v2324 = vpow.pop %v2323
      %v2325 = vmul.f32 %v2322, 1.442695
      %v2326 = vpow.pop %v2325
      %v2327 = vmul.f32 %v2324, %v2304
      %v2328 = vmul.f32 %v2326, %v2305
      %v2329 = vlaneseq
      %v2330 = vshrl.u32 %v2329, 7
      %v2331 = vsub.s32 2, %v2330
      %v2332 = vrot.slane %v2060, %v2331
      %v2333 = vmul.f32 %v2131, %v2332
      %v2334 = vmul.f32 %v2135, %v2332
      %v2335 = vadd.f32 %v2327, %v2333
      %v2336 = vadd.f32 %v2328, %v2334
      %v2337 = vmul.f32 %v2210, %v2335
      %v2338 = vmul.f32 %v2214, %v2336
      %v2339 = vsel %vm763, %v2337, 0.0
      %v2340 = vsel %vm763, %v2338, 0.0
      %v2341 = vadd.f32 %v2339, %v2340
      %v2342 = vrot.slane %v2341, 4
      %v2343 = vadd.f32 %v2341, %v2342
      %v2344 = vrot.slane %v2343, 2
      %v2345 = vadd.f32 %v2343, %v2344
      %v2346 = vrot.slane %v2345, 1
      %v2347 = vadd.f32 %v2345, %v2346
      %v2348 = vlaneseq
      %v2349 = vshrl.u32 %v2348, 7
      %v2350 = vsub.s32 3, %v2349
      %v2351 = vrot.slane %v2058, %v2350
      %v2352 = vmul.f32 %v2351, %v565
      %v2353 = vmul.f32 %v2351, %v566
      %v2354 = vmul.f32 %v2352, 1.442695
      %v2355 = vpow.pop %v2354
      %v2356 = vmul.f32 %v2353, 1.442695
      %v2357 = vpow.pop %v2356
      %v2358 = vmul.f32 %v2355, %v2335
      %v2359 = vmul.f32 %v2357, %v2336
      %v2360 = vlaneseq
      %v2361 = vshrl.u32 %v2360, 7
      %v2362 = vsub.s32 3, %v2361
      %v2363 = vrot.slane %v2060, %v2362
      %v2364 = vmul.f32 %v2142, %v2363
      %v2365 = vmul.f32 %v2146, %v2363
      %v2366 = vadd.f32 %v2358, %v2364
      %v2367 = vadd.f32 %v2359, %v2365
      %v2368 = vmul.f32 %v2218, %v2366
      %v2369 = vmul.f32 %v2222, %v2367
      %v2370 = vsel %vm763, %v2368, 0.0
      %v2371 = vsel %vm763, %v2369, 0.0
      %v2372 = vadd.f32 %v2370, %v2371
      %v2373 = vrot.slane %v2372, 4
      %v2374 = vadd.f32 %v2372, %v2373
      %v2375 = vrot.slane %v2374, 2
      %v2376 = vadd.f32 %v2374, %v2375
      %v2377 = vrot.slane %v2376, 1
      %v2378 = vadd.f32 %v2376, %v2377
      %v2379 = vlaneseq
      %v2380 = vshrl.u32 %v2379, 7
      %v2381 = vsub.s32 4, %v2380
      %v2382 = vrot.slane %v2058, %v2381
      %v2383 = vmul.f32 %v2382, %v565
      %v2384 = vmul.f32 %v2382, %v566
      %v2385 = vmul.f32 %v2383, 1.442695
      %v2386 = vpow.pop %v2385
      %v2387 = vmul.f32 %v2384, 1.442695
      %v2388 = vpow.pop %v2387
      %v2389 = vmul.f32 %v2386, %v2366
      %v2390 = vmul.f32 %v2388, %v2367
      %v2391 = vlaneseq
      %v2392 = vshrl.u32 %v2391, 7
      %v2393 = vsub.s32 4, %v2392
      %v2394 = vrot.slane %v2060, %v2393
      %v2395 = vmul.f32 %v2153, %v2394
      %v2396 = vmul.f32 %v2157, %v2394
      %v2397 = vadd.f32 %v2389, %v2395
      %v2398 = vadd.f32 %v2390, %v2396
      %v2399 = vmul.f32 %v2226, %v2397
      %v2400 = vmul.f32 %v2230, %v2398
      %v2401 = vsel %vm763, %v2399, 0.0
      %v2402 = vsel %vm763, %v2400, 0.0
      %v2403 = vadd.f32 %v2401, %v2402
      %v2404 = vrot.slane %v2403, 4
      %v2405 = vadd.f32 %v2403, %v2404
      %v2406 = vrot.slane %v2405, 2
      %v2407 = vadd.f32 %v2405, %v2406
      %v2408 = vrot.slane %v2407, 1
      %v2409 = vadd.f32 %v2407, %v2408
      %v2410 = vlaneseq
      %v2411 = vshrl.u32 %v2410, 7
      %v2412 = vsub.s32 5, %v2411
      %v2413 = vrot.slane %v2058, %v2412
      %v2414 = vmul.f32 %v2413, %v565
      %v2415 = vmul.f32 %v2413, %v566
      %v2416 = vmul.f32 %v2414, 1.442695
      %v2417 = vpow.pop %v2416
      %v2418 = vmul.f32 %v2415, 1.442695
      %v2419 = vpow.pop %v2418
      %v2420 = vmul.f32 %v2417, %v2397
      %v2421 = vmul.f32 %v2419, %v2398
      %v2422 = vlaneseq
      %v2423 = vshrl.u32 %v2422, 7
      %v2424 = vsub.s32 5, %v2423
      %v2425 = vrot.slane %v2060, %v2424
      %v2426 = vmul.f32 %v2164, %v2425
      %v2427 = vmul.f32 %v2168, %v2425
      %v2428 = vadd.f32 %v2420, %v2426
      %v2429 = vadd.f32 %v2421, %v2427
      %v2430 = vmul.f32 %v2234, %v2428
      %v2431 = vmul.f32 %v2238, %v2429
      %v2432 = vsel %vm763, %v2430, 0.0
      %v2433 = vsel %vm763, %v2431, 0.0
      %v2434 = vadd.f32 %v2432, %v2433
      %v2435 = vrot.slane %v2434, 4
      %v2436 = vadd.f32 %v2434, %v2435
      %v2437 = vrot.slane %v2436, 2
      %v2438 = vadd.f32 %v2436, %v2437
      %v2439 = vrot.slane %v2438, 1
      %v2440 = vadd.f32 %v2438, %v2439
      %v2441 = vlaneseq
      %v2442 = vshrl.u32 %v2441, 7
      %v2443 = vsub.s32 6, %v2442
      %v2444 = vrot.slane %v2058, %v2443
      %v2445 = vmul.f32 %v2444, %v565
      %v2446 = vmul.f32 %v2444, %v566
      %v2447 = vmul.f32 %v2445, 1.442695
      %v2448 = vpow.pop %v2447
      %v2449 = vmul.f32 %v2446, 1.442695
      %v2450 = vpow.pop %v2449
      %v2451 = vmul.f32 %v2448, %v2428
      %v2452 = vmul.f32 %v2450, %v2429
      %v2453 = vlaneseq
      %v2454 = vshrl.u32 %v2453, 7
      %v2455 = vsub.s32 6, %v2454
      %v2456 = vrot.slane %v2060, %v2455
      %v2457 = vmul.f32 %v2175, %v2456
      %v2458 = vmul.f32 %v2179, %v2456
      %v2459 = vadd.f32 %v2451, %v2457
      %v2460 = vadd.f32 %v2452, %v2458
      %v2461 = vmul.f32 %v2242, %v2459
      %v2462 = vmul.f32 %v2246, %v2460
      %v2463 = vsel %vm763, %v2461, 0.0
      %v2464 = vsel %vm763, %v2462, 0.0
      %v2465 = vadd.f32 %v2463, %v2464
      %v2466 = vrot.slane %v2465, 4
      %v2467 = vadd.f32 %v2465, %v2466
      %v2468 = vrot.slane %v2467, 2
      %v2469 = vadd.f32 %v2467, %v2468
      %v2470 = vrot.slane %v2469, 1
      %v2471 = vadd.f32 %v2469, %v2470
      %v2472 = vlaneseq
      %v2473 = vshrl.u32 %v2472, 7
      %v2474 = vsub.s32 7, %v2473
      %v2475 = vrot.slane %v2058, %v2474
      %v2476 = vmul.f32 %v2475, %v565
      %v2477 = vmul.f32 %v2475, %v566
      %v2478 = vmul.f32 %v2476, 1.442695
      %v2479 = vpow.pop %v2478
      %v2480 = vmul.f32 %v2477, 1.442695
      %v2481 = vpow.pop %v2480
      %v2482 = vmul.f32 %v2479, %v2459
      %v2483 = vmul.f32 %v2481, %v2460
      %v2484 = vlaneseq
      %v2485 = vshrl.u32 %v2484, 7
      %v2486 = vsub.s32 7, %v2485
      %v2487 = vrot.slane %v2060, %v2486
      %v2488 = vmul.f32 %v2186, %v2487
      %v2489 = vmul.f32 %v2190, %v2487
      %v2490 = vadd.f32 %v2482, %v2488
      %v2491 = vadd.f32 %v2483, %v2489
      %v2492 = vmul.f32 %v2250, %v2490
      %v2493 = vmul.f32 %v2254, %v2491
      %v2494 = vsel %vm763, %v2492, 0.0
      %v2495 = vsel %vm763, %v2493, 0.0
      %v2496 = vadd.f32 %v2494, %v2495
      %v2497 = vrot.slane %v2496, 4
      %v2498 = vadd.f32 %v2496, %v2497
      %v2499 = vrot.slane %v2498, 2
      %v2500 = vadd.f32 %v2498, %v2499
      %v2501 = vrot.slane %v2500, 1
      %v2502 = vadd.f32 %v2500, %v2501
      %v2503 = vsel %vm1291, %v2285, %v2316
      %v2504 = vsel %vm1293, %v2503, %v2347
      %v2505 = vsel %vm648, %v2504, %v2378
      %v2506 = vsel %vm1296, %v2505, %v2409
      %v2507 = vsel %vm1298, %v2506, %v2440
      %v2508 = vsel %vm663, %v2507, %v2471
      %v2509 = vsel %vm677, %v2508, %v2502
      %v2510 = vlaneseq
      %v2511 = vshrl.u32 %v2510, 7
      %v2512 = vsub.s32 0, %v2511
      %v2513 = vrot.slane %v2100, %v2512
      %2515 = vbcast.lane.b32.xlu0 %v2513, 256
      %v2516 = vpop.permute.xlu0 %2515
      %s2518 = sor.u32 256, 8
      %2519 = vbcast.lane.b32.xlu0 %v2513, %s2518
      %v2520 = vpop.permute.xlu0 %2519
      %v2521 = vlaneseq
      %v2522 = vshrl.u32 %v2521, 7
      %v2523 = vsub.s32 1, %v2522
      %v2524 = vrot.slane %v2100, %v2523
      %2526 = vbcast.lane.b32.xlu0 %v2524, 256
      %v2527 = vpop.permute.xlu0 %2526
      %s2529 = sor.u32 256, 8
      %2530 = vbcast.lane.b32.xlu0 %v2524, %s2529
      %v2531 = vpop.permute.xlu0 %2530
      %v2532 = vlaneseq
      %v2533 = vshrl.u32 %v2532, 7
      %v2534 = vsub.s32 2, %v2533
      %v2535 = vrot.slane %v2100, %v2534
      %2537 = vbcast.lane.b32.xlu0 %v2535, 256
      %v2538 = vpop.permute.xlu0 %2537
      %s2540 = sor.u32 256, 8
      %2541 = vbcast.lane.b32.xlu0 %v2535, %s2540
      %v2542 = vpop.permute.xlu0 %2541
      %v2543 = vlaneseq
      %v2544 = vshrl.u32 %v2543, 7
      %v2545 = vsub.s32 3, %v2544
      %v2546 = vrot.slane %v2100, %v2545
      %2548 = vbcast.lane.b32.xlu0 %v2546, 256
      %v2549 = vpop.permute.xlu0 %2548
      %s2551 = sor.u32 256, 8
      %2552 = vbcast.lane.b32.xlu0 %v2546, %s2551
      %v2553 = vpop.permute.xlu0 %2552
      %v2554 = vlaneseq
      %v2555 = vshrl.u32 %v2554, 7
      %v2556 = vsub.s32 4, %v2555
      %v2557 = vrot.slane %v2100, %v2556
      %2559 = vbcast.lane.b32.xlu0 %v2557, 256
      %v2560 = vpop.permute.xlu0 %2559
      %s2562 = sor.u32 256, 8
      %2563 = vbcast.lane.b32.xlu0 %v2557, %s2562
      %v2564 = vpop.permute.xlu0 %2563
      %v2565 = vlaneseq
      %v2566 = vshrl.u32 %v2565, 7
      %v2567 = vsub.s32 5, %v2566
      %v2568 = vrot.slane %v2100, %v2567
      %2570 = vbcast.lane.b32.xlu0 %v2568, 256
      %v2571 = vpop.permute.xlu0 %2570
      %s2573 = sor.u32 256, 8
      %2574 = vbcast.lane.b32.xlu0 %v2568, %s2573
      %v2575 = vpop.permute.xlu0 %2574
      %v2576 = vlaneseq
      %v2577 = vshrl.u32 %v2576, 7
      %v2578 = vsub.s32 6, %v2577
      %v2579 = vrot.slane %v2100, %v2578
      %2581 = vbcast.lane.b32.xlu0 %v2579, 256
      %v2582 = vpop.permute.xlu0 %2581
      %s2584 = sor.u32 256, 8
      %2585 = vbcast.lane.b32.xlu0 %v2579, %s2584
      %v2586 = vpop.permute.xlu0 %2585
      %v2587 = vlaneseq
      %v2588 = vshrl.u32 %v2587, 7
      %v2589 = vsub.s32 7, %v2588
      %v2590 = vrot.slane %v2100, %v2589
      %2592 = vbcast.lane.b32.xlu0 %v2590, 256
      %v2593 = vpop.permute.xlu0 %2592
      %s2595 = sor.u32 256, 8
      %2596 = vbcast.lane.b32.xlu0 %v2590, %s2595
      %v2597 = vpop.permute.xlu0 %2596
      %s2599 = sor.u32 256, 16
      %2600 = vbcast.lane.b32.xlu0 %v2513, %s2599
      %v2601 = vpop.permute.xlu0 %2600
      %s2603 = sor.u32 256, 24
      %2604 = vbcast.lane.b32.xlu0 %v2513, %s2603
      %v2605 = vpop.permute.xlu0 %2604
      %s2607 = sor.u32 256, 16
      %2608 = vbcast.lane.b32.xlu0 %v2524, %s2607
      %v2609 = vpop.permute.xlu0 %2608
      %s2611 = sor.u32 256, 24
      %2612 = vbcast.lane.b32.xlu0 %v2524, %s2611
      %v2613 = vpop.permute.xlu0 %2612
      %s2615 = sor.u32 256, 16
      %2616 = vbcast.lane.b32.xlu0 %v2535, %s2615
      %v2617 = vpop.permute.xlu0 %2616
      %s2619 = sor.u32 256, 24
      %2620 = vbcast.lane.b32.xlu0 %v2535, %s2619
      %v2621 = vpop.permute.xlu0 %2620
      %s2623 = sor.u32 256, 16
      %2624 = vbcast.lane.b32.xlu0 %v2546, %s2623
      %v2625 = vpop.permute.xlu0 %2624
      %s2627 = sor.u32 256, 24
      %2628 = vbcast.lane.b32.xlu0 %v2546, %s2627
      %v2629 = vpop.permute.xlu0 %2628
      %s2631 = sor.u32 256, 16
      %2632 = vbcast.lane.b32.xlu0 %v2557, %s2631
      %v2633 = vpop.permute.xlu0 %2632
      %s2635 = sor.u32 256, 24
      %2636 = vbcast.lane.b32.xlu0 %v2557, %s2635
      %v2637 = vpop.permute.xlu0 %2636
      %s2639 = sor.u32 256, 16
      %2640 = vbcast.lane.b32.xlu0 %v2568, %s2639
      %v2641 = vpop.permute.xlu0 %2640
      %s2643 = sor.u32 256, 24
      %2644 = vbcast.lane.b32.xlu0 %v2568, %s2643
      %v2645 = vpop.permute.xlu0 %2644
      %s2647 = sor.u32 256, 16
      %2648 = vbcast.lane.b32.xlu0 %v2579, %s2647
      %v2649 = vpop.permute.xlu0 %2648
      %s2651 = sor.u32 256, 24
      %2652 = vbcast.lane.b32.xlu0 %v2579, %s2651
      %v2653 = vpop.permute.xlu0 %2652
      %s2655 = sor.u32 256, 16
      %2656 = vbcast.lane.b32.xlu0 %v2590, %s2655
      %v2657 = vpop.permute.xlu0 %2656
      %s2659 = sor.u32 256, 24
      %2660 = vbcast.lane.b32.xlu0 %v2590, %s2659
      %v2661 = vpop.permute.xlu0 %2660
      %v2662 = vlaneseq
      %v2663 = vshrl.u32 %v2662, 7
      %v2664 = vsub.s32 0, %v2663
      %v2665 = vrot.slane %v2059, %v2664
      %v2666 = vmul.f32 %v2665, %v565
      %v2667 = vmul.f32 %v2665, %v566
      %v2668 = vmul.f32 %v2666, 1.442695
      %v2669 = vpow.pop %v2668
      %v2670 = vmul.f32 %v2667, 1.442695
      %v2671 = vpow.pop %v2670
      %v2672 = vmul.f32 %v2669, %v1689
      %v2673 = vmul.f32 %v2671, %v1690
      %v2674 = vlaneseq
      %v2675 = vshrl.u32 %v2674, 7
      %v2676 = vsub.s32 0, %v2675
      %v2677 = vrot.slane %v2061, %v2676
      %v2678 = vmul.f32 %v2516, %v2677
      %v2679 = vmul.f32 %v2520, %v2677
      %v2680 = vadd.f32 %v2672, %v2678
      %v2681 = vadd.f32 %v2673, %v2679
      %v2682 = vmul.f32 %v2601, %v2680
      %v2683 = vmul.f32 %v2605, %v2681
      %v2684 = vsel %vm763, %v2682, 0.0
      %v2685 = vsel %vm763, %v2683, 0.0
      %v2686 = vadd.f32 %v2684, %v2685
      %v2687 = vrot.slane %v2686, 4
      %v2688 = vadd.f32 %v2686, %v2687
      %v2689 = vrot.slane %v2688, 2
      %v2690 = vadd.f32 %v2688, %v2689
      %v2691 = vrot.slane %v2690, 1
      %v2692 = vadd.f32 %v2690, %v2691
      %v2693 = vlaneseq
      %v2694 = vshrl.u32 %v2693, 7
      %v2695 = vsub.s32 1, %v2694
      %v2696 = vrot.slane %v2059, %v2695
      %v2697 = vmul.f32 %v2696, %v565
      %v2698 = vmul.f32 %v2696, %v566
      %v2699 = vmul.f32 %v2697, 1.442695
      %v2700 = vpow.pop %v2699
      %v2701 = vmul.f32 %v2698, 1.442695
      %v2702 = vpow.pop %v2701
      %v2703 = vmul.f32 %v2700, %v2680
      %v2704 = vmul.f32 %v2702, %v2681
      %v2705 = vlaneseq
      %v2706 = vshrl.u32 %v2705, 7
      %v2707 = vsub.s32 1, %v2706
      %v2708 = vrot.slane %v2061, %v2707
      %v2709 = vmul.f32 %v2527, %v2708
      %v2710 = vmul.f32 %v2531, %v2708
      %v2711 = vadd.f32 %v2703, %v2709
      %v2712 = vadd.f32 %v2704, %v2710
      %v2713 = vmul.f32 %v2609, %v2711
      %v2714 = vmul.f32 %v2613, %v2712
      %v2715 = vsel %vm763, %v2713, 0.0
      %v2716 = vsel %vm763, %v2714, 0.0
      %v2717 = vadd.f32 %v2715, %v2716
      %v2718 = vrot.slane %v2717, 4
      %v2719 = vadd.f32 %v2717, %v2718
      %v2720 = vrot.slane %v2719, 2
      %v2721 = vadd.f32 %v2719, %v2720
      %v2722 = vrot.slane %v2721, 1
      %v2723 = vadd.f32 %v2721, %v2722
      %v2724 = vlaneseq
      %v2725 = vshrl.u32 %v2724, 7
      %v2726 = vsub.s32 2, %v2725
      %v2727 = vrot.slane %v2059, %v2726
      %v2728 = vmul.f32 %v2727, %v565
      %v2729 = vmul.f32 %v2727, %v566
      %v2730 = vmul.f32 %v2728, 1.442695
      %v2731 = vpow.pop %v2730
      %v2732 = vmul.f32 %v2729, 1.442695
      %v2733 = vpow.pop %v2732
      %v2734 = vmul.f32 %v2731, %v2711
      %v2735 = vmul.f32 %v2733, %v2712
      %v2736 = vlaneseq
      %v2737 = vshrl.u32 %v2736, 7
      %v2738 = vsub.s32 2, %v2737
      %v2739 = vrot.slane %v2061, %v2738
      %v2740 = vmul.f32 %v2538, %v2739
      %v2741 = vmul.f32 %v2542, %v2739
      %v2742 = vadd.f32 %v2734, %v2740
      %v2743 = vadd.f32 %v2735, %v2741
      %v2744 = vmul.f32 %v2617, %v2742
      %v2745 = vmul.f32 %v2621, %v2743
      %v2746 = vsel %vm763, %v2744, 0.0
      %v2747 = vsel %vm763, %v2745, 0.0
      %v2748 = vadd.f32 %v2746, %v2747
      %v2749 = vrot.slane %v2748, 4
      %v2750 = vadd.f32 %v2748, %v2749
      %v2751 = vrot.slane %v2750, 2
      %v2752 = vadd.f32 %v2750, %v2751
      %v2753 = vrot.slane %v2752, 1
      %v2754 = vadd.f32 %v2752, %v2753
      %v2755 = vlaneseq
      %v2756 = vshrl.u32 %v2755, 7
      %v2757 = vsub.s32 3, %v2756
      %v2758 = vrot.slane %v2059, %v2757
      %v2759 = vmul.f32 %v2758, %v565
      %v2760 = vmul.f32 %v2758, %v566
      %v2761 = vmul.f32 %v2759, 1.442695
      %v2762 = vpow.pop %v2761
      %v2763 = vmul.f32 %v2760, 1.442695
      %v2764 = vpow.pop %v2763
      %v2765 = vmul.f32 %v2762, %v2742
      %v2766 = vmul.f32 %v2764, %v2743
      %v2767 = vlaneseq
      %v2768 = vshrl.u32 %v2767, 7
      %v2769 = vsub.s32 3, %v2768
      %v2770 = vrot.slane %v2061, %v2769
      %v2771 = vmul.f32 %v2549, %v2770
      %v2772 = vmul.f32 %v2553, %v2770
      %v2773 = vadd.f32 %v2765, %v2771
      %v2774 = vadd.f32 %v2766, %v2772
      %v2775 = vmul.f32 %v2625, %v2773
      %v2776 = vmul.f32 %v2629, %v2774
      %v2777 = vsel %vm763, %v2775, 0.0
      %v2778 = vsel %vm763, %v2776, 0.0
      %v2779 = vadd.f32 %v2777, %v2778
      %v2780 = vrot.slane %v2779, 4
      %v2781 = vadd.f32 %v2779, %v2780
      %v2782 = vrot.slane %v2781, 2
      %v2783 = vadd.f32 %v2781, %v2782
      %v2784 = vrot.slane %v2783, 1
      %v2785 = vadd.f32 %v2783, %v2784
      %v2786 = vlaneseq
      %v2787 = vshrl.u32 %v2786, 7
      %v2788 = vsub.s32 4, %v2787
      %v2789 = vrot.slane %v2059, %v2788
      %v2790 = vmul.f32 %v2789, %v565
      %v2791 = vmul.f32 %v2789, %v566
      %v2792 = vmul.f32 %v2790, 1.442695
      %v2793 = vpow.pop %v2792
      %v2794 = vmul.f32 %v2791, 1.442695
      %v2795 = vpow.pop %v2794
      %v2796 = vmul.f32 %v2793, %v2773
      %v2797 = vmul.f32 %v2795, %v2774
      %v2798 = vlaneseq
      %v2799 = vshrl.u32 %v2798, 7
      %v2800 = vsub.s32 4, %v2799
      %v2801 = vrot.slane %v2061, %v2800
      %v2802 = vmul.f32 %v2560, %v2801
      %v2803 = vmul.f32 %v2564, %v2801
      %v2804 = vadd.f32 %v2796, %v2802
      %v2805 = vadd.f32 %v2797, %v2803
      %v2806 = vmul.f32 %v2633, %v2804
      %v2807 = vmul.f32 %v2637, %v2805
      %v2808 = vsel %vm763, %v2806, 0.0
      %v2809 = vsel %vm763, %v2807, 0.0
      %v2810 = vadd.f32 %v2808, %v2809
      %v2811 = vrot.slane %v2810, 4
      %v2812 = vadd.f32 %v2810, %v2811
      %v2813 = vrot.slane %v2812, 2
      %v2814 = vadd.f32 %v2812, %v2813
      %v2815 = vrot.slane %v2814, 1
      %v2816 = vadd.f32 %v2814, %v2815
      %v2817 = vlaneseq
      %v2818 = vshrl.u32 %v2817, 7
      %v2819 = vsub.s32 5, %v2818
      %v2820 = vrot.slane %v2059, %v2819
      %v2821 = vmul.f32 %v2820, %v565
      %v2822 = vmul.f32 %v2820, %v566
      %v2823 = vmul.f32 %v2821, 1.442695
      %v2824 = vpow.pop %v2823
      %v2825 = vmul.f32 %v2822, 1.442695
      %v2826 = vpow.pop %v2825
      %v2827 = vmul.f32 %v2824, %v2804
      %v2828 = vmul.f32 %v2826, %v2805
      %v2829 = vlaneseq
      %v2830 = vshrl.u32 %v2829, 7
      %v2831 = vsub.s32 5, %v2830
      %v2832 = vrot.slane %v2061, %v2831
      %v2833 = vmul.f32 %v2571, %v2832
      %v2834 = vmul.f32 %v2575, %v2832
      %v2835 = vadd.f32 %v2827, %v2833
      %v2836 = vadd.f32 %v2828, %v2834
      %v2837 = vmul.f32 %v2641, %v2835
      %v2838 = vmul.f32 %v2645, %v2836
      %v2839 = vsel %vm763, %v2837, 0.0
      %v2840 = vsel %vm763, %v2838, 0.0
      %v2841 = vadd.f32 %v2839, %v2840
      %v2842 = vrot.slane %v2841, 4
      %v2843 = vadd.f32 %v2841, %v2842
      %v2844 = vrot.slane %v2843, 2
      %v2845 = vadd.f32 %v2843, %v2844
      %v2846 = vrot.slane %v2845, 1
      %v2847 = vadd.f32 %v2845, %v2846
      %v2848 = vlaneseq
      %v2849 = vshrl.u32 %v2848, 7
      %v2850 = vsub.s32 6, %v2849
      %v2851 = vrot.slane %v2059, %v2850
      %v2852 = vmul.f32 %v2851, %v565
      %v2853 = vmul.f32 %v2851, %v566
      %v2854 = vmul.f32 %v2852, 1.442695
      %v2855 = vpow.pop %v2854
      %v2856 = vmul.f32 %v2853, 1.442695
      %v2857 = vpow.pop %v2856
      %v2858 = vmul.f32 %v2855, %v2835
      %v2859 = vmul.f32 %v2857, %v2836
      %v2860 = vlaneseq
      %v2861 = vshrl.u32 %v2860, 7
      %v2862 = vsub.s32 6, %v2861
      %v2863 = vrot.slane %v2061, %v2862
      %v2864 = vmul.f32 %v2582, %v2863
      %v2865 = vmul.f32 %v2586, %v2863
      %v2866 = vadd.f32 %v2858, %v2864
      %v2867 = vadd.f32 %v2859, %v2865
      %v2868 = vmul.f32 %v2649, %v2866
      %v2869 = vmul.f32 %v2653, %v2867
      %v2870 = vsel %vm763, %v2868, 0.0
      %v2871 = vsel %vm763, %v2869, 0.0
      %v2872 = vadd.f32 %v2870, %v2871
      %v2873 = vrot.slane %v2872, 4
      %v2874 = vadd.f32 %v2872, %v2873
      %v2875 = vrot.slane %v2874, 2
      %v2876 = vadd.f32 %v2874, %v2875
      %v2877 = vrot.slane %v2876, 1
      %v2878 = vadd.f32 %v2876, %v2877
      %v2879 = vlaneseq
      %v2880 = vshrl.u32 %v2879, 7
      %v2881 = vsub.s32 7, %v2880
      %v2882 = vrot.slane %v2059, %v2881
      %v2883 = vmul.f32 %v2882, %v565
      %v2884 = vmul.f32 %v2882, %v566
      %v2885 = vmul.f32 %v2883, 1.442695
      %v2886 = vpow.pop %v2885
      %v2887 = vmul.f32 %v2884, 1.442695
      %v2888 = vpow.pop %v2887
      %v2889 = vmul.f32 %v2886, %v2866
      %v2890 = vmul.f32 %v2888, %v2867
      %v2891 = vlaneseq
      %v2892 = vshrl.u32 %v2891, 7
      %v2893 = vsub.s32 7, %v2892
      %v2894 = vrot.slane %v2061, %v2893
      %v2895 = vmul.f32 %v2593, %v2894
      %v2896 = vmul.f32 %v2597, %v2894
      %v2897 = vadd.f32 %v2889, %v2895
      %v2898 = vadd.f32 %v2890, %v2896
      %v2899 = vmul.f32 %v2657, %v2897
      %v2900 = vmul.f32 %v2661, %v2898
      %v2901 = vsel %vm763, %v2899, 0.0
      %v2902 = vsel %vm763, %v2900, 0.0
      %v2903 = vadd.f32 %v2901, %v2902
      %v2904 = vrot.slane %v2903, 4
      %v2905 = vadd.f32 %v2903, %v2904
      %v2906 = vrot.slane %v2905, 2
      %v2907 = vadd.f32 %v2905, %v2906
      %v2908 = vrot.slane %v2907, 1
      %v2909 = vadd.f32 %v2907, %v2908
      %v2910 = vsel %vm1291, %v2692, %v2723
      %v2911 = vsel %vm1293, %v2910, %v2754
      %v2912 = vsel %vm648, %v2911, %v2785
      %v2913 = vsel %vm1296, %v2912, %v2816
      %v2914 = vsel %vm1298, %v2913, %v2847
      %v2915 = vsel %vm663, %v2914, %v2878
      %v2916 = vsel %vm677, %v2915, %v2909
      %2917 = vmatprep.subr.bf16.mxu0 0
      %2918 = vmatpush1.bf16.msra.mxu0 %v1717
      %2919 = vmatprep.subr.bf16.mxu0 0
      %2920 = vmatpush1.bf16.msra.mxu0 %v1718
      %2921 = vmatprep.subr.bf16.mxu0 0
      %2922 = vmatpush1.bf16.msra.mxu0 0
      %2923 = vmatprep.subr.bf16.mxu0 0
      %2924 = vmatpush1.bf16.msra.mxu0 0
      %2925 = vmatprep.subr.bf16.mxu0 0
      %2926 = vmatpush1.bf16.msra.mxu0 0
      %2927 = vmatprep.subr.bf16.mxu0 0
      %2928 = vmatpush1.bf16.msra.mxu0 0
      %2929 = vmatprep.subr.bf16.mxu0 0
      %2930 = vmatpush1.bf16.msra.mxu0 0
      %2931 = vmatprep.subr.bf16.mxu0 0
      %2932 = vmatpush1.bf16.msra.mxu0 0
      %2933 = vmatprep.subr.bf16.mxu0 0
      %2934 = vmatpush1.bf16.msra.mxu0 0
      %2935 = vmatprep.subr.bf16.mxu0 0
      %2936 = vmatpush1.bf16.msra.mxu0 0
      %2937 = vmatprep.subr.bf16.mxu0 0
      %2938 = vmatpush1.bf16.msra.mxu0 0
      %2939 = vmatprep.subr.bf16.mxu0 0
      %2940 = vmatpush1.bf16.msra.mxu0 0
      %2941 = vmatprep.subr.bf16.mxu0 0
      %2942 = vmatpush1.bf16.msra.mxu0 0
      %2943 = vmatprep.subr.bf16.mxu0 0
      %2944 = vmatpush1.bf16.msra.mxu0 0
      %2945 = vmatprep.subr.bf16.mxu0 0
      %2946 = vmatpush1.bf16.msra.mxu0 0
      %2947 = vmatprep.subr.bf16.mxu0 0
      %2948 = vmatpush1.bf16.msra.mxu0 0
      %2949 = vmatprep.mubr.bf16.mxu0 0
      %2950 = vmatmul.mubr.bf16.gmra.mrb[0].mxu0 %v1890
      %v2951 = vpop.f32.mrb[0].mxu0
      %v2952 = vadd.f32 0.0, %v2951
      %v2953 = vpop.f32.mrb[0].mxu0
      %v2954 = vpop.f32.mrb[0].mxu0
      %v2955 = vadd.f32 0.0, %v2954
      %v2956 = vpop.f32.mrb[0].mxu0
      %2957 = vdwg.mxu0
      %v2958 = vmul.f32 %v1965, %v1765
      %v2959 = vmul.f32 %v1998, %v1765
      %v2960 = vadd.f32 %v2509, %v2958
      %v2961 = vadd.f32 %v2916, %v2959
      %v2962 = vsub.f32 0.0, %v2952
      %v2963 = vsub.f32 0.0, %v2955
      %v2964 = vmul.f32 %v2962, 1.442695
      %v2965 = vpow.pop %v2964
      %v2966 = vmul.f32 %v2963, 1.442695
      %v2967 = vpow.pop %v2966
      %v2968 = vadd.f32 %v2965, 1.0
      %v2969 = vadd.f32 %v2967, 1.0
      %v2970 = vrcp.pop %v2968
      %v2971 = vmul.f32 1.0, %v2970
      %v2972 = vrcp.pop %v2969
      %v2973 = vmul.f32 1.0, %v2972
      %v2974 = vmul.f32 %v2952, %v2971
      %v2975 = vmul.f32 %v2955, %v2973
      %v2976 = vmul.f32 %v2960, %v2974
      %v2977 = vmul.f32 %v2961, %v2975
      %v2978 = vpack.c.bf16 %v2977, %v2976
      %v2980 = vsel %vm763, %v2978, 0
      %2982 = vmatprep.subr.bf16.mxu0 0
      %2983 = vmatpush1.bf16.msra.mxu0 %v1803
      %2984 = vmatprep.subr.bf16.mxu0 0
      %2985 = vmatpush1.bf16.msra.mxu0 %v1804
      %2986 = vmatprep.subr.bf16.mxu0 0
      %2987 = vmatpush1.bf16.msra.mxu0 %v1805
      %2988 = vmatprep.subr.bf16.mxu0 0
      %2989 = vmatpush1.bf16.msra.mxu0 %v1806
      %2990 = vmatprep.subr.bf16.mxu0 0
      %2991 = vmatpush1.bf16.msra.mxu0 0
      %2992 = vmatprep.subr.bf16.mxu0 0
      %2993 = vmatpush1.bf16.msra.mxu0 0
      %2994 = vmatprep.subr.bf16.mxu0 0
      %2995 = vmatpush1.bf16.msra.mxu0 0
      %2996 = vmatprep.subr.bf16.mxu0 0
      %2997 = vmatpush1.bf16.msra.mxu0 0
      %2998 = vmatprep.subr.bf16.mxu0 0
      %2999 = vmatpush1.bf16.msra.mxu0 0
      %3000 = vmatprep.subr.bf16.mxu0 0
      %3001 = vmatpush1.bf16.msra.mxu0 0
      %3002 = vmatprep.subr.bf16.mxu0 0
      %3003 = vmatpush1.bf16.msra.mxu0 0
      %3004 = vmatprep.subr.bf16.mxu0 0
      %3005 = vmatpush1.bf16.msra.mxu0 0
      %3006 = vmatprep.subr.bf16.mxu0 0
      %3007 = vmatpush1.bf16.msra.mxu0 0
      %3008 = vmatprep.subr.bf16.mxu0 0
      %3009 = vmatpush1.bf16.msra.mxu0 0
      %3010 = vmatprep.subr.bf16.mxu0 0
      %3011 = vmatpush1.bf16.msra.mxu0 0
      %3012 = vmatprep.subr.bf16.mxu0 0
      %3013 = vmatpush1.bf16.msra.mxu0 0
      %3014 = vmatprep.mubr.bf16.mxu0 0
      %3015 = vmatmul.mubr.bf16.gmra.mrb[0].mxu0 %v2980
      %v3016 = vpop.f32.mrb[0].mxu0
      %v3017 = vadd.f32 0.0, %v3016
      %v3018 = vpop.f32.mrb[0].mxu0
      %v3019 = vpop.f32.mrb[0].mxu0
      %v3020 = vadd.f32 0.0, %v3019
      %v3021 = vpop.f32.mrb[0].mxu0
      %3022 = vdwg.mxu0
      %v3023 = vadd.f32 %v1886, %v3017
      %v3024 = vadd.f32 %v1887, %v3020
      %v3025 = vmul.f32 %v3023, %v3023
      %v3026 = vmul.f32 %v3024, %v3024
      %v3027 = vsel %vm600, %v3025, 0.0
      %3028 = vadd.xlane.f32.xlu0 %v3027
      %v3029 = vpop.xlane.xlu0 %3028
      %v3030 = vsel %vm600, %v3026, 0.0
      %3031 = vadd.xlane.f32.xlu0 %v3030
      %v3032 = vpop.xlane.xlu0 %3031
      %v3033 = vmul.f32 %v3029, %v1865
      %v3034 = vmul.f32 %v3032, %v1865
      %v3035 = vadd.f32 %v3033, 1e-05
      %v3036 = vadd.f32 %v3034, 1e-05
      %v3037 = vrsqrt.pop %v3035
      %v3038 = vrsqrt.pop %v3036
      %v3039 = vmul.f32 %v3023, %v3037
      %v3040 = vmul.f32 %v3024, %v3038
      %v3041 = vmul.f32 %v3039, %v1878
      %v3042 = vmul.f32 %v3040, %v1878
      %v3043 = vadd.f32 %v3041, 1e-06
      %v3044 = vadd.f32 %v3042, 1e-06
      %3045 = vst.msk [vmem:[#allocation2 + $0x8] sm:$0xff] %vm600, %v3043
      %3046 = vst.msk [vmem:[#allocation2 + $0x18] sm:$0xff] %vm600, %v3044
      %p3047 = scmp.eq.s32.totalorder %s26, 1
      // Predicated region
      $region65: #{mamba_it_forward.1} parent=59 // pred_check
        %p3048 = pneg %p3047
      $region66: #{mamba_it_forward.1} parent=59 // pred_check_branch
        %3050 = sbr.rel (%p3048) target = $region68
      $region67: #{mamba_it_forward.1} parent=59 // pred_region
        %v3051 = vld [vmem:[#allocation2] sm:$0xff]
        %v3052 = vld [vmem:[#allocation2 + $0x8] sm:$0xff]
        %v3053 = vld [vmem:[#allocation2 + $0x10] sm:$0xff]
        %v3054 = vld [vmem:[#allocation2 + $0x18] sm:$0xff]
        %3055 = vst.msk [vmem:[%s532] sm:$0xff] %vm600, %v3051
        %3056 = vst.msk [vmem:[%s532 + $0x8] sm:$0xff] %vm600, %v3052
        %3057 = vst.msk [vmem:[%s532 + $0x10] sm:$0xff] %vm600, %v3053
        %3058 = vst.msk [vmem:[%s532 + $0x18] sm:$0xff] %vm600, %v3054
      $region68: #{mamba_it_forward.1} parent=59 // pred_fallthru
        _
      %s3059 = smul.u32 2, %s25
      %p3060 = scmp.lt.s32.totalorder %s3059, 1
      %s3061 = scalar_select %p3060, %s3059, 1
      %s3062 = smul.addr %s3061, 2
      %s3063 = smul.addr %s3062, 8
      %s3064 = scalar_lea.vmem %s10, %s3063
      // Predicated region
      $region69: #{mamba_it_forward.1} parent=59 // pred_check
        %p3065 = pneg %p306
      $region70: #{mamba_it_forward.1} parent=59 // pred_check_branch
        %3067 = sbr.rel (%p3065) target = $region72
      $region71: #{mamba_it_forward.1} parent=59 // pred_region
        %s3068 = smul.u32 2, %s25
      $region72: #{mamba_it_forward.1} parent=59 // pred_fallthru
        _
      // Predicated region
      $region73: #{mamba_it_forward.1} parent=59 // pred_check
        %p3069 = pneg %p306
      $region74: #{mamba_it_forward.1} parent=59 // pred_check_branch
        %3071 = sbr.rel (%p3069) target = $region76
      $region75: #{mamba_it_forward.1} parent=59 // pred_region
        %s3072 = smul.u32 2, %s25
        %p3073 = scmp.lt.s32.totalorder %s3072, 1
        %s3074 = scalar_select %p3073, %s3072, 1
        %s3075 = smul.addr %s3074, 2
        %s3076 = smul.addr %s3075, 8
        %s3077 = scalar_lea.vmem %s10, %s3076
      $region76: #{mamba_it_forward.1} parent=59 // pred_fallthru
        _
    $region60: #{mamba_it_forward.1} parent=5 // pred_fallthru
      _
    %p3078 = scmp.le.s32.totalorder 2, %s16
    // Predicated region
    $region77: #{mamba_it_forward.1} parent=5 // pred_check
      %p3079 = pneg %p3078
    $region78: #{mamba_it_forward.1} parent=5 // pred_check_branch
      %3081 = sbr.rel (%p3079) target = $region80
    $region79: #{mamba_it_forward.1} parent=5 // pred_region
      %s3082 = ssub.s32 %s16, 2
    $region80: #{mamba_it_forward.1} parent=5 // pred_fallthru
      _
  $region6: #{mamba_it_forward.1} parent=0 // loop_footer
    %s20 = sadd.s32 1, %s16
  $region7: #{mamba_it_forward.1} parent=0 // loop_footer_branch
    %15 = sbr.rel target = $region3
  $region8: #{mamba_it_forward.1} parent=0 // loop_exit
    _

</llo_original>
